<compile_context>
chip_gen: v6e
topology: v6e:2x2x1
jax: 0.10.0
libtpu: 0.0.40
codegen_flags: <defaults>
</compile_context>

<pallas_src>
import math
import jax
import jax.numpy as jnp
from jax.experimental import pallas as pl
from jax.experimental.pallas import tpu as pltpu

# ----------------------------- config ---------------------------------------
B = 16            # batch (number of users)
S = 16            # sequence length (browsed news per user)
E = 128           # embed_size
HEADS = 4         # attention heads
DH = E // HEADS   # head dim
A = 128           # attention_dim of the additive attention
TB = 8            # users packed per grid step (TB * S = 128 rows = full sublane dim)
ROWS = TB * S
NEG = -1e30       # finite "minus infinity" for the additive mask


# ------------------------------ Pallas kernel -------------------------------
def user_encoder_kernel(x_ref, mask_ref, wqk_ref, wvo_ref, vw_ref, bias_ref, out_ref):
    tb, s, e = x_ref.shape
    rows = tb * s
    heads = wqk_ref.shape[1] // e

    xf = x_ref[...].reshape(rows, e)            # (128, E) bf16, users packed along rows
    mask = mask_ref[0]                          # (rows, rows) f32 block-diag + key-pad mask
    bias = bias_ref[...]                        # (3, E) f32: [bo_eff ; V_b ; q_w]

    # Head-folded projections, all heads fused into one matmul each (K = E = 128).
    qk = jnp.dot(xf, wqk_ref[...], preferred_element_type=jnp.float32).astype(jnp.bfloat16)
    xvo = jnp.dot(xf, wvo_ref[...], preferred_element_type=jnp.float32).astype(jnp.bfloat16)

    # ---- multi-head attention over the packed rows (block-diagonal mask) ----
    acc = jnp.zeros((rows, e), jnp.float32)
    for h in range(heads):                      # unrolled; slices are 128-lane aligned
        sc = jnp.einsum('qd,kd->qk', qk[:, h * e:(h + 1) * e], xf,
                        preferred_element_type=jnp.float32) + mask
        m = jnp.max(sc, axis=-1, keepdims=True)
        p = jnp.exp(sc - m)                     # lane-dense softmax over all 128 keys
        p = p * pl.reciprocal(jnp.sum(p, axis=-1, keepdims=True), approx=True)
        acc = acc + jnp.dot(p.astype(jnp.bfloat16), xvo[:, h * e:(h + 1) * e],
                            preferred_element_type=jnp.float32)
    attn = acc + bias[0:1, :]                   # + (out_bias + bv @ Wo^T), exact fold

    # ---- additive attention pooling over each user's S positions ------------
    proj = jnp.tanh(jnp.dot(attn.astype(jnp.bfloat16), vw_ref[...],
                            preferred_element_type=jnp.float32) + bias[1:2, :])
    proj3 = proj.reshape(tb, s, proj.shape[-1])                   # (TB, S, A)
    attn3 = attn.reshape(tb, s, e)                                # (TB, S, E)
    scr = jnp.sum(proj3 * bias[2:3, :], axis=-1, keepdims=True)   # (TB, S, 1)
    m2 = jnp.max(scr, axis=1, keepdims=True)
    w = jnp.exp(scr - m2)
    w = w * pl.reciprocal(jnp.sum(w, axis=1, keepdims=True), approx=True)
    # TODO(synk): like the PyTorch AdditiveAttention, padded positions are NOT
    # masked in this pooling softmax (they carry finite MHA outputs); PyTorch's
    # literal float-mask (+1.0) / NaN-propagation quirk is replaced by the
    # intended boolean key-padding masking, as in the previous version.
    out_ref[...] = jnp.sum(w * attn3, axis=1).astype(out_ref.dtype)   # (TB, E)


# ------------------------------- wrapper -------------------------------------
@jax.jit
def user_encoder(news, params):
    """news: (B, S, E) float32 with fully-NaN rows marking padded positions."""
    nb = B // TB
    pad = jnp.isnan(news).all(axis=-1)                    # (B, S): True = padded key
    x = jnp.nan_to_num(news).astype(jnp.bfloat16)         # zero-fill + cast OUTSIDE the kernel

    # Block-diagonal (same-user) + key-padding additive mask, built per grid block.
    uid = jnp.arange(ROWS) // S
    same_user = uid[:, None] == uid[None, :]              # (ROWS, ROWS)
    key_valid = ~pad.reshape(nb, ROWS)                    # (nb, ROWS)
    mask = jnp.where(same_user[None] & key_valid[:, None, :], 0.0, NEG).astype(jnp.float32)

    wconst = lambda b: (0, 0)                  # noqa: E731  (weights stay resident)
    return pl.pallas_call(
        user_encoder_kernel,
        out_shape=jax.ShapeDtypeStruct((B, E), jnp.float32),
        grid_spec=pltpu.PrefetchScalarGridSpec(
            num_scalar_prefetch=0,
            grid=(nb,),
            in_specs=[
                pl.BlockSpec((TB, S, E), lambda b: (b, 0, 0)),       # packed news reps
                pl.BlockSpec((1, ROWS, ROWS), lambda b: (b, 0, 0)),  # additive mask
                pl.BlockSpec((E, HEADS * E), wconst),                # folded Wqk (all heads)
                pl.BlockSpec((E, HEADS * E), wconst),                # folded Wvo (all heads)
                pl.BlockSpec((E, A), wconst),                        # V_w^T
                pl.BlockSpec((3, E), wconst),                        # [bo_eff ; V_b ; q_w]
            ],
            out_specs=pl.BlockSpec((TB, E), lambda b: (b, 0)),       # lane-dense slab
        ),
        compiler_params=pltpu.CompilerParams(
            dimension_semantics=("parallel",)),
    )(x, mask, params["Wqk"], params["Wvo"], params["Vw"], params["bias"])


# --------------------------- deterministic params ----------------------------
def _xavier(k, shape):
    fan_out, fan_in = shape
    limit = math.sqrt(6.0 / (fan_in + fan_out))
    return jax.random.uniform(k, shape, jnp.float32, -limit, limit)


def init_raw_params(key):
    """Parameters in the original PyTorch layout / initialization."""
    ks = jax.random.split(key, 4)
    return {
        "in_proj": _xavier(ks[0], (3 * E, E)),          # [Wq; Wk; Wv]; y = x @ W.T + b
        "in_bias": jnp.zeros((3 * E,), jnp.float32),    # nn.MultiheadAttention: zero init
        "out_proj": _xavier(ks[1], (E, E)),             # out_proj.weight
        "out_bias": jnp.zeros((E,), jnp.float32),
        "Vw": _xavier(ks[2], (A, E)),                   # AdditiveAttention V_w
        "Vb": jnp.zeros((A,), jnp.float32),
        "qw": jax.random.uniform(ks[3], (A,), jnp.float32, -0.01, 0.01),
    }


def pack_params(raw):
    """Fold the MHA weights into the head-folded form the kernel consumes.

    scores_h = (x Wq_h^T)(x Wk_h^T)^T / sqrt(dh) = x (Wq_h^T Wk_h / sqrt(dh)) x^T
    out      = sum_h P_h x (Wv_h^T Wo_h) + out_bias + bv @ Wo^T   (exact: softmax rows sum to 1)
    TODO(synk): nonzero Q/K in-proj biases are not representable in this folded form;
    nn.MultiheadAttention zero-initializes them, which is what this assumes.
    """
    wq, wk, wv = raw["in_proj"][:E], raw["in_proj"][E:2 * E], raw["in_proj"][2 * E:]
    bv = raw["in_bias"][2 * E:]
    wo = raw["out_proj"]
    scale = 1.0 / math.sqrt(DH)

    wqk, wvo = [], []
    for h in range(HEADS):
        sl = slice(h * DH, (h + 1) * DH)
        wqk.append((wq[sl].T * scale) @ wk[sl])     # (E, E)   scale folded into Q side
        wvo.append(wv[sl].T @ wo[:, sl].T)          # (E, E)
    bo_eff = raw["out_bias"] + bv @ wo.T

    assert A == E, "bias packing assumes attention_dim == embed_size"
    bias = jnp.stack([bo_eff, raw["Vb"], raw["qw"]], axis=0)        # (3, E) f32

    return {
        "Wqk": jnp.concatenate(wqk, axis=1).astype(jnp.bfloat16),   # (E, HEADS*E)
        "Wvo": jnp.concatenate(wvo, axis=1).astype(jnp.bfloat16),   # (E, HEADS*E)
        "Vw": raw["Vw"].T.astype(jnp.bfloat16),                     # (E, A)
        "bias": bias,
    }


# --------------------------- pure-JAX f32 reference --------------------------
def reference_forward(news, raw):
    pad = jnp.isnan(news).all(axis=-1)
    x = jnp.nan_to_num(news)
    wq, wk, wv = raw["in_proj"][:E], raw["in_proj"][E:2 * E], raw["in_proj"][2 * E:]
    q = (x @ wq.T + raw["in_bias"][:E]).reshape(B, S, HEADS, DH).transpose(0, 2, 1, 3)
    k = (x @ wk.T + raw["in_bias"][E:2 * E]).reshape(B, S, HEADS, DH).transpose(0, 2, 1, 3)
    v = (x @ wv.T + raw["in_bias"][2 * E:]).reshape(B, S, HEADS, DH).transpose(0, 2, 1, 3)
    sc = jnp.einsum('bhqd,bhkd->bhqk', q, k) / math.sqrt(DH)
    sc = jnp.where(pad[:, None, None, :], NEG, sc)
    p = jax.nn.softmax(sc, axis=-1)
    o = jnp.einsum('bhqk,bhkd->bhqd', p, v).transpose(0, 2, 1, 3).reshape(B, S, E)
    attn = o @ raw["out_proj"].T + raw["out_bias"]
    proj = jnp.tanh(attn @ raw["Vw"].T + raw["Vb"])
    w = jax.nn.softmax(proj @ raw["qw"], axis=-1)[..., None]
    return jnp.sum(w * attn, axis=-2)


if __name__ == "__main__":
    key = jax.random.PRNGKey(0)
    pkey, xkey, lkey = jax.random.split(key, 3)
    raw = init_raw_params(pkey)
    params = pack_params(raw)

    # news representations; the tail of each sequence is padded with fully-NaN
    # rows, which is how the module marks padding (isnan(...).all(dim=2)).
    news = jax.random.normal(xkey, (B, S, E), jnp.float32)
    lengths = jax.random.randint(lkey, (B,), 1, S + 1)       # >=1 valid item/user
    pad = jnp.arange(S)[None, :] >= lengths[:, None]         # (B, S)
    news = jnp.where(pad[:, :, None], jnp.nan, news)

    out = user_encoder(news, params)
    jax.block_until_ready(out)
    assert out.shape == (B, E)
    assert bool(jnp.isfinite(out).all())

    ref = reference_forward(news, raw)
    err = float(jnp.max(jnp.abs(out - ref)))
    assert err < 0.1, f"max |kernel - reference| = {err}"

    print("KERNEL_OK")
</pallas_src>

<mosaic_0001>
module attributes {stable_mosaic.version = 11 : i64} {
  func.func @user_encoder_kernel(%arg0: i32, %arg1: memref<8x16x128xbf16, #tpu.memory_space<vmem>>, %arg2: memref<1x128x128xf32, #tpu.memory_space<vmem>>, %arg3: memref<128x512xbf16, #tpu.memory_space<vmem>>, %arg4: memref<128x512xbf16, #tpu.memory_space<vmem>>, %arg5: memref<128x128xbf16, #tpu.memory_space<vmem>>, %arg6: memref<3x128xf32, #tpu.memory_space<vmem>>, %arg7: memref<8x128xf32, #tpu.memory_space<vmem>>) attributes {dimension_semantics = [#tpu.dimension_semantics<parallel>], iteration_bounds = array<i64: 2>, scalar_prefetch = 0 : i64, scratch_operands = 0 : i64, tpu.core_type = #tpu.core_type<tc>, window_params = [{transform_indices = @transform_0, window_bounds = array<i64: 8, 16, 128>}, {transform_indices = @transform_1, window_bounds = array<i64: 1, 128, 128>}, {pipeline_mode = #tpu.pipeline_mode<synchronous>, transform_indices = @transform_2, window_bounds = array<i64: 128, 512>}, {pipeline_mode = #tpu.pipeline_mode<synchronous>, transform_indices = @transform_3, window_bounds = array<i64: 128, 512>}, {pipeline_mode = #tpu.pipeline_mode<synchronous>, transform_indices = @transform_4, window_bounds = array<i64: 128, 128>}, {pipeline_mode = #tpu.pipeline_mode<synchronous>, transform_indices = @transform_5, window_bounds = array<i64: 3, 128>}, {transform_indices = @transform_6, window_bounds = array<i64: 8, 128>}]} {
    %c0 = arith.constant 0 : index
    %c0_0 = arith.constant 0 : index
    %c0_1 = arith.constant 0 : index
    %0 = vector.load %arg1[%c0, %c0_0, %c0_1] : memref<8x16x128xbf16, #tpu.memory_space<vmem>>, vector<8x16x128xbf16>
    %1 = vector.shape_cast %0 : vector<8x16x128xbf16> to vector<128x128xbf16>
    %c0_2 = arith.constant 0 : index
    %c0_3 = arith.constant 0 : index
    %c0_4 = arith.constant 0 : index
    %2 = vector.load %arg2[%c0_2, %c0_3, %c0_4] : memref<1x128x128xf32, #tpu.memory_space<vmem>>, vector<1x128x128xf32>
    %3 = vector.shape_cast %2 : vector<1x128x128xf32> to vector<128x128xf32>
    %c0_5 = arith.constant 0 : index
    %c0_6 = arith.constant 0 : index
    %4 = vector.load %arg6[%c0_5, %c0_6] : memref<3x128xf32, #tpu.memory_space<vmem>>, vector<3x128xf32>
    %c0_7 = arith.constant 0 : index
    %c0_8 = arith.constant 0 : index
    %5 = vector.load %arg3[%c0_7, %c0_8] : memref<128x512xbf16, #tpu.memory_space<vmem>>, vector<128x512xbf16>
    %cst = arith.constant dense<0.000000e+00> : vector<128x512xf32>
    %6 = tpu.matmul %1, %5, %cst {dimension_numbers = #tpu.dot_dimension_numbers<[1], [0], [0], [1], [0, 0, 1, 1], [], []>} : vector<128x128xbf16>, vector<128x512xbf16>, vector<128x512xf32> -> vector<128x512xf32>
    %7 = arith.truncf %6 : vector<128x512xf32> to vector<128x512xbf16>
    %c0_9 = arith.constant 0 : index
    %c0_10 = arith.constant 0 : index
    %8 = vector.load %arg4[%c0_9, %c0_10] : memref<128x512xbf16, #tpu.memory_space<vmem>>, vector<128x512xbf16>
    %cst_11 = arith.constant dense<0.000000e+00> : vector<128x512xf32>
    %9 = tpu.matmul %1, %8, %cst_11 {dimension_numbers = #tpu.dot_dimension_numbers<[1], [0], [0], [1], [0, 0, 1, 1], [], []>} : vector<128x128xbf16>, vector<128x512xbf16>, vector<128x512xf32> -> vector<128x512xf32>
    %10 = arith.truncf %9 : vector<128x512xf32> to vector<128x512xbf16>
    %cst_12 = arith.constant 0.000000e+00 : f32
    %11 = vector.broadcast %cst_12 : f32 to vector<128x128xf32>
    %12 = vector.extract_strided_slice %7 {offsets = [0, 0], sizes = [128, 128], strides = [1, 1]} : vector<128x512xbf16> to vector<128x128xbf16>
    "tpu.trace_start"() <{level = 10 : i32, message = "qd,kd->qk"}> : () -> ()
    %cst_13 = arith.constant dense<0.000000e+00> : vector<128x128xf32>
    %13 = tpu.matmul %12, %1, %cst_13 {dimension_numbers = #tpu.dot_dimension_numbers<[1], [1], [0], [0], [0, 0, 1, 0], [], []>} : vector<128x128xbf16>, vector<128x128xbf16>, vector<128x128xf32> -> vector<128x128xf32>
    "tpu.trace_stop"() : () -> ()
    %14 = arith.addf %13, %3 : vector<128x128xf32>
    %cst_14 = arith.constant dense<0xFF800000> : vector<128xf32>
    %15 = vector.multi_reduction <maximumf>, %14, %cst_14 [1] : vector<128x128xf32> to vector<128xf32>
    %16 = vector.shape_cast %15 : vector<128xf32> to vector<128x1xf32>
    %17 = vector.broadcast %16 : vector<128x1xf32> to vector<128x128xf32>
    %18 = arith.subf %14, %17 : vector<128x128xf32>
    %19 = math.exp %18 : vector<128x128xf32>
    %cst_15 = arith.constant dense<0.000000e+00> : vector<128xf32>
    %20 = vector.multi_reduction <add>, %19, %cst_15 [1] : vector<128x128xf32> to vector<128xf32>
    %21 = vector.shape_cast %20 : vector<128xf32> to vector<128x1xf32>
    %22 = tpu.reciprocal %21 {approx = true} : vector<128x1xf32> -> vector<128x1xf32>
    %23 = vector.broadcast %22 : vector<128x1xf32> to vector<128x128xf32>
    %24 = arith.mulf %19, %23 : vector<128x128xf32>
    %25 = arith.truncf %24 : vector<128x128xf32> to vector<128x128xbf16>
    %26 = vector.extract_strided_slice %10 {offsets = [0, 0], sizes = [128, 128], strides = [1, 1]} : vector<128x512xbf16> to vector<128x128xbf16>
    %cst_16 = arith.constant dense<0.000000e+00> : vector<128x128xf32>
    %27 = tpu.matmul %25, %26, %cst_16 {dimension_numbers = #tpu.dot_dimension_numbers<[1], [0], [0], [1], [0, 0, 1, 1], [], []>} : vector<128x128xbf16>, vector<128x128xbf16>, vector<128x128xf32> -> vector<128x128xf32>
    %28 = arith.addf %11, %27 : vector<128x128xf32>
    %29 = vector.extract_strided_slice %7 {offsets = [0, 128], sizes = [128, 128], strides = [1, 1]} : vector<128x512xbf16> to vector<128x128xbf16>
    "tpu.trace_start"() <{level = 10 : i32, message = "qd,kd->qk"}> : () -> ()
    %cst_17 = arith.constant dense<0.000000e+00> : vector<128x128xf32>
    %30 = tpu.matmul %29, %1, %cst_17 {dimension_numbers = #tpu.dot_dimension_numbers<[1], [1], [0], [0], [0, 0, 1, 0], [], []>} : vector<128x128xbf16>, vector<128x128xbf16>, vector<128x128xf32> -> vector<128x128xf32>
    "tpu.trace_stop"() : () -> ()
    %31 = arith.addf %30, %3 : vector<128x128xf32>
    %cst_18 = arith.constant dense<0xFF800000> : vector<128xf32>
    %32 = vector.multi_reduction <maximumf>, %31, %cst_18 [1] : vector<128x128xf32> to vector<128xf32>
    %33 = vector.shape_cast %32 : vector<128xf32> to vector<128x1xf32>
    %34 = vector.broadcast %33 : vector<128x1xf32> to vector<128x128xf32>
    %35 = arith.subf %31, %34 : vector<128x128xf32>
    %36 = math.exp %35 : vector<128x128xf32>
    %cst_19 = arith.constant dense<0.000000e+00> : vector<128xf32>
    %37 = vector.multi_reduction <add>, %36, %cst_19 [1] : vector<128x128xf32> to vector<128xf32>
    %38 = vector.shape_cast %37 : vector<128xf32> to vector<128x1xf32>
    %39 = tpu.reciprocal %38 {approx = true} : vector<128x1xf32> -> vector<128x1xf32>
    %40 = vector.broadcast %39 : vector<128x1xf32> to vector<128x128xf32>
    %41 = arith.mulf %36, %40 : vector<128x128xf32>
    %42 = arith.truncf %41 : vector<128x128xf32> to vector<128x128xbf16>
    %43 = vector.extract_strided_slice %10 {offsets = [0, 128], sizes = [128, 128], strides = [1, 1]} : vector<128x512xbf16> to vector<128x128xbf16>
    %cst_20 = arith.constant dense<0.000000e+00> : vector<128x128xf32>
    %44 = tpu.matmul %42, %43, %cst_20 {dimension_numbers = #tpu.dot_dimension_numbers<[1], [0], [0], [1], [0, 0, 1, 1], [], []>} : vector<128x128xbf16>, vector<128x128xbf16>, vector<128x128xf32> -> vector<128x128xf32>
    %45 = arith.addf %28, %44 : vector<128x128xf32>
    %46 = vector.extract_strided_slice %7 {offsets = [0, 256], sizes = [128, 128], strides = [1, 1]} : vector<128x512xbf16> to vector<128x128xbf16>
    "tpu.trace_start"() <{level = 10 : i32, message = "qd,kd->qk"}> : () -> ()
    %cst_21 = arith.constant dense<0.000000e+00> : vector<128x128xf32>
    %47 = tpu.matmul %46, %1, %cst_21 {dimension_numbers = #tpu.dot_dimension_numbers<[1], [1], [0], [0], [0, 0, 1, 0], [], []>} : vector<128x128xbf16>, vector<128x128xbf16>, vector<128x128xf32> -> vector<128x128xf32>
    "tpu.trace_stop"() : () -> ()
    %48 = arith.addf %47, %3 : vector<128x128xf32>
    %cst_22 = arith.constant dense<0xFF800000> : vector<128xf32>
    %49 = vector.multi_reduction <maximumf>, %48, %cst_22 [1] : vector<128x128xf32> to vector<128xf32>
    %50 = vector.shape_cast %49 : vector<128xf32> to vector<128x1xf32>
    %51 = vector.broadcast %50 : vector<128x1xf32> to vector<128x128xf32>
    %52 = arith.subf %48, %51 : vector<128x128xf32>
    %53 = math.exp %52 : vector<128x128xf32>
    %cst_23 = arith.constant dense<0.000000e+00> : vector<128xf32>
    %54 = vector.multi_reduction <add>, %53, %cst_23 [1] : vector<128x128xf32> to vector<128xf32>
    %55 = vector.shape_cast %54 : vector<128xf32> to vector<128x1xf32>
    %56 = tpu.reciprocal %55 {approx = true} : vector<128x1xf32> -> vector<128x1xf32>
    %57 = vector.broadcast %56 : vector<128x1xf32> to vector<128x128xf32>
    %58 = arith.mulf %53, %57 : vector<128x128xf32>
    %59 = arith.truncf %58 : vector<128x128xf32> to vector<128x128xbf16>
    %60 = vector.extract_strided_slice %10 {offsets = [0, 256], sizes = [128, 128], strides = [1, 1]} : vector<128x512xbf16> to vector<128x128xbf16>
    %cst_24 = arith.constant dense<0.000000e+00> : vector<128x128xf32>
    %61 = tpu.matmul %59, %60, %cst_24 {dimension_numbers = #tpu.dot_dimension_numbers<[1], [0], [0], [1], [0, 0, 1, 1], [], []>} : vector<128x128xbf16>, vector<128x128xbf16>, vector<128x128xf32> -> vector<128x128xf32>
    %62 = arith.addf %45, %61 : vector<128x128xf32>
    %63 = vector.extract_strided_slice %7 {offsets = [0, 384], sizes = [128, 128], strides = [1, 1]} : vector<128x512xbf16> to vector<128x128xbf16>
    "tpu.trace_start"() <{level = 10 : i32, message = "qd,kd->qk"}> : () -> ()
    %cst_25 = arith.constant dense<0.000000e+00> : vector<128x128xf32>
    %64 = tpu.matmul %63, %1, %cst_25 {dimension_numbers = #tpu.dot_dimension_numbers<[1], [1], [0], [0], [0, 0, 1, 0], [], []>} : vector<128x128xbf16>, vector<128x128xbf16>, vector<128x128xf32> -> vector<128x128xf32>
    "tpu.trace_stop"() : () -> ()
    %65 = arith.addf %64, %3 : vector<128x128xf32>
    %cst_26 = arith.constant dense<0xFF800000> : vector<128xf32>
    %66 = vector.multi_reduction <maximumf>, %65, %cst_26 [1] : vector<128x128xf32> to vector<128xf32>
    %67 = vector.shape_cast %66 : vector<128xf32> to vector<128x1xf32>
    %68 = vector.broadcast %67 : vector<128x1xf32> to vector<128x128xf32>
    %69 = arith.subf %65, %68 : vector<128x128xf32>
    %70 = math.exp %69 : vector<128x128xf32>
    %cst_27 = arith.constant dense<0.000000e+00> : vector<128xf32>
    %71 = vector.multi_reduction <add>, %70, %cst_27 [1] : vector<128x128xf32> to vector<128xf32>
    %72 = vector.shape_cast %71 : vector<128xf32> to vector<128x1xf32>
    %73 = tpu.reciprocal %72 {approx = true} : vector<128x1xf32> -> vector<128x1xf32>
    %74 = vector.broadcast %73 : vector<128x1xf32> to vector<128x128xf32>
    %75 = arith.mulf %70, %74 : vector<128x128xf32>
    %76 = arith.truncf %75 : vector<128x128xf32> to vector<128x128xbf16>
    %77 = vector.extract_strided_slice %10 {offsets = [0, 384], sizes = [128, 128], strides = [1, 1]} : vector<128x512xbf16> to vector<128x128xbf16>
    %cst_28 = arith.constant dense<0.000000e+00> : vector<128x128xf32>
    %78 = tpu.matmul %76, %77, %cst_28 {dimension_numbers = #tpu.dot_dimension_numbers<[1], [0], [0], [1], [0, 0, 1, 1], [], []>} : vector<128x128xbf16>, vector<128x128xbf16>, vector<128x128xf32> -> vector<128x128xf32>
    %79 = arith.addf %62, %78 : vector<128x128xf32>
    %80 = vector.extract_strided_slice %4 {offsets = [0, 0], sizes = [1, 128], strides = [1, 1]} : vector<3x128xf32> to vector<1x128xf32>
    %81 = vector.broadcast %80 : vector<1x128xf32> to vector<128x128xf32>
    %82 = arith.addf %79, %81 : vector<128x128xf32>
    %83 = arith.truncf %82 : vector<128x128xf32> to vector<128x128xbf16>
    %c0_29 = arith.constant 0 : index
    %c0_30 = arith.constant 0 : index
    %84 = vector.load %arg5[%c0_29, %c0_30] : memref<128x128xbf16, #tpu.memory_space<vmem>>, vector<128x128xbf16>
    %cst_31 = arith.constant dense<0.000000e+00> : vector<128x128xf32>
    %85 = tpu.matmul %83, %84, %cst_31 {dimension_numbers = #tpu.dot_dimension_numbers<[1], [0], [0], [1], [0, 0, 1, 1], [], []>} : vector<128x128xbf16>, vector<128x128xbf16>, vector<128x128xf32> -> vector<128x128xf32>
    %86 = vector.extract_strided_slice %4 {offsets = [1, 0], sizes = [1, 128], strides = [1, 1]} : vector<3x128xf32> to vector<1x128xf32>
    %87 = vector.broadcast %86 : vector<1x128xf32> to vector<128x128xf32>
    %88 = arith.addf %85, %87 : vector<128x128xf32>
    %89 = math.tanh %88 : vector<128x128xf32>
    %90 = vector.shape_cast %89 : vector<128x128xf32> to vector<8x16x128xf32>
    %91 = vector.shape_cast %82 : vector<128x128xf32> to vector<8x16x128xf32>
    %92 = vector.extract_strided_slice %4 {offsets = [2, 0], sizes = [1, 128], strides = [1, 1]} : vector<3x128xf32> to vector<1x128xf32>
    %93 = vector.shape_cast %92 : vector<1x128xf32> to vector<1x1x128xf32>
    %94 = vector.broadcast %93 : vector<1x1x128xf32> to vector<8x16x128xf32>
    %95 = arith.mulf %90, %94 : vector<8x16x128xf32>
    %cst_32 = arith.constant dense<0.000000e+00> : vector<8x16xf32>
    %96 = vector.multi_reduction <add>, %95, %cst_32 [2] : vector<8x16x128xf32> to vector<8x16xf32>
    %97 = vector.shape_cast %96 : vector<8x16xf32> to vector<8x16x1xf32>
    %cst_33 = arith.constant dense<0xFF800000> : vector<8x1xf32>
    %98 = vector.multi_reduction <maximumf>, %97, %cst_33 [1] : vector<8x16x1xf32> to vector<8x1xf32>
    %99 = vector.shape_cast %98 : vector<8x1xf32> to vector<8x1x1xf32>
    %100 = vector.broadcast %99 : vector<8x1x1xf32> to vector<8x16x1xf32>
    %101 = arith.subf %97, %100 : vector<8x16x1xf32>
    %102 = math.exp %101 : vector<8x16x1xf32>
    %cst_34 = arith.constant dense<0.000000e+00> : vector<8x1xf32>
    %103 = vector.multi_reduction <add>, %102, %cst_34 [1] : vector<8x16x1xf32> to vector<8x1xf32>
    %104 = vector.shape_cast %103 : vector<8x1xf32> to vector<8x1x1xf32>
    %105 = tpu.reciprocal %104 {approx = true} : vector<8x1x1xf32> -> vector<8x1x1xf32>
    %106 = vector.broadcast %105 : vector<8x1x1xf32> to vector<8x16x1xf32>
    %107 = arith.mulf %102, %106 : vector<8x16x1xf32>
    %108 = vector.broadcast %107 : vector<8x16x1xf32> to vector<8x16x128xf32>
    %109 = arith.mulf %108, %91 : vector<8x16x128xf32>
    %cst_35 = arith.constant dense<0.000000e+00> : vector<8x128xf32>
    %110 = vector.multi_reduction <add>, %109, %cst_35 [1] : vector<8x16x128xf32> to vector<8x128xf32>
    %c0_36 = arith.constant 0 : index
    %c0_37 = arith.constant 0 : index
    %111 = vector.load %arg7[%c0_36, %c0_37] : memref<8x128xf32, #tpu.memory_space<vmem>>, vector<8x128xf32>
    tpu.vector_store %arg7[%c0_36, %c0_37], %110 {strides = array<i32>} : memref<8x128xf32, #tpu.memory_space<vmem>>, vector<8x128xf32>,
    return
  }
  func.func @transform_0(%arg0: i32) -> (i32, i32, i32) {
    %c0_i32 = arith.constant 0 : i32
    %c0_i32_0 = arith.constant 0 : i32
    %c0_i32_1 = arith.constant 0 : i32
    return %arg0, %c0_i32, %c0_i32_0 : i32, i32, i32
  }
  func.func @transform_1(%arg0: i32) -> (i32, i32, i32) {
    %c0_i32 = arith.constant 0 : i32
    %c0_i32_0 = arith.constant 0 : i32
    %c0_i32_1 = arith.constant 0 : i32
    return %arg0, %c0_i32, %c0_i32_0 : i32, i32, i32
  }
  func.func @transform_2(%arg0: i32) -> (i32, i32) {
    %c0_i32 = arith.constant 0 : i32
    %c0_i32_0 = arith.constant 0 : i32
    %c0_i32_1 = arith.constant 0 : i32
    return %c0_i32, %c0_i32_0 : i32, i32
  }
  func.func @transform_3(%arg0: i32) -> (i32, i32) {
    %c0_i32 = arith.constant 0 : i32
    %c0_i32_0 = arith.constant 0 : i32
    %c0_i32_1 = arith.constant 0 : i32
    return %c0_i32, %c0_i32_0 : i32, i32
  }
  func.func @transform_4(%arg0: i32) -> (i32, i32) {
    %c0_i32 = arith.constant 0 : i32
    %c0_i32_0 = arith.constant 0 : i32
    %c0_i32_1 = arith.constant 0 : i32
    return %c0_i32, %c0_i32_0 : i32, i32
  }
  func.func @transform_5(%arg0: i32) -> (i32, i32) {
    %c0_i32 = arith.constant 0 : i32
    %c0_i32_0 = arith.constant 0 : i32
    %c0_i32_1 = arith.constant 0 : i32
    return %c0_i32, %c0_i32_0 : i32, i32
  }
  func.func @transform_6(%arg0: i32) -> (i32, i32) {
    %c0_i32 = arith.constant 0 : i32
    %c0_i32_0 = arith.constant 0 : i32
    return %arg0, %c0_i32 : i32, i32
  }
}

</mosaic_0001>

<llo_original>
// kernel: user_encoder.1
$region0: #{user_encoder.1}
  #allocation0 [shape = 'u32[]', space=smem, size = 0x4, offset = 0x4, fixed_abs, tag = 'smem constant byte address 0x4 - core index']
  #allocation1 [shape = 'u32[144,128]{1,0:T(1,128)}', space=vmem, size = 0x12000, scoped, tag = 'internal scratch']
  %s0 = inlined_call_operand.vmem [shape: bf16[16,16,128], index: 0, kind: input, shape index: {}]
  %s1 = inlined_call_operand.vmem [shape: f32[2,128,128], index: 1, kind: input, shape index: {}]
  %s2 = inlined_call_operand.vmem [shape: bf16[128,512], index: 2, kind: input, shape index: {}]
  %s3 = inlined_call_operand.vmem [shape: bf16[128,512], index: 3, kind: input, shape index: {}]
  %s4 = inlined_call_operand.vmem [shape: bf16[128,128], index: 4, kind: input, shape index: {}]
  %s5 = inlined_call_operand.vmem [shape: f32[3,128], index: 5, kind: input, shape index: {}]
  %s6 = inlined_call_operand.hbm [shape: f32[16,128], index: 6, kind: output, shape index: {}]
  %s7 = sld [smem:[#allocation0]]
  $region57: #{user_encoder.1} parent=0
    _
  %s9 = ssub.s32 1, %s7
  %s10 = scalar_select 0, %s9, %s7
  $region1: #{user_encoder.1} parent=0
    #allocation2 [shape = 'u8[8192]{0}', space=vmem, size = 0x2000, scoped, tag = 'output window, operand 0']
    #allocation3 [shape = 's32[2]{0}', space=sflag, size = 0x8, scoped, tag = 'scoped memory for user_encoder.1']
    %11 = vsyncpa [#allocation3], 0
    %s12 = scalar_lea.sflag [#allocation3], 1
    %13 = vsyncpa %s12, 0
    loop: start=0, step=1, limit=4
    $region2: #{user_encoder.1} parent=1 // loop_pre_header
      _
    $region3: #{user_encoder.1} parent=1 // loop_header
      %s15 = sphi 0, %s19
      %p16 = scmp.ge.s32.totalorder %s15, 4
      %s25 = sphi 0, %s27
      %s28 = sphi 0, %s25
      %s29 = sphi 0, %s28
      %s45 = sphi 0, %s29
      %s51 = sphi 0, %s53
      %s54 = sphi 0, %s51
      %s55 = sphi 0, %s54
      %s71 = sphi 0, %s55
      %s75 = sphi 0, %s75
      %s77 = sphi 0, %s75
      %s78 = sphi 0, %s77
      %s92 = sphi 0, %s78
      %s96 = sphi 0, %s96
      %s98 = sphi 0, %s96
      %s99 = sphi 0, %s98
      %s113 = sphi 0, %s99
      %s117 = sphi 0, %s117
      %s119 = sphi 0, %s117
      %s120 = sphi 0, %s119
      %s134 = sphi 0, %s120
      %s138 = sphi 0, %s138
      %s140 = sphi 0, %s138
      %s141 = sphi 0, %s140
      %s155 = sphi 0, %s141
      %s161 = sphi 0, %s163
      %s164 = sphi 0, %s161
      %s165 = sphi 0, %s164
      %s181 = sphi 0, %s165
    $region4: #{user_encoder.1} parent=1 // loop_header_branch
      %18 = sbr.rel (%p16) target = $region8
    $region5: #{user_encoder.1} parent=1 // loop_body
      %s20 = ssub.s32 %s15, 1
      %s21 = ssub.s32 %s15, 2
      %s22 = sadd.s32 %s15, 1
      %s23 = ssub.s32 %s15, %s22
      %p24 = scmp.eq.s32.totalorder %s23, 0
      %s26 = sadd.s32 %s25, 1
      %s27 = scalar_select %p24, %s25, %s26
      %p30 = pneg %p24
      %p31 = scmp.eq.s32.totalorder %s15, 1
      %p32 = por %p30, %p31
      %p33 = scmp.ne.s32.totalorder %s25, %s28
      %p34 = scmp.eq.s32.totalorder %s15, 0
      %p35 = por %p33, %p34
      %p36 = scmp.ne.s32.totalorder %s25, %s28
      %p37 = scmp.eq.s32.totalorder %s20, 1
      %p38 = por %p36, %p37
      %p39 = scmp.ne.s32.totalorder %s28, %s29
      %p40 = scmp.eq.s32.totalorder %s20, 0
      %p41 = por %p39, %p40
      %p42 = scmp.ne.s32.totalorder %s28, %s29
      %p43 = scmp.eq.s32.totalorder %s21, 1
      %p44 = por %p42, %p43
      %p46 = scmp.ne.s32.totalorder %s29, %s45
      %p47 = scmp.eq.s32.totalorder %s21, 0
      %p48 = por %p46, %p47
      %s49 = ssub.s32 %s15, %s22
      %p50 = scmp.eq.s32.totalorder %s49, 0
      %s52 = sadd.s32 %s51, 1
      %s53 = scalar_select %p50, %s51, %s52
      %p56 = pneg %p50
      %p57 = scmp.eq.s32.totalorder %s15, 1
      %p58 = por %p56, %p57
      %p59 = scmp.ne.s32.totalorder %s51, %s54
      %p60 = scmp.eq.s32.totalorder %s15, 0
      %p61 = por %p59, %p60
      %p62 = scmp.ne.s32.totalorder %s51, %s54
      %p63 = scmp.eq.s32.totalorder %s20, 1
      %p64 = por %p62, %p63
      %p65 = scmp.ne.s32.totalorder %s54, %s55
      %p66 = scmp.eq.s32.totalorder %s20, 0
      %p67 = por %p65, %p66
      %p68 = scmp.ne.s32.totalorder %s54, %s55
      %p69 = scmp.eq.s32.totalorder %s21, 1
      %p70 = por %p68, %p69
      %p72 = scmp.ne.s32.totalorder %s55, %s71
      %p73 = scmp.eq.s32.totalorder %s21, 0
      %p74 = por %p72, %p73
      %s76 = sadd.s32 %s75, 1
      %p79 = scmp.eq.s32.totalorder %s15, 1
      %p80 = scmp.ne.s32.totalorder %s75, %s77
      %p81 = scmp.eq.s32.totalorder %s15, 0
      %p82 = por %p80, %p81
      %p83 = scmp.ne.s32.totalorder %s75, %s77
      %p84 = scmp.eq.s32.totalorder %s20, 1
      %p85 = por %p83, %p84
      %p86 = scmp.ne.s32.totalorder %s77, %s78
      %p87 = scmp.eq.s32.totalorder %s20, 0
      %p88 = por %p86, %p87
      %p89 = scmp.ne.s32.totalorder %s77, %s78
      %p90 = scmp.eq.s32.totalorder %s21, 1
      %p91 = por %p89, %p90
      %p93 = scmp.ne.s32.totalorder %s78, %s92
      %p94 = scmp.eq.s32.totalorder %s21, 0
      %p95 = por %p93, %p94
      %s97 = sadd.s32 %s96, 1
      %p100 = scmp.eq.s32.totalorder %s15, 1
      %p101 = scmp.ne.s32.totalorder %s96, %s98
      %p102 = scmp.eq.s32.totalorder %s15, 0
      %p103 = por %p101, %p102
      %p104 = scmp.ne.s32.totalorder %s96, %s98
      %p105 = scmp.eq.s32.totalorder %s20, 1
      %p106 = por %p104, %p105
      %p107 = scmp.ne.s32.totalorder %s98, %s99
      %p108 = scmp.eq.s32.totalorder %s20, 0
      %p109 = por %p107, %p108
      %p110 = scmp.ne.s32.totalorder %s98, %s99
      %p111 = scmp.eq.s32.totalorder %s21, 1
      %p112 = por %p110, %p111
      %p114 = scmp.ne.s32.totalorder %s99, %s113
      %p115 = scmp.eq.s32.totalorder %s21, 0
      %p116 = por %p114, %p115
      %s118 = sadd.s32 %s117, 1
      %p121 = scmp.eq.s32.totalorder %s15, 1
      %p122 = scmp.ne.s32.totalorder %s117, %s119
      %p123 = scmp.eq.s32.totalorder %s15, 0
      %p124 = por %p122, %p123
      %p125 = scmp.ne.s32.totalorder %s117, %s119
      %p126 = scmp.eq.s32.totalorder %s20, 1
      %p127 = por %p125, %p126
      %p128 = scmp.ne.s32.totalorder %s119, %s120
      %p129 = scmp.eq.s32.totalorder %s20, 0
      %p130 = por %p128, %p129
      %p131 = scmp.ne.s32.totalorder %s119, %s120
      %p132 = scmp.eq.s32.totalorder %s21, 1
      %p133 = por %p131, %p132
      %p135 = scmp.ne.s32.totalorder %s120, %s134
      %p136 = scmp.eq.s32.totalorder %s21, 0
      %p137 = por %p135, %p136
      %s139 = sadd.s32 %s138, 1
      %p142 = scmp.eq.s32.totalorder %s15, 1
      %p143 = scmp.ne.s32.totalorder %s138, %s140
      %p144 = scmp.eq.s32.totalorder %s15, 0
      %p145 = por %p143, %p144
      %p146 = scmp.ne.s32.totalorder %s138, %s140
      %p147 = scmp.eq.s32.totalorder %s20, 1
      %p148 = por %p146, %p147
      %p149 = scmp.ne.s32.totalorder %s140, %s141
      %p150 = scmp.eq.s32.totalorder %s20, 0
      %p151 = por %p149, %p150
      %p152 = scmp.ne.s32.totalorder %s140, %s141
      %p153 = scmp.eq.s32.totalorder %s21, 1
      %p154 = por %p152, %p153
      %p156 = scmp.ne.s32.totalorder %s141, %s155
      %p157 = scmp.eq.s32.totalorder %s21, 0
      %p158 = por %p156, %p157
      %s159 = ssub.s32 %s15, %s22
      %p160 = scmp.eq.s32.totalorder %s159, 0
      %s162 = sadd.s32 %s161, 1
      %s163 = scalar_select %p160, %s161, %s162
      %p166 = pneg %p160
      %p167 = scmp.eq.s32.totalorder %s15, 1
      %p168 = por %p166, %p167
      %p169 = scmp.ne.s32.totalorder %s161, %s164
      %p170 = scmp.eq.s32.totalorder %s15, 0
      %p171 = por %p169, %p170
      %p172 = scmp.ne.s32.totalorder %s161, %s164
      %p173 = scmp.eq.s32.totalorder %s20, 1
      %p174 = por %p172, %p173
      %p175 = scmp.ne.s32.totalorder %s164, %s165
      %p176 = scmp.eq.s32.totalorder %s20, 0
      %p177 = por %p175, %p176
      %p178 = scmp.ne.s32.totalorder %s164, %s165
      %p179 = scmp.eq.s32.totalorder %s21, 1
      %p180 = por %p178, %p179
      %p182 = scmp.ne.s32.totalorder %s165, %s181
      %p183 = scmp.eq.s32.totalorder %s21, 0
      %p184 = por %p182, %p183
      %p185 = scmp.le.s32.totalorder 1, %s15
      %p186 = scmp.lt.s32.totalorder %s15, 3
      %p187 = pnand %p185, %p186
      %p188 = pneg %p187
      // Predicated region
      $region9: #{user_encoder.1} parent=5 // pred_check
        _
      $region10: #{user_encoder.1} parent=5 // pred_check_branch
        %190 = sbr.rel (%p187) target = $region12
      $region11: #{user_encoder.1} parent=5 // pred_region
        %s191 = ssub.s32 %s15, 1
        // Predicated region
        $region13: #{user_encoder.1} parent=11 // pred_check
          %p192 = pneg %p88
        $region14: #{user_encoder.1} parent=11 // pred_check_branch
          %194 = sbr.rel (%p192) target = $region16
        $region15: #{user_encoder.1} parent=11 // pred_region
          _
        $region16: #{user_encoder.1} parent=11 // pred_fallthru
          _
        // Predicated region
        $region17: #{user_encoder.1} parent=11 // pred_check
          %p195 = pneg %p109
        $region18: #{user_encoder.1} parent=11 // pred_check_branch
          %197 = sbr.rel (%p195) target = $region20
        $region19: #{user_encoder.1} parent=11 // pred_region
          _
        $region20: #{user_encoder.1} parent=11 // pred_fallthru
          _
        // Predicated region
        $region21: #{user_encoder.1} parent=11 // pred_check
          %p198 = pneg %p130
        $region22: #{user_encoder.1} parent=11 // pred_check_branch
          %200 = sbr.rel (%p198) target = $region24
        $region23: #{user_encoder.1} parent=11 // pred_region
          _
        $region24: #{user_encoder.1} parent=11 // pred_fallthru
          _
        // Predicated region
        $region25: #{user_encoder.1} parent=11 // pred_check
          %p201 = pneg %p151
        $region26: #{user_encoder.1} parent=11 // pred_check_branch
          %203 = sbr.rel (%p201) target = $region28
        $region27: #{user_encoder.1} parent=11 // pred_region
          _
        $region28: #{user_encoder.1} parent=11 // pred_fallthru
          _
      $region12: #{user_encoder.1} parent=5 // pred_fallthru
        _
      %p204 = scmp.lt.s32.totalorder %s15, 2
      // Predicated region
      $region29: #{user_encoder.1} parent=5 // pred_check
        %p205 = pneg %p204
      $region30: #{user_encoder.1} parent=5 // pred_check_branch
        %207 = sbr.rel (%p205) target = $region32
      $region31: #{user_encoder.1} parent=5 // pred_region
        // Predicated region
        $region33: #{user_encoder.1} parent=31 // pred_check
          %p208 = pneg %p35
        $region34: #{user_encoder.1} parent=31 // pred_check_branch
          %210 = sbr.rel (%p208) target = $region36
        $region35: #{user_encoder.1} parent=31 // pred_region
          %s211 = smul.u32 8, %s15
          %p212 = scmp.lt.s32.totalorder %s211, 15
          %s213 = scalar_select %p212, %s211, 15
          %s214 = smul.addr %s213, 2
          %s215 = smul.addr %s214, 4
          %s216 = scalar_lea.vmem %s0, %s215
          %s217 = smul.u32 8, %s15
        $region36: #{user_encoder.1} parent=31 // pred_fallthru
          _
        // Predicated region
        $region37: #{user_encoder.1} parent=31 // pred_check
          %p218 = pneg %p61
        $region38: #{user_encoder.1} parent=31 // pred_check_branch
          %220 = sbr.rel (%p218) target = $region40
        $region39: #{user_encoder.1} parent=31 // pred_region
          %p221 = scmp.lt.s32.totalorder %s15, 1
          %s222 = scalar_select %p221, %s15, 1
          %s223 = smul.addr %s222, 16
          %s224 = smul.addr %s223, 8
          %s225 = scalar_lea.vmem %s1, %s224
        $region40: #{user_encoder.1} parent=31 // pred_fallthru
          _
      $region32: #{user_encoder.1} parent=5 // pred_fallthru
        _
      %p226 = scmp.le.s32.totalorder 1, %s15
      %p227 = scmp.lt.s32.totalorder %s15, 3
      %p228 = pnand %p226, %p227
      %p229 = pneg %p228
      // Predicated region
      $region41: #{user_encoder.1} parent=5 // pred_check
        _
      $region42: #{user_encoder.1} parent=5 // pred_check_branch
        %231 = sbr.rel (%p228) target = $region44
      $region43: #{user_encoder.1} parent=5 // pred_region
        %s232 = ssub.s32 %s15, 1
        %s233 = smul.u32 8, %s20
        %p234 = scmp.lt.s32.totalorder %s233, 15
        %s235 = scalar_select %p234, %s233, 15
        %s236 = smul.addr %s235, 2
        %s237 = smul.addr %s236, 4
        %s238 = scalar_lea.vmem %s0, %s237
        %p239 = pneg %p41
        %p240 = pneg %p38
        %p241 = scmp.lt.s32.totalorder %s20, 1
        %s242 = scalar_select %p241, %s20, 1
        %s243 = smul.addr %s242, 16
        %s244 = smul.addr %s243, 8
        %s245 = scalar_lea.vmem %s1, %s244
        %p246 = pneg %p67
        %p247 = pneg %p64
        %p248 = pneg %p88
        %p249 = pneg %p85
        %p250 = pneg %p109
        %p251 = pneg %p106
        %p252 = pneg %p130
        %p253 = pneg %p127
        %p254 = pneg %p151
        %p255 = pneg %p148
        %p256 = pneg %p177
        %p257 = pneg %p174
        %s258 = sand.u32 %s164, 1
        %s259 = scalar_lea.sflag [#allocation3], %s258
        %s260 = sand.u32 %s164, 1
        %s261 = smul.addr %s260, 8
        %s262 = scalar_lea.vmem [#allocation2], %s261
        %s263 = smul.u32 8, %s20
        %p264 = scmp.lt.s32.totalorder %s263, 15
        %s265 = scalar_select %p264, %s263, 15
        %s266 = smul.addr %s265, 2
        %s267 = smul.addr %s266, 4
        %s268 = scalar_lea.vmem %s0, %s267
        %s269 = smul.u32 8, %s20
        %p270 = scmp.lt.s32.totalorder %s20, 1
        %s271 = scalar_select %p270, %s20, 1
        %s272 = smul.addr %s271, 16
        %s273 = smul.addr %s272, 8
        %s274 = scalar_lea.vmem %s1, %s273
        %v276 = vld [vmem:[%s268] sm:$0xf]
        %v277 = vld [vmem:[%s268 + $0x4] sm:$0xf]
        %v278 = vld [vmem:[%s268 + $0x8] sm:$0xf]
        %v279 = vld [vmem:[%s268 + $0xc] sm:$0xf]
        %v280 = vld [vmem:[%s268 + $0x10] sm:$0xf]
        %v281 = vld [vmem:[%s268 + $0x14] sm:$0xf]
        %v282 = vld [vmem:[%s268 + $0x18] sm:$0xf]
        %v283 = vld [vmem:[%s268 + $0x1c] sm:$0xf]
        %v284 = vld [vmem:[%s268 + $0x20] sm:$0xf]
        %v285 = vld [vmem:[%s268 + $0x24] sm:$0xf]
        %v286 = vld [vmem:[%s268 + $0x28] sm:$0xf]
        %v287 = vld [vmem:[%s268 + $0x2c] sm:$0xf]
        %v288 = vld [vmem:[%s268 + $0x30] sm:$0xf]
        %v289 = vld [vmem:[%s268 + $0x34] sm:$0xf]
        %v290 = vld [vmem:[%s268 + $0x38] sm:$0xf]
        %v291 = vld [vmem:[%s268 + $0x3c] sm:$0xf]
        %v292 = vld [vmem:[%s274] sm:$0xff]
        %v293 = vld [vmem:[%s274 + $0x8] sm:$0xff]
        %v294 = vld [vmem:[%s274 + $0x10] sm:$0xff]
        %v295 = vld [vmem:[%s274 + $0x18] sm:$0xff]
        %v296 = vld [vmem:[%s274 + $0x20] sm:$0xff]
        %v297 = vld [vmem:[%s274 + $0x28] sm:$0xff]
        %v298 = vld [vmem:[%s274 + $0x30] sm:$0xff]
        %v299 = vld [vmem:[%s274 + $0x38] sm:$0xff]
        %v300 = vld [vmem:[%s274 + $0x40] sm:$0xff]
        %v301 = vld [vmem:[%s274 + $0x48] sm:$0xff]
        %v302 = vld [vmem:[%s274 + $0x50] sm:$0xff]
        %v303 = vld [vmem:[%s274 + $0x58] sm:$0xff]
        %v304 = vld [vmem:[%s274 + $0x60] sm:$0xff]
        %v305 = vld [vmem:[%s274 + $0x68] sm:$0xff]
        %v306 = vld [vmem:[%s274 + $0x70] sm:$0xff]
        %v307 = vld [vmem:[%s274 + $0x78] sm:$0xff]
        %v308 = vld [vmem:[%s5] sm:$0x7]
        %v309 = vld [vmem:[%s2] sm:$0xff]
        %v310 = vld [vmem:[%s2 + $0x8] sm:$0xff]
        %v311 = vld [vmem:[%s2 + $0x10] sm:$0xff]
        %v312 = vld [vmem:[%s2 + $0x18] sm:$0xff]
        %v313 = vld [vmem:[%s2 + $0x20] sm:$0xff]
        %v314 = vld [vmem:[%s2 + $0x28] sm:$0xff]
        %v315 = vld [vmem:[%s2 + $0x30] sm:$0xff]
        %v316 = vld [vmem:[%s2 + $0x38] sm:$0xff]
        %v317 = vld [vmem:[%s2 + $0x40] sm:$0xff]
        %v318 = vld [vmem:[%s2 + $0x48] sm:$0xff]
        %v319 = vld [vmem:[%s2 + $0x50] sm:$0xff]
        %v320 = vld [vmem:[%s2 + $0x58] sm:$0xff]
        %v321 = vld [vmem:[%s2 + $0x60] sm:$0xff]
        %v322 = vld [vmem:[%s2 + $0x68] sm:$0xff]
        %v323 = vld [vmem:[%s2 + $0x70] sm:$0xff]
        %v324 = vld [vmem:[%s2 + $0x78] sm:$0xff]
        %v325 = vld [vmem:[%s2 + $0x80] sm:$0xff]
        %v326 = vld [vmem:[%s2 + $0x88] sm:$0xff]
        %v327 = vld [vmem:[%s2 + $0x90] sm:$0xff]
        %v328 = vld [vmem:[%s2 + $0x98] sm:$0xff]
        %v329 = vld [vmem:[%s2 + $0xa0] sm:$0xff]
        %v330 = vld [vmem:[%s2 + $0xa8] sm:$0xff]
        %v331 = vld [vmem:[%s2 + $0xb0] sm:$0xff]
        %v332 = vld [vmem:[%s2 + $0xb8] sm:$0xff]
        %v333 = vld [vmem:[%s2 + $0xc0] sm:$0xff]
        %v334 = vld [vmem:[%s2 + $0xc8] sm:$0xff]
        %v335 = vld [vmem:[%s2 + $0xd0] sm:$0xff]
        %v336 = vld [vmem:[%s2 + $0xd8] sm:$0xff]
        %v337 = vld [vmem:[%s2 + $0xe0] sm:$0xff]
        %v338 = vld [vmem:[%s2 + $0xe8] sm:$0xff]
        %v339 = vld [vmem:[%s2 + $0xf0] sm:$0xff]
        %v340 = vld [vmem:[%s2 + $0xf8] sm:$0xff]
        %v357 = vunpack.c.l.b16 %v276
        %v358 = vunpack.c.l.b16 %v277
        %v359 = vunpack.c.l.b16 %v278
        %v360 = vunpack.c.l.b16 %v279
        %v361 = vunpack.c.l.b16 %v280
        %v362 = vunpack.c.l.b16 %v281
        %v363 = vunpack.c.l.b16 %v282
        %v364 = vunpack.c.l.b16 %v283
        %v365 = vunpack.c.l.b16 %v284
        %v366 = vunpack.c.l.b16 %v285
        %v367 = vunpack.c.l.b16 %v286
        %v368 = vunpack.c.l.b16 %v287
        %v369 = vunpack.c.l.b16 %v288
        %v370 = vunpack.c.l.b16 %v289
        %v371 = vunpack.c.l.b16 %v290
        %v372 = vunpack.c.l.b16 %v291
        %v373 = vpack.c.b16 %v358, %v357
        %v374 = vpack.c.b16 %v360, %v359
        %v375 = vpack.c.b16 %v362, %v361
        %v376 = vpack.c.b16 %v364, %v363
        %v377 = vpack.c.b16 %v366, %v365
        %v378 = vpack.c.b16 %v368, %v367
        %v379 = vpack.c.b16 %v370, %v369
        %v380 = vpack.c.b16 %v372, %v371
        %v421 = vunpack.c.l.b16 %v309
        %v422 = vunpack.c.h.b16 %v309
        %v423 = vunpack.c.l.b16 %v310
        %v424 = vunpack.c.h.b16 %v310
        %v425 = vunpack.c.l.b16 %v311
        %v426 = vunpack.c.h.b16 %v311
        %v427 = vunpack.c.l.b16 %v312
        %v428 = vunpack.c.h.b16 %v312
        %v429 = vunpack.c.l.b16 %v313
        %v430 = vunpack.c.h.b16 %v313
        %v431 = vunpack.c.l.b16 %v314
        %v432 = vunpack.c.h.b16 %v314
        %v433 = vunpack.c.l.b16 %v315
        %v434 = vunpack.c.h.b16 %v315
        %v435 = vunpack.c.l.b16 %v316
        %v436 = vunpack.c.h.b16 %v316
        %v437 = vunpack.c.l.b16 %v317
        %v438 = vunpack.c.h.b16 %v317
        %v439 = vunpack.c.l.b16 %v318
        %v440 = vunpack.c.h.b16 %v318
        %v441 = vunpack.c.l.b16 %v319
        %v442 = vunpack.c.h.b16 %v319
        %v443 = vunpack.c.l.b16 %v320
        %v444 = vunpack.c.h.b16 %v320
        %v445 = vunpack.c.l.b16 %v321
        %v446 = vunpack.c.h.b16 %v321
        %v447 = vunpack.c.l.b16 %v322
        %v448 = vunpack.c.h.b16 %v322
        %v449 = vunpack.c.l.b16 %v323
        %v450 = vunpack.c.h.b16 %v323
        %v451 = vunpack.c.l.b16 %v324
        %v452 = vunpack.c.h.b16 %v324
        %v453 = vunpack.c.l.b16 %v325
        %v454 = vunpack.c.h.b16 %v325
        %v455 = vunpack.c.l.b16 %v326
        %v456 = vunpack.c.h.b16 %v326
        %v457 = vunpack.c.l.b16 %v327
        %v458 = vunpack.c.h.b16 %v327
        %v459 = vunpack.c.l.b16 %v328
        %v460 = vunpack.c.h.b16 %v328
        %v461 = vunpack.c.l.b16 %v329
        %v462 = vunpack.c.h.b16 %v329
        %v463 = vunpack.c.l.b16 %v330
        %v464 = vunpack.c.h.b16 %v330
        %v465 = vunpack.c.l.b16 %v331
        %v466 = vunpack.c.h.b16 %v331
        %v467 = vunpack.c.l.b16 %v332
        %v468 = vunpack.c.h.b16 %v332
        %v469 = vunpack.c.l.b16 %v333
        %v470 = vunpack.c.h.b16 %v333
        %v471 = vunpack.c.l.b16 %v334
        %v472 = vunpack.c.h.b16 %v334
        %v473 = vunpack.c.l.b16 %v335
        %v474 = vunpack.c.h.b16 %v335
        %v475 = vunpack.c.l.b16 %v336
        %v476 = vunpack.c.h.b16 %v336
        %v477 = vunpack.c.l.b16 %v337
        %v478 = vunpack.c.h.b16 %v337
        %v479 = vunpack.c.l.b16 %v338
        %v480 = vunpack.c.h.b16 %v338
        %v481 = vunpack.c.l.b16 %v339
        %v482 = vunpack.c.h.b16 %v339
        %v483 = vunpack.c.l.b16 %v340
        %v484 = vunpack.c.h.b16 %v340
        %v485 = vpack.c.b16 %v425, %v421
        %v486 = vpack.c.b16 %v426, %v422
        %v487 = vpack.c.b16 %v427, %v423
        %v488 = vpack.c.b16 %v428, %v424
        %v489 = vpack.c.b16 %v433, %v429
        %v490 = vpack.c.b16 %v434, %v430
        %v491 = vpack.c.b16 %v435, %v431
        %v492 = vpack.c.b16 %v436, %v432
        %v493 = vpack.c.b16 %v441, %v437
        %v494 = vpack.c.b16 %v442, %v438
        %v495 = vpack.c.b16 %v443, %v439
        %v496 = vpack.c.b16 %v444, %v440
        %v497 = vpack.c.b16 %v449, %v445
        %v498 = vpack.c.b16 %v450, %v446
        %v499 = vpack.c.b16 %v451, %v447
        %v500 = vpack.c.b16 %v452, %v448
        %v501 = vpack.c.b16 %v457, %v453
        %v502 = vpack.c.b16 %v458, %v454
        %v503 = vpack.c.b16 %v459, %v455
        %v504 = vpack.c.b16 %v460, %v456
        %v505 = vpack.c.b16 %v465, %v461
        %v506 = vpack.c.b16 %v466, %v462
        %v507 = vpack.c.b16 %v467, %v463
        %v508 = vpack.c.b16 %v468, %v464
        %v509 = vpack.c.b16 %v473, %v469
        %v510 = vpack.c.b16 %v474, %v470
        %v511 = vpack.c.b16 %v475, %v471
        %v512 = vpack.c.b16 %v476, %v472
        %v513 = vpack.c.b16 %v481, %v477
        %v514 = vpack.c.b16 %v482, %v478
        %v515 = vpack.c.b16 %v483, %v479
        %v516 = vpack.c.b16 %v484, %v480
        %549 = vmatprep.subr.bf16.mxu0 %v514
        %550 = vmatpush1.bf16.msra.mxu0 %v513
        %551 = vmatprep.subr.bf16.mxu0 %v510
        %552 = vmatpush1.bf16.msra.mxu0 %v509
        %553 = vmatprep.subr.bf16.mxu0 %v506
        %554 = vmatpush1.bf16.msra.mxu0 %v505
        %555 = vmatprep.subr.bf16.mxu0 %v502
        %556 = vmatpush1.bf16.msra.mxu0 %v501
        %557 = vmatprep.subr.bf16.mxu0 %v498
        %558 = vmatpush1.bf16.msra.mxu0 %v497
        %559 = vmatprep.subr.bf16.mxu0 %v494
        %560 = vmatpush1.bf16.msra.mxu0 %v493
        %561 = vmatprep.subr.bf16.mxu0 %v490
        %562 = vmatpush1.bf16.msra.mxu0 %v489
        %563 = vmatprep.subr.bf16.mxu0 %v486
        %564 = vmatpush1.bf16.msra.mxu0 %v485
        %565 = vmatprep.subr.bf16.mxu0 0
        %566 = vmatpush2.bf16.msra.mxu0 0
        %567 = vmatprep.subr.bf16.mxu0 0
        %568 = vmatpush2.bf16.msra.mxu0 0
        %569 = vmatprep.subr.bf16.mxu0 0
        %570 = vmatpush2.bf16.msra.mxu0 0
        %571 = vmatprep.subr.bf16.mxu0 0
        %572 = vmatpush2.bf16.msra.mxu0 0
        %573 = vmatprep.subr.bf16.mxu0 0
        %574 = vmatpush2.bf16.msra.mxu0 0
        %575 = vmatprep.subr.bf16.mxu0 0
        %576 = vmatpush2.bf16.msra.mxu0 0
        %577 = vmatprep.subr.bf16.mxu0 0
        %578 = vmatpush2.bf16.msra.mxu0 0
        %579 = vmatprep.subr.bf16.mxu0 0
        %580 = vmatpush2.bf16.msra.mxu0 0
        %581 = vmatprep.mubr.bf16.mxu0 0
        %582 = vmatmul.mubr.bf16.gmra.mxu0 %v373
        %v583 = vpop.f32.mrf.mxu0
        %v584 = vadd.f32 0.0, %v583
        %v585 = vpop.f32.mrf.mxu0
        %v586 = vadd.f32 0.0, %v585
        %v587 = vpop.f32.mrf.mxu0
        %v588 = vadd.f32 0.0, %v587
        %v589 = vpop.f32.mrf.mxu0
        %v590 = vadd.f32 0.0, %v589
        %591 = vmatprep.mubr.bf16.mxu0 0
        %592 = vmatmul.mubr.bf16.gmra.mxu0 %v374
        %v593 = vpop.f32.mrf.mxu0
        %v594 = vadd.f32 0.0, %v593
        %v595 = vpop.f32.mrf.mxu0
        %v596 = vadd.f32 0.0, %v595
        %v597 = vpop.f32.mrf.mxu0
        %v598 = vadd.f32 0.0, %v597
        %v599 = vpop.f32.mrf.mxu0
        %v600 = vadd.f32 0.0, %v599
        %601 = vmatprep.mubr.bf16.mxu0 0
        %602 = vmatmul.mubr.bf16.gmra.mxu0 %v375
        %v603 = vpop.f32.mrf.mxu0
        %v604 = vadd.f32 0.0, %v603
        %v605 = vpop.f32.mrf.mxu0
        %v606 = vadd.f32 0.0, %v605
        %v607 = vpop.f32.mrf.mxu0
        %v608 = vadd.f32 0.0, %v607
        %v609 = vpop.f32.mrf.mxu0
        %v610 = vadd.f32 0.0, %v609
        %611 = vmatprep.mubr.bf16.mxu0 0
        %612 = vmatmul.mubr.bf16.gmra.mxu0 %v376
        %v613 = vpop.f32.mrf.mxu0
        %v614 = vadd.f32 0.0, %v613
        %v615 = vpop.f32.mrf.mxu0
        %v616 = vadd.f32 0.0, %v615
        %v617 = vpop.f32.mrf.mxu0
        %v618 = vadd.f32 0.0, %v617
        %v619 = vpop.f32.mrf.mxu0
        %v620 = vadd.f32 0.0, %v619
        %621 = vmatprep.mubr.bf16.mxu0 0
        %622 = vmatmul.mubr.bf16.gmra.mxu0 %v377
        %v623 = vpop.f32.mrf.mxu0
        %v624 = vadd.f32 0.0, %v623
        %v625 = vpop.f32.mrf.mxu0
        %v626 = vadd.f32 0.0, %v625
        %v627 = vpop.f32.mrf.mxu0
        %v628 = vadd.f32 0.0, %v627
        %v629 = vpop.f32.mrf.mxu0
        %v630 = vadd.f32 0.0, %v629
        %631 = vmatprep.mubr.bf16.mxu0 0
        %632 = vmatmul.mubr.bf16.gmra.mxu0 %v378
        %v633 = vpop.f32.mrf.mxu0
        %v634 = vadd.f32 0.0, %v633
        %v635 = vpop.f32.mrf.mxu0
        %v636 = vadd.f32 0.0, %v635
        %v637 = vpop.f32.mrf.mxu0
        %v638 = vadd.f32 0.0, %v637
        %v639 = vpop.f32.mrf.mxu0
        %v640 = vadd.f32 0.0, %v639
        %641 = vmatprep.mubr.bf16.mxu0 0
        %642 = vmatmul.mubr.bf16.gmra.mxu0 %v379
        %v643 = vpop.f32.mrf.mxu0
        %v644 = vadd.f32 0.0, %v643
        %v645 = vpop.f32.mrf.mxu0
        %v646 = vadd.f32 0.0, %v645
        %v647 = vpop.f32.mrf.mxu0
        %v648 = vadd.f32 0.0, %v647
        %v649 = vpop.f32.mrf.mxu0
        %v650 = vadd.f32 0.0, %v649
        %651 = vmatprep.mubr.bf16.mxu0 0
        %652 = vmatmul.mubr.bf16.gmra.mxu0 %v380
        %v653 = vpop.f32.mrf.mxu0
        %v654 = vadd.f32 0.0, %v653
        %v655 = vpop.f32.mrf.mxu0
        %v656 = vadd.f32 0.0, %v655
        %v657 = vpop.f32.mrf.mxu0
        %v658 = vadd.f32 0.0, %v657
        %v659 = vpop.f32.mrf.mxu0
        %v660 = vadd.f32 0.0, %v659
        %661 = vdwg.mxu0
        %662 = vmatprep.subr.bf16.mxu0 %v516
        %663 = vmatpush1.bf16.msra.mxu0 %v515
        %664 = vmatprep.subr.bf16.mxu0 %v512
        %665 = vmatpush1.bf16.msra.mxu0 %v511
        %666 = vmatprep.subr.bf16.mxu0 %v508
        %667 = vmatpush1.bf16.msra.mxu0 %v507
        %668 = vmatprep.subr.bf16.mxu0 %v504
        %669 = vmatpush1.bf16.msra.mxu0 %v503
        %670 = vmatprep.subr.bf16.mxu0 %v500
        %671 = vmatpush1.bf16.msra.mxu0 %v499
        %672 = vmatprep.subr.bf16.mxu0 %v496
        %673 = vmatpush1.bf16.msra.mxu0 %v495
        %674 = vmatprep.subr.bf16.mxu0 %v492
        %675 = vmatpush1.bf16.msra.mxu0 %v491
        %676 = vmatprep.subr.bf16.mxu0 %v488
        %677 = vmatpush1.bf16.msra.mxu0 %v487
        %678 = vmatprep.subr.bf16.mxu0 0
        %679 = vmatpush2.bf16.msra.mxu0 0
        %680 = vmatprep.subr.bf16.mxu0 0
        %681 = vmatpush2.bf16.msra.mxu0 0
        %682 = vmatprep.subr.bf16.mxu0 0
        %683 = vmatpush2.bf16.msra.mxu0 0
        %684 = vmatprep.subr.bf16.mxu0 0
        %685 = vmatpush2.bf16.msra.mxu0 0
        %686 = vmatprep.subr.bf16.mxu0 0
        %687 = vmatpush2.bf16.msra.mxu0 0
        %688 = vmatprep.subr.bf16.mxu0 0
        %689 = vmatpush2.bf16.msra.mxu0 0
        %690 = vmatprep.subr.bf16.mxu0 0
        %691 = vmatpush2.bf16.msra.mxu0 0
        %692 = vmatprep.subr.bf16.mxu0 0
        %693 = vmatpush2.bf16.msra.mxu0 0
        %694 = vmatprep.mubr.bf16.mxu0 0
        %695 = vmatmul.mubr.bf16.gmra.mxu0 %v373
        %v696 = vpop.f32.mrf.mxu0
        %v697 = vadd.f32 0.0, %v696
        %v698 = vpop.f32.mrf.mxu0
        %v699 = vadd.f32 0.0, %v698
        %v700 = vpop.f32.mrf.mxu0
        %v701 = vadd.f32 0.0, %v700
        %v702 = vpop.f32.mrf.mxu0
        %v703 = vadd.f32 0.0, %v702
        %704 = vmatprep.mubr.bf16.mxu0 0
        %705 = vmatmul.mubr.bf16.gmra.mxu0 %v374
        %v706 = vpop.f32.mrf.mxu0
        %v707 = vadd.f32 0.0, %v706
        %v708 = vpop.f32.mrf.mxu0
        %v709 = vadd.f32 0.0, %v708
        %v710 = vpop.f32.mrf.mxu0
        %v711 = vadd.f32 0.0, %v710
        %v712 = vpop.f32.mrf.mxu0
        %v713 = vadd.f32 0.0, %v712
        %714 = vmatprep.mubr.bf16.mxu0 0
        %715 = vmatmul.mubr.bf16.gmra.mxu0 %v375
        %v716 = vpop.f32.mrf.mxu0
        %v717 = vadd.f32 0.0, %v716
        %v718 = vpop.f32.mrf.mxu0
        %v719 = vadd.f32 0.0, %v718
        %v720 = vpop.f32.mrf.mxu0
        %v721 = vadd.f32 0.0, %v720
        %v722 = vpop.f32.mrf.mxu0
        %v723 = vadd.f32 0.0, %v722
        %724 = vmatprep.mubr.bf16.mxu0 0
        %725 = vmatmul.mubr.bf16.gmra.mxu0 %v376
        %v726 = vpop.f32.mrf.mxu0
        %v727 = vadd.f32 0.0, %v726
        %v728 = vpop.f32.mrf.mxu0
        %v729 = vadd.f32 0.0, %v728
        %v730 = vpop.f32.mrf.mxu0
        %v731 = vadd.f32 0.0, %v730
        %v732 = vpop.f32.mrf.mxu0
        %v733 = vadd.f32 0.0, %v732
        %734 = vmatprep.mubr.bf16.mxu0 0
        %735 = vmatmul.mubr.bf16.gmra.mxu0 %v377
        %v736 = vpop.f32.mrf.mxu0
        %v737 = vadd.f32 0.0, %v736
        %v738 = vpop.f32.mrf.mxu0
        %v739 = vadd.f32 0.0, %v738
        %v740 = vpop.f32.mrf.mxu0
        %v741 = vadd.f32 0.0, %v740
        %v742 = vpop.f32.mrf.mxu0
        %v743 = vadd.f32 0.0, %v742
        %744 = vmatprep.mubr.bf16.mxu0 0
        %745 = vmatmul.mubr.bf16.gmra.mxu0 %v378
        %v746 = vpop.f32.mrf.mxu0
        %v747 = vadd.f32 0.0, %v746
        %v748 = vpop.f32.mrf.mxu0
        %v749 = vadd.f32 0.0, %v748
        %v750 = vpop.f32.mrf.mxu0
        %v751 = vadd.f32 0.0, %v750
        %v752 = vpop.f32.mrf.mxu0
        %v753 = vadd.f32 0.0, %v752
        %754 = vmatprep.mubr.bf16.mxu0 0
        %755 = vmatmul.mubr.bf16.gmra.mxu0 %v379
        %v756 = vpop.f32.mrf.mxu0
        %v757 = vadd.f32 0.0, %v756
        %v758 = vpop.f32.mrf.mxu0
        %v759 = vadd.f32 0.0, %v758
        %v760 = vpop.f32.mrf.mxu0
        %v761 = vadd.f32 0.0, %v760
        %v762 = vpop.f32.mrf.mxu0
        %v763 = vadd.f32 0.0, %v762
        %764 = vmatprep.mubr.bf16.mxu0 0
        %765 = vmatmul.mubr.bf16.gmra.mxu0 %v380
        %v766 = vpop.f32.mrf.mxu0
        %v767 = vadd.f32 0.0, %v766
        %v768 = vpop.f32.mrf.mxu0
        %v769 = vadd.f32 0.0, %v768
        %v770 = vpop.f32.mrf.mxu0
        %v771 = vadd.f32 0.0, %v770
        %v772 = vpop.f32.mrf.mxu0
        %v773 = vadd.f32 0.0, %v772
        %774 = vdwg.mxu0
        %v775 = vpack.c.bf16 %v588, %v584
        %v776 = vpack.c.bf16 %v590, %v586
        %v777 = vpack.c.bf16 %v701, %v697
        %v778 = vpack.c.bf16 %v703, %v699
        %v779 = vpack.c.bf16 %v598, %v594
        %v780 = vpack.c.bf16 %v600, %v596
        %v781 = vpack.c.bf16 %v711, %v707
        %v782 = vpack.c.bf16 %v713, %v709
        %v783 = vpack.c.bf16 %v608, %v604
        %v784 = vpack.c.bf16 %v610, %v606
        %v785 = vpack.c.bf16 %v721, %v717
        %v786 = vpack.c.bf16 %v723, %v719
        %v787 = vpack.c.bf16 %v618, %v614
        %v788 = vpack.c.bf16 %v620, %v616
        %v789 = vpack.c.bf16 %v731, %v727
        %v790 = vpack.c.bf16 %v733, %v729
        %v791 = vpack.c.bf16 %v628, %v624
        %v792 = vpack.c.bf16 %v630, %v626
        %v793 = vpack.c.bf16 %v741, %v737
        %v794 = vpack.c.bf16 %v743, %v739
        %v795 = vpack.c.bf16 %v638, %v634
        %v796 = vpack.c.bf16 %v640, %v636
        %v797 = vpack.c.bf16 %v751, %v747
        %v798 = vpack.c.bf16 %v753, %v749
        %v799 = vpack.c.bf16 %v648, %v644
        %v800 = vpack.c.bf16 %v650, %v646
        %v801 = vpack.c.bf16 %v761, %v757
        %v802 = vpack.c.bf16 %v763, %v759
        %v803 = vpack.c.bf16 %v658, %v654
        %v804 = vpack.c.bf16 %v660, %v656
        %v805 = vpack.c.bf16 %v771, %v767
        %v806 = vpack.c.bf16 %v773, %v769
        %v807 = vld [vmem:[%s3] sm:$0xff]
        %v808 = vld [vmem:[%s3 + $0x8] sm:$0xff]
        %v809 = vld [vmem:[%s3 + $0x10] sm:$0xff]
        %v810 = vld [vmem:[%s3 + $0x18] sm:$0xff]
        %v811 = vld [vmem:[%s3 + $0x20] sm:$0xff]
        %v812 = vld [vmem:[%s3 + $0x28] sm:$0xff]
        %v813 = vld [vmem:[%s3 + $0x30] sm:$0xff]
        %v814 = vld [vmem:[%s3 + $0x38] sm:$0xff]
        %v815 = vld [vmem:[%s3 + $0x40] sm:$0xff]
        %v816 = vld [vmem:[%s3 + $0x48] sm:$0xff]
        %v817 = vld [vmem:[%s3 + $0x50] sm:$0xff]
        %v818 = vld [vmem:[%s3 + $0x58] sm:$0xff]
        %v819 = vld [vmem:[%s3 + $0x60] sm:$0xff]
        %v820 = vld [vmem:[%s3 + $0x68] sm:$0xff]
        %v821 = vld [vmem:[%s3 + $0x70] sm:$0xff]
        %v822 = vld [vmem:[%s3 + $0x78] sm:$0xff]
        %v823 = vld [vmem:[%s3 + $0x80] sm:$0xff]
        %v824 = vld [vmem:[%s3 + $0x88] sm:$0xff]
        %v825 = vld [vmem:[%s3 + $0x90] sm:$0xff]
        %v826 = vld [vmem:[%s3 + $0x98] sm:$0xff]
        %v827 = vld [vmem:[%s3 + $0xa0] sm:$0xff]
        %v828 = vld [vmem:[%s3 + $0xa8] sm:$0xff]
        %v829 = vld [vmem:[%s3 + $0xb0] sm:$0xff]
        %v830 = vld [vmem:[%s3 + $0xb8] sm:$0xff]
        %v831 = vld [vmem:[%s3 + $0xc0] sm:$0xff]
        %v832 = vld [vmem:[%s3 + $0xc8] sm:$0xff]
        %v833 = vld [vmem:[%s3 + $0xd0] sm:$0xff]
        %v834 = vld [vmem:[%s3 + $0xd8] sm:$0xff]
        %v835 = vld [vmem:[%s3 + $0xe0] sm:$0xff]
        %v836 = vld [vmem:[%s3 + $0xe8] sm:$0xff]
        %v837 = vld [vmem:[%s3 + $0xf0] sm:$0xff]
        %v838 = vld [vmem:[%s3 + $0xf8] sm:$0xff]
        %v871 = vunpack.c.l.b16 %v807
        %v872 = vunpack.c.h.b16 %v807
        %v873 = vunpack.c.l.b16 %v808
        %v874 = vunpack.c.h.b16 %v808
        %v875 = vunpack.c.l.b16 %v809
        %v876 = vunpack.c.h.b16 %v809
        %v877 = vunpack.c.l.b16 %v810
        %v878 = vunpack.c.h.b16 %v810
        %v879 = vunpack.c.l.b16 %v811
        %v880 = vunpack.c.h.b16 %v811
        %v881 = vunpack.c.l.b16 %v812
        %v882 = vunpack.c.h.b16 %v812
        %v883 = vunpack.c.l.b16 %v813
        %v884 = vunpack.c.h.b16 %v813
        %v885 = vunpack.c.l.b16 %v814
        %v886 = vunpack.c.h.b16 %v814
        %v887 = vunpack.c.l.b16 %v815
        %v888 = vunpack.c.h.b16 %v815
        %v889 = vunpack.c.l.b16 %v816
        %v890 = vunpack.c.h.b16 %v816
        %v891 = vunpack.c.l.b16 %v817
        %v892 = vunpack.c.h.b16 %v817
        %v893 = vunpack.c.l.b16 %v818
        %v894 = vunpack.c.h.b16 %v818
        %v895 = vunpack.c.l.b16 %v819
        %v896 = vunpack.c.h.b16 %v819
        %v897 = vunpack.c.l.b16 %v820
        %v898 = vunpack.c.h.b16 %v820
        %v899 = vunpack.c.l.b16 %v821
        %v900 = vunpack.c.h.b16 %v821
        %v901 = vunpack.c.l.b16 %v822
        %v902 = vunpack.c.h.b16 %v822
        %v903 = vunpack.c.l.b16 %v823
        %v904 = vunpack.c.h.b16 %v823
        %v905 = vunpack.c.l.b16 %v824
        %v906 = vunpack.c.h.b16 %v824
        %v907 = vunpack.c.l.b16 %v825
        %v908 = vunpack.c.h.b16 %v825
        %v909 = vunpack.c.l.b16 %v826
        %v910 = vunpack.c.h.b16 %v826
        %v911 = vunpack.c.l.b16 %v827
        %v912 = vunpack.c.h.b16 %v827
        %v913 = vunpack.c.l.b16 %v828
        %v914 = vunpack.c.h.b16 %v828
        %v915 = vunpack.c.l.b16 %v829
        %v916 = vunpack.c.h.b16 %v829
        %v917 = vunpack.c.l.b16 %v830
        %v918 = vunpack.c.h.b16 %v830
        %v919 = vunpack.c.l.b16 %v831
        %v920 = vunpack.c.h.b16 %v831
        %v921 = vunpack.c.l.b16 %v832
        %v922 = vunpack.c.h.b16 %v832
        %v923 = vunpack.c.l.b16 %v833
        %v924 = vunpack.c.h.b16 %v833
        %v925 = vunpack.c.l.b16 %v834
        %v926 = vunpack.c.h.b16 %v834
        %v927 = vunpack.c.l.b16 %v835
        %v928 = vunpack.c.h.b16 %v835
        %v929 = vunpack.c.l.b16 %v836
        %v930 = vunpack.c.h.b16 %v836
        %v931 = vunpack.c.l.b16 %v837
        %v932 = vunpack.c.h.b16 %v837
        %v933 = vunpack.c.l.b16 %v838
        %v934 = vunpack.c.h.b16 %v838
        %v935 = vpack.c.b16 %v875, %v871
        %v936 = vpack.c.b16 %v876, %v872
        %v937 = vpack.c.b16 %v877, %v873
        %v938 = vpack.c.b16 %v878, %v874
        %v939 = vpack.c.b16 %v883, %v879
        %v940 = vpack.c.b16 %v884, %v880
        %v941 = vpack.c.b16 %v885, %v881
        %v942 = vpack.c.b16 %v886, %v882
        %v943 = vpack.c.b16 %v891, %v887
        %v944 = vpack.c.b16 %v892, %v888
        %v945 = vpack.c.b16 %v893, %v889
        %v946 = vpack.c.b16 %v894, %v890
        %v947 = vpack.c.b16 %v899, %v895
        %v948 = vpack.c.b16 %v900, %v896
        %v949 = vpack.c.b16 %v901, %v897
        %v950 = vpack.c.b16 %v902, %v898
        %v951 = vpack.c.b16 %v907, %v903
        %v952 = vpack.c.b16 %v908, %v904
        %v953 = vpack.c.b16 %v909, %v905
        %v954 = vpack.c.b16 %v910, %v906
        %v955 = vpack.c.b16 %v915, %v911
        %v956 = vpack.c.b16 %v916, %v912
        %v957 = vpack.c.b16 %v917, %v913
        %v958 = vpack.c.b16 %v918, %v914
        %v959 = vpack.c.b16 %v923, %v919
        %v960 = vpack.c.b16 %v924, %v920
        %v961 = vpack.c.b16 %v925, %v921
        %v962 = vpack.c.b16 %v926, %v922
        %v963 = vpack.c.b16 %v931, %v927
        %v964 = vpack.c.b16 %v932, %v928
        %v965 = vpack.c.b16 %v933, %v929
        %v966 = vpack.c.b16 %v934, %v930
        %999 = vmatprep.subr.bf16.mxu0 %v964
        %1000 = vmatpush1.bf16.msra.mxu0 %v963
        %1001 = vmatprep.subr.bf16.mxu0 %v960
        %1002 = vmatpush1.bf16.msra.mxu0 %v959
        %1003 = vmatprep.subr.bf16.mxu0 %v956
        %1004 = vmatpush1.bf16.msra.mxu0 %v955
        %1005 = vmatprep.subr.bf16.mxu0 %v952
        %1006 = vmatpush1.bf16.msra.mxu0 %v951
        %1007 = vmatprep.subr.bf16.mxu0 %v948
        %1008 = vmatpush1.bf16.msra.mxu0 %v947
        %1009 = vmatprep.subr.bf16.mxu0 %v944
        %1010 = vmatpush1.bf16.msra.mxu0 %v943
        %1011 = vmatprep.subr.bf16.mxu0 %v940
        %1012 = vmatpush1.bf16.msra.mxu0 %v939
        %1013 = vmatprep.subr.bf16.mxu0 %v936
        %1014 = vmatpush1.bf16.msra.mxu0 %v935
        %1015 = vmatprep.subr.bf16.mxu0 0
        %1016 = vmatpush2.bf16.msra.mxu0 0
        %1017 = vmatprep.subr.bf16.mxu0 0
        %1018 = vmatpush2.bf16.msra.mxu0 0
        %1019 = vmatprep.subr.bf16.mxu0 0
        %1020 = vmatpush2.bf16.msra.mxu0 0
        %1021 = vmatprep.subr.bf16.mxu0 0
        %1022 = vmatpush2.bf16.msra.mxu0 0
        %1023 = vmatprep.subr.bf16.mxu0 0
        %1024 = vmatpush2.bf16.msra.mxu0 0
        %1025 = vmatprep.subr.bf16.mxu0 0
        %1026 = vmatpush2.bf16.msra.mxu0 0
        %1027 = vmatprep.subr.bf16.mxu0 0
        %1028 = vmatpush2.bf16.msra.mxu0 0
        %1029 = vmatprep.subr.bf16.mxu0 0
        %1030 = vmatpush2.bf16.msra.mxu0 0
        %1031 = vmatprep.mubr.bf16.mxu0 0
        %1032 = vmatmul.mubr.bf16.gmra.mxu0 %v373
        %v1033 = vpop.f32.mrf.mxu0
        %v1034 = vadd.f32 0.0, %v1033
        %v1035 = vpop.f32.mrf.mxu0
        %v1036 = vadd.f32 0.0, %v1035
        %v1037 = vpop.f32.mrf.mxu0
        %v1038 = vadd.f32 0.0, %v1037
        %v1039 = vpop.f32.mrf.mxu0
        %v1040 = vadd.f32 0.0, %v1039
        %1041 = vmatprep.mubr.bf16.mxu0 0
        %1042 = vmatmul.mubr.bf16.gmra.mxu0 %v374
        %v1043 = vpop.f32.mrf.mxu0
        %v1044 = vadd.f32 0.0, %v1043
        %v1045 = vpop.f32.mrf.mxu0
        %v1046 = vadd.f32 0.0, %v1045
        %v1047 = vpop.f32.mrf.mxu0
        %v1048 = vadd.f32 0.0, %v1047
        %v1049 = vpop.f32.mrf.mxu0
        %v1050 = vadd.f32 0.0, %v1049
        %1051 = vmatprep.mubr.bf16.mxu0 0
        %1052 = vmatmul.mubr.bf16.gmra.mxu0 %v375
        %v1053 = vpop.f32.mrf.mxu0
        %v1054 = vadd.f32 0.0, %v1053
        %v1055 = vpop.f32.mrf.mxu0
        %v1056 = vadd.f32 0.0, %v1055
        %v1057 = vpop.f32.mrf.mxu0
        %v1058 = vadd.f32 0.0, %v1057
        %v1059 = vpop.f32.mrf.mxu0
        %v1060 = vadd.f32 0.0, %v1059
        %1061 = vmatprep.mubr.bf16.mxu0 0
        %1062 = vmatmul.mubr.bf16.gmra.mxu0 %v376
        %v1063 = vpop.f32.mrf.mxu0
        %v1064 = vadd.f32 0.0, %v1063
        %v1065 = vpop.f32.mrf.mxu0
        %v1066 = vadd.f32 0.0, %v1065
        %v1067 = vpop.f32.mrf.mxu0
        %v1068 = vadd.f32 0.0, %v1067
        %v1069 = vpop.f32.mrf.mxu0
        %v1070 = vadd.f32 0.0, %v1069
        %1071 = vmatprep.mubr.bf16.mxu0 0
        %1072 = vmatmul.mubr.bf16.gmra.mxu0 %v377
        %v1073 = vpop.f32.mrf.mxu0
        %v1074 = vadd.f32 0.0, %v1073
        %v1075 = vpop.f32.mrf.mxu0
        %v1076 = vadd.f32 0.0, %v1075
        %v1077 = vpop.f32.mrf.mxu0
        %v1078 = vadd.f32 0.0, %v1077
        %v1079 = vpop.f32.mrf.mxu0
        %v1080 = vadd.f32 0.0, %v1079
        %1081 = vmatprep.mubr.bf16.mxu0 0
        %1082 = vmatmul.mubr.bf16.gmra.mxu0 %v378
        %v1083 = vpop.f32.mrf.mxu0
        %v1084 = vadd.f32 0.0, %v1083
        %v1085 = vpop.f32.mrf.mxu0
        %v1086 = vadd.f32 0.0, %v1085
        %v1087 = vpop.f32.mrf.mxu0
        %v1088 = vadd.f32 0.0, %v1087
        %v1089 = vpop.f32.mrf.mxu0
        %v1090 = vadd.f32 0.0, %v1089
        %1091 = vmatprep.mubr.bf16.mxu0 0
        %1092 = vmatmul.mubr.bf16.gmra.mxu0 %v379
        %v1093 = vpop.f32.mrf.mxu0
        %v1094 = vadd.f32 0.0, %v1093
        %v1095 = vpop.f32.mrf.mxu0
        %v1096 = vadd.f32 0.0, %v1095
        %v1097 = vpop.f32.mrf.mxu0
        %v1098 = vadd.f32 0.0, %v1097
        %v1099 = vpop.f32.mrf.mxu0
        %v1100 = vadd.f32 0.0, %v1099
        %1101 = vmatprep.mubr.bf16.mxu0 0
        %1102 = vmatmul.mubr.bf16.gmra.mxu0 %v380
        %v1103 = vpop.f32.mrf.mxu0
        %v1104 = vadd.f32 0.0, %v1103
        %v1105 = vpop.f32.mrf.mxu0
        %v1106 = vadd.f32 0.0, %v1105
        %v1107 = vpop.f32.mrf.mxu0
        %v1108 = vadd.f32 0.0, %v1107
        %v1109 = vpop.f32.mrf.mxu0
        %v1110 = vadd.f32 0.0, %v1109
        %1111 = vdwg.mxu0
        %1112 = vmatprep.subr.bf16.mxu0 %v966
        %1113 = vmatpush1.bf16.msra.mxu0 %v965
        %1114 = vmatprep.subr.bf16.mxu0 %v962
        %1115 = vmatpush1.bf16.msra.mxu0 %v961
        %1116 = vmatprep.subr.bf16.mxu0 %v958
        %1117 = vmatpush1.bf16.msra.mxu0 %v957
        %1118 = vmatprep.subr.bf16.mxu0 %v954
        %1119 = vmatpush1.bf16.msra.mxu0 %v953
        %1120 = vmatprep.subr.bf16.mxu0 %v950
        %1121 = vmatpush1.bf16.msra.mxu0 %v949
        %1122 = vmatprep.subr.bf16.mxu0 %v946
        %1123 = vmatpush1.bf16.msra.mxu0 %v945
        %1124 = vmatprep.subr.bf16.mxu0 %v942
        %1125 = vmatpush1.bf16.msra.mxu0 %v941
        %1126 = vmatprep.subr.bf16.mxu0 %v938
        %1127 = vmatpush1.bf16.msra.mxu0 %v937
        %1128 = vmatprep.subr.bf16.mxu0 0
        %1129 = vmatpush2.bf16.msra.mxu0 0
        %1130 = vmatprep.subr.bf16.mxu0 0
        %1131 = vmatpush2.bf16.msra.mxu0 0
        %1132 = vmatprep.subr.bf16.mxu0 0
        %1133 = vmatpush2.bf16.msra.mxu0 0
        %1134 = vmatprep.subr.bf16.mxu0 0
        %1135 = vmatpush2.bf16.msra.mxu0 0
        %1136 = vmatprep.subr.bf16.mxu0 0
        %1137 = vmatpush2.bf16.msra.mxu0 0
        %1138 = vmatprep.subr.bf16.mxu0 0
        %1139 = vmatpush2.bf16.msra.mxu0 0
        %1140 = vmatprep.subr.bf16.mxu0 0
        %1141 = vmatpush2.bf16.msra.mxu0 0
        %1142 = vmatprep.subr.bf16.mxu0 0
        %1143 = vmatpush2.bf16.msra.mxu0 0
        %1144 = vmatprep.mubr.bf16.mxu0 0
        %1145 = vmatmul.mubr.bf16.gmra.mxu0 %v373
        %v1146 = vpop.f32.mrf.mxu0
        %v1147 = vadd.f32 0.0, %v1146
        %v1148 = vpop.f32.mrf.mxu0
        %v1149 = vadd.f32 0.0, %v1148
        %v1150 = vpop.f32.mrf.mxu0
        %v1151 = vadd.f32 0.0, %v1150
        %v1152 = vpop.f32.mrf.mxu0
        %v1153 = vadd.f32 0.0, %v1152
        %1154 = vmatprep.mubr.bf16.mxu0 0
        %1155 = vmatmul.mubr.bf16.gmra.mxu0 %v374
        %v1156 = vpop.f32.mrf.mxu0
        %v1157 = vadd.f32 0.0, %v1156
        %v1158 = vpop.f32.mrf.mxu0
        %v1159 = vadd.f32 0.0, %v1158
        %v1160 = vpop.f32.mrf.mxu0
        %v1161 = vadd.f32 0.0, %v1160
        %v1162 = vpop.f32.mrf.mxu0
        %v1163 = vadd.f32 0.0, %v1162
        %1164 = vmatprep.mubr.bf16.mxu0 0
        %1165 = vmatmul.mubr.bf16.gmra.mxu0 %v375
        %v1166 = vpop.f32.mrf.mxu0
        %v1167 = vadd.f32 0.0, %v1166
        %v1168 = vpop.f32.mrf.mxu0
        %v1169 = vadd.f32 0.0, %v1168
        %v1170 = vpop.f32.mrf.mxu0
        %v1171 = vadd.f32 0.0, %v1170
        %v1172 = vpop.f32.mrf.mxu0
        %v1173 = vadd.f32 0.0, %v1172
        %1174 = vmatprep.mubr.bf16.mxu0 0
        %1175 = vmatmul.mubr.bf16.gmra.mxu0 %v376
        %v1176 = vpop.f32.mrf.mxu0
        %v1177 = vadd.f32 0.0, %v1176
        %v1178 = vpop.f32.mrf.mxu0
        %v1179 = vadd.f32 0.0, %v1178
        %v1180 = vpop.f32.mrf.mxu0
        %v1181 = vadd.f32 0.0, %v1180
        %v1182 = vpop.f32.mrf.mxu0
        %v1183 = vadd.f32 0.0, %v1182
        %1184 = vmatprep.mubr.bf16.mxu0 0
        %1185 = vmatmul.mubr.bf16.gmra.mxu0 %v377
        %v1186 = vpop.f32.mrf.mxu0
        %v1187 = vadd.f32 0.0, %v1186
        %v1188 = vpop.f32.mrf.mxu0
        %v1189 = vadd.f32 0.0, %v1188
        %v1190 = vpop.f32.mrf.mxu0
        %v1191 = vadd.f32 0.0, %v1190
        %v1192 = vpop.f32.mrf.mxu0
        %v1193 = vadd.f32 0.0, %v1192
        %1194 = vmatprep.mubr.bf16.mxu0 0
        %1195 = vmatmul.mubr.bf16.gmra.mxu0 %v378
        %v1196 = vpop.f32.mrf.mxu0
        %v1197 = vadd.f32 0.0, %v1196
        %v1198 = vpop.f32.mrf.mxu0
        %v1199 = vadd.f32 0.0, %v1198
        %v1200 = vpop.f32.mrf.mxu0
        %v1201 = vadd.f32 0.0, %v1200
        %v1202 = vpop.f32.mrf.mxu0
        %v1203 = vadd.f32 0.0, %v1202
        %1204 = vmatprep.mubr.bf16.mxu0 0
        %1205 = vmatmul.mubr.bf16.gmra.mxu0 %v379
        %v1206 = vpop.f32.mrf.mxu0
        %v1207 = vadd.f32 0.0, %v1206
        %v1208 = vpop.f32.mrf.mxu0
        %v1209 = vadd.f32 0.0, %v1208
        %v1210 = vpop.f32.mrf.mxu0
        %v1211 = vadd.f32 0.0, %v1210
        %v1212 = vpop.f32.mrf.mxu0
        %v1213 = vadd.f32 0.0, %v1212
        %1214 = vmatprep.mubr.bf16.mxu0 0
        %1215 = vmatmul.mubr.bf16.gmra.mxu0 %v380
        %v1216 = vpop.f32.mrf.mxu0
        %v1217 = vadd.f32 0.0, %v1216
        %v1218 = vpop.f32.mrf.mxu0
        %v1219 = vadd.f32 0.0, %v1218
        %v1220 = vpop.f32.mrf.mxu0
        %v1221 = vadd.f32 0.0, %v1220
        %v1222 = vpop.f32.mrf.mxu0
        %v1223 = vadd.f32 0.0, %v1222
        %1224 = vdwg.mxu0
        %v1225 = vpack.c.bf16 %v1038, %v1034
        %v1226 = vpack.c.bf16 %v1040, %v1036
        %v1227 = vpack.c.bf16 %v1151, %v1147
        %v1228 = vpack.c.bf16 %v1153, %v1149
        %v1229 = vpack.c.bf16 %v1048, %v1044
        %v1230 = vpack.c.bf16 %v1050, %v1046
        %v1231 = vpack.c.bf16 %v1161, %v1157
        %v1232 = vpack.c.bf16 %v1163, %v1159
        %v1233 = vpack.c.bf16 %v1058, %v1054
        %v1234 = vpack.c.bf16 %v1060, %v1056
        %v1235 = vpack.c.bf16 %v1171, %v1167
        %v1236 = vpack.c.bf16 %v1173, %v1169
        %v1237 = vpack.c.bf16 %v1068, %v1064
        %v1238 = vpack.c.bf16 %v1070, %v1066
        %v1239 = vpack.c.bf16 %v1181, %v1177
        %v1240 = vpack.c.bf16 %v1183, %v1179
        %v1241 = vpack.c.bf16 %v1078, %v1074
        %v1242 = vpack.c.bf16 %v1080, %v1076
        %v1243 = vpack.c.bf16 %v1191, %v1187
        %v1244 = vpack.c.bf16 %v1193, %v1189
        %v1245 = vpack.c.bf16 %v1088, %v1084
        %v1246 = vpack.c.bf16 %v1090, %v1086
        %v1247 = vpack.c.bf16 %v1201, %v1197
        %v1248 = vpack.c.bf16 %v1203, %v1199
        %v1249 = vpack.c.bf16 %v1098, %v1094
        %v1250 = vpack.c.bf16 %v1100, %v1096
        %v1251 = vpack.c.bf16 %v1211, %v1207
        %v1252 = vpack.c.bf16 %v1213, %v1209
        %v1253 = vpack.c.bf16 %v1108, %v1104
        %v1254 = vpack.c.bf16 %v1110, %v1106
        %v1255 = vpack.c.bf16 %v1221, %v1217
        %v1256 = vpack.c.bf16 %v1223, %v1219
        %1257 = vmatprep.subr.bf16.mxu0 0
        %1258 = vmatpush1.bf16.xpose.msra.mxu0 %v380
        %1259 = vmatprep.subr.bf16.mxu0 0
        %1260 = vmatpush1.bf16.xpose.msra.mxu0 %v379
        %1261 = vmatprep.subr.bf16.mxu0 0
        %1262 = vmatpush1.bf16.xpose.msra.mxu0 %v378
        %1263 = vmatprep.subr.bf16.mxu0 0
        %1264 = vmatpush1.bf16.xpose.msra.mxu0 %v377
        %1265 = vmatprep.subr.bf16.mxu0 0
        %1266 = vmatpush1.bf16.xpose.msra.mxu0 %v376
        %1267 = vmatprep.subr.bf16.mxu0 0
        %1268 = vmatpush1.bf16.xpose.msra.mxu0 %v375
        %1269 = vmatprep.subr.bf16.mxu0 0
        %1270 = vmatpush1.bf16.xpose.msra.mxu0 %v374
        %1271 = vmatprep.subr.bf16.mxu0 0
        %1272 = vmatpush1.bf16.xpose.msra.mxu0 %v373
        %1273 = vmatprep.subr.bf16.mxu0 0
        %1274 = vmatpush2.bf16.xpose.msra.mxu0 0
        %1275 = vmatprep.subr.bf16.mxu0 0
        %1276 = vmatpush2.bf16.xpose.msra.mxu0 0
        %1277 = vmatprep.subr.bf16.mxu0 0
        %1278 = vmatpush2.bf16.xpose.msra.mxu0 0
        %1279 = vmatprep.subr.bf16.mxu0 0
        %1280 = vmatpush2.bf16.xpose.msra.mxu0 0
        %1281 = vmatprep.subr.bf16.mxu0 0
        %1282 = vmatpush2.bf16.xpose.msra.mxu0 0
        %1283 = vmatprep.subr.bf16.mxu0 0
        %1284 = vmatpush2.bf16.xpose.msra.mxu0 0
        %1285 = vmatprep.subr.bf16.mxu0 0
        %1286 = vmatpush2.bf16.xpose.msra.mxu0 0
        %1287 = vmatprep.subr.bf16.mxu0 0
        %1288 = vmatpush2.bf16.xpose.msra.mxu0 0
        %1289 = vmatprep.mubr.bf16.mxu0 0
        %1290 = vmatmul.mubr.bf16.gmra.mxu0 %v775
        %v1291 = vpop.f32.mrf.mxu0
        %v1292 = vadd.f32 %v292, %v1291
        %v1293 = vpop.f32.mrf.mxu0
        %v1294 = vpop.f32.mrf.mxu0
        %v1295 = vadd.f32 %v293, %v1294
        %v1296 = vpop.f32.mrf.mxu0
        %1297 = vmatprep.mubr.bf16.mxu0 0
        %1298 = vmatmul.mubr.bf16.gmra.mxu0 %v779
        %v1299 = vpop.f32.mrf.mxu0
        %v1300 = vadd.f32 %v294, %v1299
        %v1301 = vpop.f32.mrf.mxu0
        %v1302 = vpop.f32.mrf.mxu0
        %v1303 = vadd.f32 %v295, %v1302
        %v1304 = vpop.f32.mrf.mxu0
        %1305 = vmatprep.mubr.bf16.mxu0 0
        %1306 = vmatmul.mubr.bf16.gmra.mxu0 %v783
        %v1307 = vpop.f32.mrf.mxu0
        %v1308 = vadd.f32 %v296, %v1307
        %v1309 = vpop.f32.mrf.mxu0
        %v1310 = vpop.f32.mrf.mxu0
        %v1311 = vadd.f32 %v297, %v1310
        %v1312 = vpop.f32.mrf.mxu0
        %1313 = vmatprep.mubr.bf16.mxu0 0
        %1314 = vmatmul.mubr.bf16.gmra.mxu0 %v787
        %v1315 = vpop.f32.mrf.mxu0
        %v1316 = vadd.f32 %v298, %v1315
        %v1317 = vpop.f32.mrf.mxu0
        %v1318 = vpop.f32.mrf.mxu0
        %v1319 = vadd.f32 %v299, %v1318
        %v1320 = vpop.f32.mrf.mxu0
        %1321 = vmatprep.mubr.bf16.mxu0 0
        %1322 = vmatmul.mubr.bf16.gmra.mxu0 %v791
        %v1323 = vpop.f32.mrf.mxu0
        %v1324 = vadd.f32 %v300, %v1323
        %v1325 = vpop.f32.mrf.mxu0
        %v1326 = vpop.f32.mrf.mxu0
        %v1327 = vadd.f32 %v301, %v1326
        %v1328 = vpop.f32.mrf.mxu0
        %1329 = vmatprep.mubr.bf16.mxu0 0
        %1330 = vmatmul.mubr.bf16.gmra.mxu0 %v795
        %v1331 = vpop.f32.mrf.mxu0
        %v1332 = vadd.f32 %v302, %v1331
        %v1333 = vpop.f32.mrf.mxu0
        %v1334 = vpop.f32.mrf.mxu0
        %v1335 = vadd.f32 %v303, %v1334
        %v1336 = vpop.f32.mrf.mxu0
        %1337 = vmatprep.mubr.bf16.mxu0 0
        %1338 = vmatmul.mubr.bf16.gmra.mxu0 %v799
        %v1339 = vpop.f32.mrf.mxu0
        %v1340 = vadd.f32 %v304, %v1339
        %v1341 = vpop.f32.mrf.mxu0
        %v1342 = vpop.f32.mrf.mxu0
        %v1343 = vadd.f32 %v305, %v1342
        %v1344 = vpop.f32.mrf.mxu0
        %1345 = vmatprep.mubr.bf16.mxu0 0
        %1346 = vmatmul.mubr.bf16.gmra.mxu0 %v803
        %v1347 = vpop.f32.mrf.mxu0
        %v1348 = vadd.f32 %v306, %v1347
        %v1349 = vpop.f32.mrf.mxu0
        %v1350 = vpop.f32.mrf.mxu0
        %v1351 = vadd.f32 %v307, %v1350
        %v1352 = vpop.f32.mrf.mxu0
        %1353 = vdwg.mxu0
        %1354 = vmax.xlane.f32.xlu0 %v1292
        %v1355 = vpop.xlane.xlu0 %1354
        %1356 = vmax.xlane.f32.xlu0 %v1295
        %v1357 = vpop.xlane.xlu0 %1356
        %1358 = vmax.xlane.f32.xlu0 %v1300
        %v1359 = vpop.xlane.xlu0 %1358
        %1360 = vmax.xlane.f32.xlu0 %v1303
        %v1361 = vpop.xlane.xlu0 %1360
        %1362 = vmax.xlane.f32.xlu0 %v1308
        %v1363 = vpop.xlane.xlu0 %1362
        %1364 = vmax.xlane.f32.xlu0 %v1311
        %v1365 = vpop.xlane.xlu0 %1364
        %1366 = vmax.xlane.f32.xlu0 %v1316
        %v1367 = vpop.xlane.xlu0 %1366
        %1368 = vmax.xlane.f32.xlu0 %v1319
        %v1369 = vpop.xlane.xlu0 %1368
        %1370 = vmax.xlane.f32.xlu0 %v1324
        %v1371 = vpop.xlane.xlu0 %1370
        %1372 = vmax.xlane.f32.xlu0 %v1327
        %v1373 = vpop.xlane.xlu0 %1372
        %1374 = vmax.xlane.f32.xlu0 %v1332
        %v1375 = vpop.xlane.xlu0 %1374
        %1376 = vmax.xlane.f32.xlu0 %v1335
        %v1377 = vpop.xlane.xlu0 %1376
        %1378 = vmax.xlane.f32.xlu0 %v1340
        %v1379 = vpop.xlane.xlu0 %1378
        %1380 = vmax.xlane.f32.xlu0 %v1343
        %v1381 = vpop.xlane.xlu0 %1380
        %1382 = vmax.xlane.f32.xlu0 %v1348
        %v1383 = vpop.xlane.xlu0 %1382
        %1384 = vmax.xlane.f32.xlu0 %v1351
        %v1385 = vpop.xlane.xlu0 %1384
        %v1386 = vsub.f32 %v1292, %v1355
        %v1387 = vsub.f32 %v1295, %v1357
        %v1388 = vsub.f32 %v1300, %v1359
        %v1389 = vsub.f32 %v1303, %v1361
        %v1390 = vsub.f32 %v1308, %v1363
        %v1391 = vsub.f32 %v1311, %v1365
        %v1392 = vsub.f32 %v1316, %v1367
        %v1393 = vsub.f32 %v1319, %v1369
        %v1394 = vsub.f32 %v1324, %v1371
        %v1395 = vsub.f32 %v1327, %v1373
        %v1396 = vsub.f32 %v1332, %v1375
        %v1397 = vsub.f32 %v1335, %v1377
        %v1398 = vsub.f32 %v1340, %v1379
        %v1399 = vsub.f32 %v1343, %v1381
        %v1400 = vsub.f32 %v1348, %v1383
        %v1401 = vsub.f32 %v1351, %v1385
        %v1402 = vmul.f32 %v1386, 1.442695
        %v1403 = vpow.pop %v1402
        %v1404 = vmul.f32 %v1387, 1.442695
        %v1405 = vpow.pop %v1404
        %v1406 = vmul.f32 %v1388, 1.442695
        %v1407 = vpow.pop %v1406
        %v1408 = vmul.f32 %v1389, 1.442695
        %v1409 = vpow.pop %v1408
        %v1410 = vmul.f32 %v1390, 1.442695
        %v1411 = vpow.pop %v1410
        %v1412 = vmul.f32 %v1391, 1.442695
        %v1413 = vpow.pop %v1412
        %v1414 = vmul.f32 %v1392, 1.442695
        %v1415 = vpow.pop %v1414
        %v1416 = vmul.f32 %v1393, 1.442695
        %v1417 = vpow.pop %v1416
        %v1418 = vmul.f32 %v1394, 1.442695
        %v1419 = vpow.pop %v1418
        %v1420 = vmul.f32 %v1395, 1.442695
        %v1421 = vpow.pop %v1420
        %v1422 = vmul.f32 %v1396, 1.442695
        %v1423 = vpow.pop %v1422
        %v1424 = vmul.f32 %v1397, 1.442695
        %v1425 = vpow.pop %v1424
        %v1426 = vmul.f32 %v1398, 1.442695
        %v1427 = vpow.pop %v1426
        %v1428 = vmul.f32 %v1399, 1.442695
        %v1429 = vpow.pop %v1428
        %v1430 = vmul.f32 %v1400, 1.442695
        %v1431 = vpow.pop %v1430
        %v1432 = vmul.f32 %v1401, 1.442695
        %v1433 = vpow.pop %v1432
        %1434 = vadd.xlane.f32.xlu0 %v1403
        %v1435 = vpop.xlane.xlu0 %1434
        %1436 = vadd.xlane.f32.xlu0 %v1405
        %v1437 = vpop.xlane.xlu0 %1436
        %1438 = vadd.xlane.f32.xlu0 %v1407
        %v1439 = vpop.xlane.xlu0 %1438
        %1440 = vadd.xlane.f32.xlu0 %v1409
        %v1441 = vpop.xlane.xlu0 %1440
        %1442 = vadd.xlane.f32.xlu0 %v1411
        %v1443 = vpop.xlane.xlu0 %1442
        %1444 = vadd.xlane.f32.xlu0 %v1413
        %v1445 = vpop.xlane.xlu0 %1444
        %1446 = vadd.xlane.f32.xlu0 %v1415
        %v1447 = vpop.xlane.xlu0 %1446
        %1448 = vadd.xlane.f32.xlu0 %v1417
        %v1449 = vpop.xlane.xlu0 %1448
        %1450 = vadd.xlane.f32.xlu0 %v1419
        %v1451 = vpop.xlane.xlu0 %1450
        %1452 = vadd.xlane.f32.xlu0 %v1421
        %v1453 = vpop.xlane.xlu0 %1452
        %1454 = vadd.xlane.f32.xlu0 %v1423
        %v1455 = vpop.xlane.xlu0 %1454
        %1456 = vadd.xlane.f32.xlu0 %v1425
        %v1457 = vpop.xlane.xlu0 %1456
        %1458 = vadd.xlane.f32.xlu0 %v1427
        %v1459 = vpop.xlane.xlu0 %1458
        %1460 = vadd.xlane.f32.xlu0 %v1429
        %v1461 = vpop.xlane.xlu0 %1460
        %1462 = vadd.xlane.f32.xlu0 %v1431
        %v1463 = vpop.xlane.xlu0 %1462
        %1464 = vadd.xlane.f32.xlu0 %v1433
        %v1465 = vpop.xlane.xlu0 %1464
        %v1466 = vrcp.pop %v1435
        %v1467 = vrcp.pop %v1437
        %v1468 = vrcp.pop %v1439
        %v1469 = vrcp.pop %v1441
        %v1470 = vrcp.pop %v1443
        %v1471 = vrcp.pop %v1445
        %v1472 = vrcp.pop %v1447
        %v1473 = vrcp.pop %v1449
        %v1474 = vrcp.pop %v1451
        %v1475 = vrcp.pop %v1453
        %v1476 = vrcp.pop %v1455
        %v1477 = vrcp.pop %v1457
        %v1478 = vrcp.pop %v1459
        %v1479 = vrcp.pop %v1461
        %v1480 = vrcp.pop %v1463
        %v1481 = vrcp.pop %v1465
        %v1482 = vmul.f32 %v1403, %v1466
        %v1483 = vmul.f32 %v1405, %v1467
        %v1484 = vmul.f32 %v1407, %v1468
        %v1485 = vmul.f32 %v1409, %v1469
        %v1486 = vmul.f32 %v1411, %v1470
        %v1487 = vmul.f32 %v1413, %v1471
        %v1488 = vmul.f32 %v1415, %v1472
        %v1489 = vmul.f32 %v1417, %v1473
        %v1490 = vmul.f32 %v1419, %v1474
        %v1491 = vmul.f32 %v1421, %v1475
        %v1492 = vmul.f32 %v1423, %v1476
        %v1493 = vmul.f32 %v1425, %v1477
        %v1494 = vmul.f32 %v1427, %v1478
        %v1495 = vmul.f32 %v1429, %v1479
        %v1496 = vmul.f32 %v1431, %v1480
        %v1497 = vmul.f32 %v1433, %v1481
        %v1498 = vpack.c.bf16 %v1483, %v1482
        %v1499 = vpack.c.bf16 %v1485, %v1484
        %v1500 = vpack.c.bf16 %v1487, %v1486
        %v1501 = vpack.c.bf16 %v1489, %v1488
        %v1502 = vpack.c.bf16 %v1491, %v1490
        %v1503 = vpack.c.bf16 %v1493, %v1492
        %v1504 = vpack.c.bf16 %v1495, %v1494
        %v1505 = vpack.c.bf16 %v1497, %v1496
        %1506 = vmatprep.subr.bf16.mxu0 0
        %1507 = vmatpush1.bf16.xpose.msra.mxu0 %v380
        %1508 = vmatprep.subr.bf16.mxu0 0
        %1509 = vmatpush1.bf16.xpose.msra.mxu0 %v379
        %1510 = vmatprep.subr.bf16.mxu0 0
        %1511 = vmatpush1.bf16.xpose.msra.mxu0 %v378
        %1512 = vmatprep.subr.bf16.mxu0 0
        %1513 = vmatpush1.bf16.xpose.msra.mxu0 %v377
        %1514 = vmatprep.subr.bf16.mxu0 0
        %1515 = vmatpush1.bf16.xpose.msra.mxu0 %v376
        %1516 = vmatprep.subr.bf16.mxu0 0
        %1517 = vmatpush1.bf16.xpose.msra.mxu0 %v375
        %1518 = vmatprep.subr.bf16.mxu0 0
        %1519 = vmatpush1.bf16.xpose.msra.mxu0 %v374
        %1520 = vmatprep.subr.bf16.mxu0 0
        %1521 = vmatpush1.bf16.xpose.msra.mxu0 %v373
        %1522 = vmatprep.subr.bf16.mxu0 0
        %1523 = vmatpush2.bf16.xpose.msra.mxu0 0
        %1524 = vmatprep.subr.bf16.mxu0 0
        %1525 = vmatpush2.bf16.xpose.msra.mxu0 0
        %1526 = vmatprep.subr.bf16.mxu0 0
        %1527 = vmatpush2.bf16.xpose.msra.mxu0 0
        %1528 = vmatprep.subr.bf16.mxu0 0
        %1529 = vmatpush2.bf16.xpose.msra.mxu0 0
        %1530 = vmatprep.subr.bf16.mxu0 0
        %1531 = vmatpush2.bf16.xpose.msra.mxu0 0
        %1532 = vmatprep.subr.bf16.mxu0 0
        %1533 = vmatpush2.bf16.xpose.msra.mxu0 0
        %1534 = vmatprep.subr.bf16.mxu0 0
        %1535 = vmatpush2.bf16.xpose.msra.mxu0 0
        %1536 = vmatprep.subr.bf16.mxu0 0
        %1537 = vmatpush2.bf16.xpose.msra.mxu0 0
        %1538 = vmatprep.mubr.bf16.mxu0 0
        %1539 = vmatmul.mubr.bf16.gmra.mxu0 %v776
        %v1540 = vpop.f32.mrf.mxu0
        %v1541 = vadd.f32 %v292, %v1540
        %v1542 = vpop.f32.mrf.mxu0
        %v1543 = vpop.f32.mrf.mxu0
        %v1544 = vadd.f32 %v293, %v1543
        %v1545 = vpop.f32.mrf.mxu0
        %1546 = vmatprep.mubr.bf16.mxu0 0
        %1547 = vmatmul.mubr.bf16.gmra.mxu0 %v780
        %v1548 = vpop.f32.mrf.mxu0
        %v1549 = vadd.f32 %v294, %v1548
        %v1550 = vpop.f32.mrf.mxu0
        %v1551 = vpop.f32.mrf.mxu0
        %v1552 = vadd.f32 %v295, %v1551
        %v1553 = vpop.f32.mrf.mxu0
        %1554 = vmatprep.mubr.bf16.mxu0 0
        %1555 = vmatmul.mubr.bf16.gmra.mxu0 %v784
        %v1556 = vpop.f32.mrf.mxu0
        %v1557 = vadd.f32 %v296, %v1556
        %v1558 = vpop.f32.mrf.mxu0
        %v1559 = vpop.f32.mrf.mxu0
        %v1560 = vadd.f32 %v297, %v1559
        %v1561 = vpop.f32.mrf.mxu0
        %1562 = vmatprep.mubr.bf16.mxu0 0
        %1563 = vmatmul.mubr.bf16.gmra.mxu0 %v788
        %v1564 = vpop.f32.mrf.mxu0
        %v1565 = vadd.f32 %v298, %v1564
        %v1566 = vpop.f32.mrf.mxu0
        %v1567 = vpop.f32.mrf.mxu0
        %v1568 = vadd.f32 %v299, %v1567
        %v1569 = vpop.f32.mrf.mxu0
        %1570 = vmatprep.mubr.bf16.mxu0 0
        %1571 = vmatmul.mubr.bf16.gmra.mxu0 %v792
        %v1572 = vpop.f32.mrf.mxu0
        %v1573 = vadd.f32 %v300, %v1572
        %v1574 = vpop.f32.mrf.mxu0
        %v1575 = vpop.f32.mrf.mxu0
        %v1576 = vadd.f32 %v301, %v1575
        %v1577 = vpop.f32.mrf.mxu0
        %1578 = vmatprep.mubr.bf16.mxu0 0
        %1579 = vmatmul.mubr.bf16.gmra.mxu0 %v796
        %v1580 = vpop.f32.mrf.mxu0
        %v1581 = vadd.f32 %v302, %v1580
        %v1582 = vpop.f32.mrf.mxu0
        %v1583 = vpop.f32.mrf.mxu0
        %v1584 = vadd.f32 %v303, %v1583
        %v1585 = vpop.f32.mrf.mxu0
        %1586 = vmatprep.mubr.bf16.mxu0 0
        %1587 = vmatmul.mubr.bf16.gmra.mxu0 %v800
        %v1588 = vpop.f32.mrf.mxu0
        %v1589 = vadd.f32 %v304, %v1588
        %v1590 = vpop.f32.mrf.mxu0
        %v1591 = vpop.f32.mrf.mxu0
        %v1592 = vadd.f32 %v305, %v1591
        %v1593 = vpop.f32.mrf.mxu0
        %1594 = vmatprep.mubr.bf16.mxu0 0
        %1595 = vmatmul.mubr.bf16.gmra.mxu0 %v804
        %v1596 = vpop.f32.mrf.mxu0
        %v1597 = vadd.f32 %v306, %v1596
        %v1598 = vpop.f32.mrf.mxu0
        %v1599 = vpop.f32.mrf.mxu0
        %v1600 = vadd.f32 %v307, %v1599
        %v1601 = vpop.f32.mrf.mxu0
        %1602 = vdwg.mxu0
        %1603 = vmax.xlane.f32.xlu0 %v1541
        %v1604 = vpop.xlane.xlu0 %1603
        %1605 = vmax.xlane.f32.xlu0 %v1544
        %v1606 = vpop.xlane.xlu0 %1605
        %1607 = vmax.xlane.f32.xlu0 %v1549
        %v1608 = vpop.xlane.xlu0 %1607
        %1609 = vmax.xlane.f32.xlu0 %v1552
        %v1610 = vpop.xlane.xlu0 %1609
        %1611 = vmax.xlane.f32.xlu0 %v1557
        %v1612 = vpop.xlane.xlu0 %1611
        %1613 = vmax.xlane.f32.xlu0 %v1560
        %v1614 = vpop.xlane.xlu0 %1613
        %1615 = vmax.xlane.f32.xlu0 %v1565
        %v1616 = vpop.xlane.xlu0 %1615
        %1617 = vmax.xlane.f32.xlu0 %v1568
        %v1618 = vpop.xlane.xlu0 %1617
        %1619 = vmax.xlane.f32.xlu0 %v1573
        %v1620 = vpop.xlane.xlu0 %1619
        %1621 = vmax.xlane.f32.xlu0 %v1576
        %v1622 = vpop.xlane.xlu0 %1621
        %1623 = vmax.xlane.f32.xlu0 %v1581
        %v1624 = vpop.xlane.xlu0 %1623
        %1625 = vmax.xlane.f32.xlu0 %v1584
        %v1626 = vpop.xlane.xlu0 %1625
        %1627 = vmax.xlane.f32.xlu0 %v1589
        %v1628 = vpop.xlane.xlu0 %1627
        %1629 = vmax.xlane.f32.xlu0 %v1592
        %v1630 = vpop.xlane.xlu0 %1629
        %1631 = vmax.xlane.f32.xlu0 %v1597
        %v1632 = vpop.xlane.xlu0 %1631
        %1633 = vmax.xlane.f32.xlu0 %v1600
        %v1634 = vpop.xlane.xlu0 %1633
        %v1635 = vsub.f32 %v1541, %v1604
        %v1636 = vsub.f32 %v1544, %v1606
        %v1637 = vsub.f32 %v1549, %v1608
        %v1638 = vsub.f32 %v1552, %v1610
        %v1639 = vsub.f32 %v1557, %v1612
        %v1640 = vsub.f32 %v1560, %v1614
        %v1641 = vsub.f32 %v1565, %v1616
        %v1642 = vsub.f32 %v1568, %v1618
        %v1643 = vsub.f32 %v1573, %v1620
        %v1644 = vsub.f32 %v1576, %v1622
        %v1645 = vsub.f32 %v1581, %v1624
        %v1646 = vsub.f32 %v1584, %v1626
        %v1647 = vsub.f32 %v1589, %v1628
        %v1648 = vsub.f32 %v1592, %v1630
        %v1649 = vsub.f32 %v1597, %v1632
        %v1650 = vsub.f32 %v1600, %v1634
        %v1651 = vmul.f32 %v1635, 1.442695
        %v1652 = vpow.pop %v1651
        %v1653 = vmul.f32 %v1636, 1.442695
        %v1654 = vpow.pop %v1653
        %v1655 = vmul.f32 %v1637, 1.442695
        %v1656 = vpow.pop %v1655
        %v1657 = vmul.f32 %v1638, 1.442695
        %v1658 = vpow.pop %v1657
        %v1659 = vmul.f32 %v1639, 1.442695
        %v1660 = vpow.pop %v1659
        %v1661 = vmul.f32 %v1640, 1.442695
        %v1662 = vpow.pop %v1661
        %v1663 = vmul.f32 %v1641, 1.442695
        %v1664 = vpow.pop %v1663
        %v1665 = vmul.f32 %v1642, 1.442695
        %v1666 = vpow.pop %v1665
        %v1667 = vmul.f32 %v1643, 1.442695
        %v1668 = vpow.pop %v1667
        %v1669 = vmul.f32 %v1644, 1.442695
        %v1670 = vpow.pop %v1669
        %v1671 = vmul.f32 %v1645, 1.442695
        %v1672 = vpow.pop %v1671
        %v1673 = vmul.f32 %v1646, 1.442695
        %v1674 = vpow.pop %v1673
        %v1675 = vmul.f32 %v1647, 1.442695
        %v1676 = vpow.pop %v1675
        %v1677 = vmul.f32 %v1648, 1.442695
        %v1678 = vpow.pop %v1677
        %v1679 = vmul.f32 %v1649, 1.442695
        %v1680 = vpow.pop %v1679
        %v1681 = vmul.f32 %v1650, 1.442695
        %v1682 = vpow.pop %v1681
        %1683 = vadd.xlane.f32.xlu0 %v1652
        %v1684 = vpop.xlane.xlu0 %1683
        %1685 = vadd.xlane.f32.xlu0 %v1654
        %v1686 = vpop.xlane.xlu0 %1685
        %1687 = vadd.xlane.f32.xlu0 %v1656
        %v1688 = vpop.xlane.xlu0 %1687
        %1689 = vadd.xlane.f32.xlu0 %v1658
        %v1690 = vpop.xlane.xlu0 %1689
        %1691 = vadd.xlane.f32.xlu0 %v1660
        %v1692 = vpop.xlane.xlu0 %1691
        %1693 = vadd.xlane.f32.xlu0 %v1662
        %v1694 = vpop.xlane.xlu0 %1693
        %1695 = vadd.xlane.f32.xlu0 %v1664
        %v1696 = vpop.xlane.xlu0 %1695
        %1697 = vadd.xlane.f32.xlu0 %v1666
        %v1698 = vpop.xlane.xlu0 %1697
        %1699 = vadd.xlane.f32.xlu0 %v1668
        %v1700 = vpop.xlane.xlu0 %1699
        %1701 = vadd.xlane.f32.xlu0 %v1670
        %v1702 = vpop.xlane.xlu0 %1701
        %1703 = vadd.xlane.f32.xlu0 %v1672
        %v1704 = vpop.xlane.xlu0 %1703
        %1705 = vadd.xlane.f32.xlu0 %v1674
        %v1706 = vpop.xlane.xlu0 %1705
        %1707 = vadd.xlane.f32.xlu0 %v1676
        %v1708 = vpop.xlane.xlu0 %1707
        %1709 = vadd.xlane.f32.xlu0 %v1678
        %v1710 = vpop.xlane.xlu0 %1709
        %1711 = vadd.xlane.f32.xlu0 %v1680
        %v1712 = vpop.xlane.xlu0 %1711
        %1713 = vadd.xlane.f32.xlu0 %v1682
        %v1714 = vpop.xlane.xlu0 %1713
        %v1715 = vrcp.pop %v1684
        %v1716 = vrcp.pop %v1686
        %v1717 = vrcp.pop %v1688
        %v1718 = vrcp.pop %v1690
        %v1719 = vrcp.pop %v1692
        %v1720 = vrcp.pop %v1694
        %v1721 = vrcp.pop %v1696
        %v1722 = vrcp.pop %v1698
        %v1723 = vrcp.pop %v1700
        %v1724 = vrcp.pop %v1702
        %v1725 = vrcp.pop %v1704
        %v1726 = vrcp.pop %v1706
        %v1727 = vrcp.pop %v1708
        %v1728 = vrcp.pop %v1710
        %v1729 = vrcp.pop %v1712
        %v1730 = vrcp.pop %v1714
        %v1731 = vmul.f32 %v1652, %v1715
        %v1732 = vmul.f32 %v1654, %v1716
        %v1733 = vmul.f32 %v1656, %v1717
        %v1734 = vmul.f32 %v1658, %v1718
        %v1735 = vmul.f32 %v1660, %v1719
        %v1736 = vmul.f32 %v1662, %v1720
        %v1737 = vmul.f32 %v1664, %v1721
        %v1738 = vmul.f32 %v1666, %v1722
        %v1739 = vmul.f32 %v1668, %v1723
        %v1740 = vmul.f32 %v1670, %v1724
        %v1741 = vmul.f32 %v1672, %v1725
        %v1742 = vmul.f32 %v1674, %v1726
        %v1743 = vmul.f32 %v1676, %v1727
        %v1744 = vmul.f32 %v1678, %v1728
        %v1745 = vmul.f32 %v1680, %v1729
        %v1746 = vmul.f32 %v1682, %v1730
        %v1747 = vpack.c.bf16 %v1732, %v1731
        %v1748 = vpack.c.bf16 %v1734, %v1733
        %v1749 = vpack.c.bf16 %v1736, %v1735
        %v1750 = vpack.c.bf16 %v1738, %v1737
        %v1751 = vpack.c.bf16 %v1740, %v1739
        %v1752 = vpack.c.bf16 %v1742, %v1741
        %v1753 = vpack.c.bf16 %v1744, %v1743
        %v1754 = vpack.c.bf16 %v1746, %v1745
        %1755 = vmatprep.subr.bf16.mxu0 0
        %1756 = vmatpush1.bf16.msra.mxu0 %v1254
        %1757 = vmatprep.subr.bf16.mxu0 0
        %1758 = vmatpush1.bf16.msra.mxu0 %v1250
        %1759 = vmatprep.subr.bf16.mxu0 0
        %1760 = vmatpush1.bf16.msra.mxu0 %v1246
        %1761 = vmatprep.subr.bf16.mxu0 0
        %1762 = vmatpush1.bf16.msra.mxu0 %v1242
        %1763 = vmatprep.subr.bf16.mxu0 0
        %1764 = vmatpush1.bf16.msra.mxu0 %v1238
        %1765 = vmatprep.subr.bf16.mxu0 0
        %1766 = vmatpush1.bf16.msra.mxu0 %v1234
        %1767 = vmatprep.subr.bf16.mxu0 0
        %1768 = vmatpush1.bf16.msra.mxu0 %v1230
        %1769 = vmatprep.subr.bf16.mxu0 0
        %1770 = vmatpush1.bf16.msra.mxu0 %v1226
        %1771 = vmatprep.subr.bf16.mxu0 0
        %1772 = vmatpush2.bf16.msra.mxu0 0
        %1773 = vmatprep.subr.bf16.mxu0 0
        %1774 = vmatpush2.bf16.msra.mxu0 0
        %1775 = vmatprep.subr.bf16.mxu0 0
        %1776 = vmatpush2.bf16.msra.mxu0 0
        %1777 = vmatprep.subr.bf16.mxu0 0
        %1778 = vmatpush2.bf16.msra.mxu0 0
        %1779 = vmatprep.subr.bf16.mxu0 0
        %1780 = vmatpush2.bf16.msra.mxu0 0
        %1781 = vmatprep.subr.bf16.mxu0 0
        %1782 = vmatpush2.bf16.msra.mxu0 0
        %1783 = vmatprep.subr.bf16.mxu0 0
        %1784 = vmatpush2.bf16.msra.mxu0 0
        %1785 = vmatprep.subr.bf16.mxu0 0
        %1786 = vmatpush2.bf16.msra.mxu0 0
        %1787 = vmatprep.mubr.bf16.mxu0 0
        %1788 = vmatmul.mubr.bf16.gmra.mxu0 %v1747
        %v1789 = vpop.f32.mrf.mxu0
        %v1790 = vadd.f32 0.0, %v1789
        %v1791 = vpop.f32.mrf.mxu0
        %v1792 = vpop.f32.mrf.mxu0
        %v1793 = vadd.f32 0.0, %v1792
        %v1794 = vpop.f32.mrf.mxu0
        %1795 = vmatprep.mubr.bf16.mxu0 0
        %1796 = vmatmul.mubr.bf16.gmra.mxu0 %v1748
        %v1797 = vpop.f32.mrf.mxu0
        %v1798 = vadd.f32 0.0, %v1797
        %v1799 = vpop.f32.mrf.mxu0
        %v1800 = vpop.f32.mrf.mxu0
        %v1801 = vadd.f32 0.0, %v1800
        %v1802 = vpop.f32.mrf.mxu0
        %1803 = vmatprep.mubr.bf16.mxu0 0
        %1804 = vmatmul.mubr.bf16.gmra.mxu0 %v1749
        %v1805 = vpop.f32.mrf.mxu0
        %v1806 = vadd.f32 0.0, %v1805
        %v1807 = vpop.f32.mrf.mxu0
        %v1808 = vpop.f32.mrf.mxu0
        %v1809 = vadd.f32 0.0, %v1808
        %v1810 = vpop.f32.mrf.mxu0
        %1811 = vmatprep.mubr.bf16.mxu0 0
        %1812 = vmatmul.mubr.bf16.gmra.mxu0 %v1750
        %v1813 = vpop.f32.mrf.mxu0
        %v1814 = vadd.f32 0.0, %v1813
        %v1815 = vpop.f32.mrf.mxu0
        %v1816 = vpop.f32.mrf.mxu0
        %v1817 = vadd.f32 0.0, %v1816
        %v1818 = vpop.f32.mrf.mxu0
        %1819 = vmatprep.mubr.bf16.mxu0 0
        %1820 = vmatmul.mubr.bf16.gmra.mxu0 %v1751
        %v1821 = vpop.f32.mrf.mxu0
        %v1822 = vadd.f32 0.0, %v1821
        %v1823 = vpop.f32.mrf.mxu0
        %v1824 = vpop.f32.mrf.mxu0
        %v1825 = vadd.f32 0.0, %v1824
        %v1826 = vpop.f32.mrf.mxu0
        %1827 = vmatprep.mubr.bf16.mxu0 0
        %1828 = vmatmul.mubr.bf16.gmra.mxu0 %v1752
        %v1829 = vpop.f32.mrf.mxu0
        %v1830 = vadd.f32 0.0, %v1829
        %v1831 = vpop.f32.mrf.mxu0
        %v1832 = vpop.f32.mrf.mxu0
        %v1833 = vadd.f32 0.0, %v1832
        %v1834 = vpop.f32.mrf.mxu0
        %1835 = vmatprep.mubr.bf16.mxu0 0
        %1836 = vmatmul.mubr.bf16.gmra.mxu0 %v1753
        %v1837 = vpop.f32.mrf.mxu0
        %v1838 = vadd.f32 0.0, %v1837
        %v1839 = vpop.f32.mrf.mxu0
        %v1840 = vpop.f32.mrf.mxu0
        %v1841 = vadd.f32 0.0, %v1840
        %v1842 = vpop.f32.mrf.mxu0
        %1843 = vmatprep.mubr.bf16.mxu0 0
        %1844 = vmatmul.mubr.bf16.gmra.mxu0 %v1754
        %v1845 = vpop.f32.mrf.mxu0
        %v1846 = vadd.f32 0.0, %v1845
        %v1847 = vpop.f32.mrf.mxu0
        %v1848 = vpop.f32.mrf.mxu0
        %v1849 = vadd.f32 0.0, %v1848
        %v1850 = vpop.f32.mrf.mxu0
        %1851 = vdwg.mxu0
        %1852 = vmatprep.subr.bf16.mxu0 0
        %1853 = vmatpush1.bf16.msra.mxu0 %v1253
        %1854 = vmatprep.subr.bf16.mxu0 0
        %1855 = vmatpush1.bf16.msra.mxu0 %v1249
        %1856 = vmatprep.subr.bf16.mxu0 0
        %1857 = vmatpush1.bf16.msra.mxu0 %v1245
        %1858 = vmatprep.subr.bf16.mxu0 0
        %1859 = vmatpush1.bf16.msra.mxu0 %v1241
        %1860 = vmatprep.subr.bf16.mxu0 0
        %1861 = vmatpush1.bf16.msra.mxu0 %v1237
        %1862 = vmatprep.subr.bf16.mxu0 0
        %1863 = vmatpush1.bf16.msra.mxu0 %v1233
        %1864 = vmatprep.subr.bf16.mxu0 0
        %1865 = vmatpush1.bf16.msra.mxu0 %v1229
        %1866 = vmatprep.subr.bf16.mxu0 0
        %1867 = vmatpush1.bf16.msra.mxu0 %v1225
        %1868 = vmatprep.subr.bf16.mxu0 0
        %1869 = vmatpush2.bf16.msra.mxu0 0
        %1870 = vmatprep.subr.bf16.mxu0 0
        %1871 = vmatpush2.bf16.msra.mxu0 0
        %1872 = vmatprep.subr.bf16.mxu0 0
        %1873 = vmatpush2.bf16.msra.mxu0 0
        %1874 = vmatprep.subr.bf16.mxu0 0
        %1875 = vmatpush2.bf16.msra.mxu0 0
        %1876 = vmatprep.subr.bf16.mxu0 0
        %1877 = vmatpush2.bf16.msra.mxu0 0
        %1878 = vmatprep.subr.bf16.mxu0 0
        %1879 = vmatpush2.bf16.msra.mxu0 0
        %1880 = vmatprep.subr.bf16.mxu0 0
        %1881 = vmatpush2.bf16.msra.mxu0 0
        %1882 = vmatprep.subr.bf16.mxu0 0
        %1883 = vmatpush2.bf16.msra.mxu0 0
        %1884 = vmatprep.mubr.bf16.mxu0 0
        %1885 = vmatmul.mubr.bf16.gmra.mxu0 %v1498
        %v1886 = vpop.f32.mrf.mxu0
        %v1887 = vadd.f32 %v1790, %v1886
        %v1888 = vpop.f32.mrf.mxu0
        %v1889 = vpop.f32.mrf.mxu0
        %v1890 = vadd.f32 %v1793, %v1889
        %v1891 = vpop.f32.mrf.mxu0
        %1892 = vmatprep.mubr.bf16.mxu0 0
        %1893 = vmatmul.mubr.bf16.gmra.mxu0 %v1499
        %v1894 = vpop.f32.mrf.mxu0
        %v1895 = vadd.f32 %v1798, %v1894
        %v1896 = vpop.f32.mrf.mxu0
        %v1897 = vpop.f32.mrf.mxu0
        %v1898 = vadd.f32 %v1801, %v1897
        %v1899 = vpop.f32.mrf.mxu0
        %1900 = vmatprep.mubr.bf16.mxu0 0
        %1901 = vmatmul.mubr.bf16.gmra.mxu0 %v1500
        %v1902 = vpop.f32.mrf.mxu0
        %v1903 = vadd.f32 %v1806, %v1902
        %v1904 = vpop.f32.mrf.mxu0
        %v1905 = vpop.f32.mrf.mxu0
        %v1906 = vadd.f32 %v1809, %v1905
        %v1907 = vpop.f32.mrf.mxu0
        %1908 = vmatprep.mubr.bf16.mxu0 0
        %1909 = vmatmul.mubr.bf16.gmra.mxu0 %v1501
        %v1910 = vpop.f32.mrf.mxu0
        %v1911 = vadd.f32 %v1814, %v1910
        %v1912 = vpop.f32.mrf.mxu0
        %v1913 = vpop.f32.mrf.mxu0
        %v1914 = vadd.f32 %v1817, %v1913
        %v1915 = vpop.f32.mrf.mxu0
        %1916 = vmatprep.mubr.bf16.mxu0 0
        %1917 = vmatmul.mubr.bf16.gmra.mxu0 %v1502
        %v1918 = vpop.f32.mrf.mxu0
        %v1919 = vadd.f32 %v1822, %v1918
        %v1920 = vpop.f32.mrf.mxu0
        %v1921 = vpop.f32.mrf.mxu0
        %v1922 = vadd.f32 %v1825, %v1921
        %v1923 = vpop.f32.mrf.mxu0
        %1924 = vmatprep.mubr.bf16.mxu0 0
        %1925 = vmatmul.mubr.bf16.gmra.mxu0 %v1503
        %v1926 = vpop.f32.mrf.mxu0
        %v1927 = vadd.f32 %v1830, %v1926
        %v1928 = vpop.f32.mrf.mxu0
        %v1929 = vpop.f32.mrf.mxu0
        %v1930 = vadd.f32 %v1833, %v1929
        %v1931 = vpop.f32.mrf.mxu0
        %1932 = vmatprep.mubr.bf16.mxu0 0
        %1933 = vmatmul.mubr.bf16.gmra.mxu0 %v1504
        %v1934 = vpop.f32.mrf.mxu0
        %v1935 = vadd.f32 %v1838, %v1934
        %v1936 = vpop.f32.mrf.mxu0
        %v1937 = vpop.f32.mrf.mxu0
        %v1938 = vadd.f32 %v1841, %v1937
        %v1939 = vpop.f32.mrf.mxu0
        %1940 = vmatprep.mubr.bf16.mxu0 0
        %1941 = vmatmul.mubr.bf16.gmra.mxu0 %v1505
        %v1942 = vpop.f32.mrf.mxu0
        %v1943 = vadd.f32 %v1846, %v1942
        %v1944 = vpop.f32.mrf.mxu0
        %v1945 = vpop.f32.mrf.mxu0
        %v1946 = vadd.f32 %v1849, %v1945
        %v1947 = vpop.f32.mrf.mxu0
        %1948 = vdwg.mxu0
        %1949 = vmatprep.subr.bf16.mxu0 0
        %1950 = vmatpush1.bf16.xpose.msra.mxu0 %v380
        %1951 = vmatprep.subr.bf16.mxu0 0
        %1952 = vmatpush1.bf16.xpose.msra.mxu0 %v379
        %1953 = vmatprep.subr.bf16.mxu0 0
        %1954 = vmatpush1.bf16.xpose.msra.mxu0 %v378
        %1955 = vmatprep.subr.bf16.mxu0 0
        %1956 = vmatpush1.bf16.xpose.msra.mxu0 %v377
        %1957 = vmatprep.subr.bf16.mxu0 0
        %1958 = vmatpush1.bf16.xpose.msra.mxu0 %v376
        %1959 = vmatprep.subr.bf16.mxu0 0
        %1960 = vmatpush1.bf16.xpose.msra.mxu0 %v375
        %1961 = vmatprep.subr.bf16.mxu0 0
        %1962 = vmatpush1.bf16.xpose.msra.mxu0 %v374
        %1963 = vmatprep.subr.bf16.mxu0 0
        %1964 = vmatpush1.bf16.xpose.msra.mxu0 %v373
        %1965 = vmatprep.subr.bf16.mxu0 0
        %1966 = vmatpush2.bf16.xpose.msra.mxu0 0
        %1967 = vmatprep.subr.bf16.mxu0 0
        %1968 = vmatpush2.bf16.xpose.msra.mxu0 0
        %1969 = vmatprep.subr.bf16.mxu0 0
        %1970 = vmatpush2.bf16.xpose.msra.mxu0 0
        %1971 = vmatprep.subr.bf16.mxu0 0
        %1972 = vmatpush2.bf16.xpose.msra.mxu0 0
        %1973 = vmatprep.subr.bf16.mxu0 0
        %1974 = vmatpush2.bf16.xpose.msra.mxu0 0
        %1975 = vmatprep.subr.bf16.mxu0 0
        %1976 = vmatpush2.bf16.xpose.msra.mxu0 0
        %1977 = vmatprep.subr.bf16.mxu0 0
        %1978 = vmatpush2.bf16.xpose.msra.mxu0 0
        %1979 = vmatprep.subr.bf16.mxu0 0
        %1980 = vmatpush2.bf16.xpose.msra.mxu0 0
        %1981 = vmatprep.mubr.bf16.mxu0 0
        %1982 = vmatmul.mubr.bf16.gmra.mxu0 %v777
        %v1983 = vpop.f32.mrf.mxu0
        %v1984 = vadd.f32 %v292, %v1983
        %v1985 = vpop.f32.mrf.mxu0
        %v1986 = vpop.f32.mrf.mxu0
        %v1987 = vadd.f32 %v293, %v1986
        %v1988 = vpop.f32.mrf.mxu0
        %1989 = vmatprep.mubr.bf16.mxu0 0
        %1990 = vmatmul.mubr.bf16.gmra.mxu0 %v781
        %v1991 = vpop.f32.mrf.mxu0
        %v1992 = vadd.f32 %v294, %v1991
        %v1993 = vpop.f32.mrf.mxu0
        %v1994 = vpop.f32.mrf.mxu0
        %v1995 = vadd.f32 %v295, %v1994
        %v1996 = vpop.f32.mrf.mxu0
        %1997 = vmatprep.mubr.bf16.mxu0 0
        %1998 = vmatmul.mubr.bf16.gmra.mxu0 %v785
        %v1999 = vpop.f32.mrf.mxu0
        %v2000 = vadd.f32 %v296, %v1999
        %v2001 = vpop.f32.mrf.mxu0
        %v2002 = vpop.f32.mrf.mxu0
        %v2003 = vadd.f32 %v297, %v2002
        %v2004 = vpop.f32.mrf.mxu0
        %2005 = vmatprep.mubr.bf16.mxu0 0
        %2006 = vmatmul.mubr.bf16.gmra.mxu0 %v789
        %v2007 = vpop.f32.mrf.mxu0
        %v2008 = vadd.f32 %v298, %v2007
        %v2009 = vpop.f32.mrf.mxu0
        %v2010 = vpop.f32.mrf.mxu0
        %v2011 = vadd.f32 %v299, %v2010
        %v2012 = vpop.f32.mrf.mxu0
        %2013 = vmatprep.mubr.bf16.mxu0 0
        %2014 = vmatmul.mubr.bf16.gmra.mxu0 %v793
        %v2015 = vpop.f32.mrf.mxu0
        %v2016 = vadd.f32 %v300, %v2015
        %v2017 = vpop.f32.mrf.mxu0
        %v2018 = vpop.f32.mrf.mxu0
        %v2019 = vadd.f32 %v301, %v2018
        %v2020 = vpop.f32.mrf.mxu0
        %2021 = vmatprep.mubr.bf16.mxu0 0
        %2022 = vmatmul.mubr.bf16.gmra.mxu0 %v797
        %v2023 = vpop.f32.mrf.mxu0
        %v2024 = vadd.f32 %v302, %v2023
        %v2025 = vpop.f32.mrf.mxu0
        %v2026 = vpop.f32.mrf.mxu0
        %v2027 = vadd.f32 %v303, %v2026
        %v2028 = vpop.f32.mrf.mxu0
        %2029 = vmatprep.mubr.bf16.mxu0 0
        %2030 = vmatmul.mubr.bf16.gmra.mxu0 %v801
        %v2031 = vpop.f32.mrf.mxu0
        %v2032 = vadd.f32 %v304, %v2031
        %v2033 = vpop.f32.mrf.mxu0
        %v2034 = vpop.f32.mrf.mxu0
        %v2035 = vadd.f32 %v305, %v2034
        %v2036 = vpop.f32.mrf.mxu0
        %2037 = vmatprep.mubr.bf16.mxu0 0
        %2038 = vmatmul.mubr.bf16.gmra.mxu0 %v805
        %v2039 = vpop.f32.mrf.mxu0
        %v2040 = vadd.f32 %v306, %v2039
        %v2041 = vpop.f32.mrf.mxu0
        %v2042 = vpop.f32.mrf.mxu0
        %v2043 = vadd.f32 %v307, %v2042
        %v2044 = vpop.f32.mrf.mxu0
        %2045 = vdwg.mxu0
        %2046 = vmax.xlane.f32.xlu0 %v1984
        %v2047 = vpop.xlane.xlu0 %2046
        %2048 = vmax.xlane.f32.xlu0 %v1987
        %v2049 = vpop.xlane.xlu0 %2048
        %2050 = vmax.xlane.f32.xlu0 %v1992
        %v2051 = vpop.xlane.xlu0 %2050
        %2052 = vmax.xlane.f32.xlu0 %v1995
        %v2053 = vpop.xlane.xlu0 %2052
        %2054 = vmax.xlane.f32.xlu0 %v2000
        %v2055 = vpop.xlane.xlu0 %2054
        %2056 = vmax.xlane.f32.xlu0 %v2003
        %v2057 = vpop.xlane.xlu0 %2056
        %2058 = vmax.xlane.f32.xlu0 %v2008
        %v2059 = vpop.xlane.xlu0 %2058
        %2060 = vmax.xlane.f32.xlu0 %v2011
        %v2061 = vpop.xlane.xlu0 %2060
        %2062 = vmax.xlane.f32.xlu0 %v2016
        %v2063 = vpop.xlane.xlu0 %2062
        %2064 = vmax.xlane.f32.xlu0 %v2019
        %v2065 = vpop.xlane.xlu0 %2064
        %2066 = vmax.xlane.f32.xlu0 %v2024
        %v2067 = vpop.xlane.xlu0 %2066
        %2068 = vmax.xlane.f32.xlu0 %v2027
        %v2069 = vpop.xlane.xlu0 %2068
        %2070 = vmax.xlane.f32.xlu0 %v2032
        %v2071 = vpop.xlane.xlu0 %2070
        %2072 = vmax.xlane.f32.xlu0 %v2035
        %v2073 = vpop.xlane.xlu0 %2072
        %2074 = vmax.xlane.f32.xlu0 %v2040
        %v2075 = vpop.xlane.xlu0 %2074
        %2076 = vmax.xlane.f32.xlu0 %v2043
        %v2077 = vpop.xlane.xlu0 %2076
        %v2078 = vsub.f32 %v1984, %v2047
        %v2079 = vsub.f32 %v1987, %v2049
        %v2080 = vsub.f32 %v1992, %v2051
        %v2081 = vsub.f32 %v1995, %v2053
        %v2082 = vsub.f32 %v2000, %v2055
        %v2083 = vsub.f32 %v2003, %v2057
        %v2084 = vsub.f32 %v2008, %v2059
        %v2085 = vsub.f32 %v2011, %v2061
        %v2086 = vsub.f32 %v2016, %v2063
        %v2087 = vsub.f32 %v2019, %v2065
        %v2088 = vsub.f32 %v2024, %v2067
        %v2089 = vsub.f32 %v2027, %v2069
        %v2090 = vsub.f32 %v2032, %v2071
        %v2091 = vsub.f32 %v2035, %v2073
        %v2092 = vsub.f32 %v2040, %v2075
        %v2093 = vsub.f32 %v2043, %v2077
        %v2094 = vmul.f32 %v2078, 1.442695
        %v2095 = vpow.pop %v2094
        %v2096 = vmul.f32 %v2079, 1.442695
        %v2097 = vpow.pop %v2096
        %v2098 = vmul.f32 %v2080, 1.442695
        %v2099 = vpow.pop %v2098
        %v2100 = vmul.f32 %v2081, 1.442695
        %v2101 = vpow.pop %v2100
        %v2102 = vmul.f32 %v2082, 1.442695
        %v2103 = vpow.pop %v2102
        %v2104 = vmul.f32 %v2083, 1.442695
        %v2105 = vpow.pop %v2104
        %v2106 = vmul.f32 %v2084, 1.442695
        %v2107 = vpow.pop %v2106
        %v2108 = vmul.f32 %v2085, 1.442695
        %v2109 = vpow.pop %v2108
        %v2110 = vmul.f32 %v2086, 1.442695
        %v2111 = vpow.pop %v2110
        %v2112 = vmul.f32 %v2087, 1.442695
        %v2113 = vpow.pop %v2112
        %v2114 = vmul.f32 %v2088, 1.442695
        %v2115 = vpow.pop %v2114
        %v2116 = vmul.f32 %v2089, 1.442695
        %v2117 = vpow.pop %v2116
        %v2118 = vmul.f32 %v2090, 1.442695
        %v2119 = vpow.pop %v2118
        %v2120 = vmul.f32 %v2091, 1.442695
        %v2121 = vpow.pop %v2120
        %v2122 = vmul.f32 %v2092, 1.442695
        %v2123 = vpow.pop %v2122
        %v2124 = vmul.f32 %v2093, 1.442695
        %v2125 = vpow.pop %v2124
        %2126 = vadd.xlane.f32.xlu0 %v2095
        %v2127 = vpop.xlane.xlu0 %2126
        %2128 = vadd.xlane.f32.xlu0 %v2097
        %v2129 = vpop.xlane.xlu0 %2128
        %2130 = vadd.xlane.f32.xlu0 %v2099
        %v2131 = vpop.xlane.xlu0 %2130
        %2132 = vadd.xlane.f32.xlu0 %v2101
        %v2133 = vpop.xlane.xlu0 %2132
        %2134 = vadd.xlane.f32.xlu0 %v2103
        %v2135 = vpop.xlane.xlu0 %2134
        %2136 = vadd.xlane.f32.xlu0 %v2105
        %v2137 = vpop.xlane.xlu0 %2136
        %2138 = vadd.xlane.f32.xlu0 %v2107
        %v2139 = vpop.xlane.xlu0 %2138
        %2140 = vadd.xlane.f32.xlu0 %v2109
        %v2141 = vpop.xlane.xlu0 %2140
        %2142 = vadd.xlane.f32.xlu0 %v2111
        %v2143 = vpop.xlane.xlu0 %2142
        %2144 = vadd.xlane.f32.xlu0 %v2113
        %v2145 = vpop.xlane.xlu0 %2144
        %2146 = vadd.xlane.f32.xlu0 %v2115
        %v2147 = vpop.xlane.xlu0 %2146
        %2148 = vadd.xlane.f32.xlu0 %v2117
        %v2149 = vpop.xlane.xlu0 %2148
        %2150 = vadd.xlane.f32.xlu0 %v2119
        %v2151 = vpop.xlane.xlu0 %2150
        %2152 = vadd.xlane.f32.xlu0 %v2121
        %v2153 = vpop.xlane.xlu0 %2152
        %2154 = vadd.xlane.f32.xlu0 %v2123
        %v2155 = vpop.xlane.xlu0 %2154
        %2156 = vadd.xlane.f32.xlu0 %v2125
        %v2157 = vpop.xlane.xlu0 %2156
        %v2158 = vrcp.pop %v2127
        %v2159 = vrcp.pop %v2129
        %v2160 = vrcp.pop %v2131
        %v2161 = vrcp.pop %v2133
        %v2162 = vrcp.pop %v2135
        %v2163 = vrcp.pop %v2137
        %v2164 = vrcp.pop %v2139
        %v2165 = vrcp.pop %v2141
        %v2166 = vrcp.pop %v2143
        %v2167 = vrcp.pop %v2145
        %v2168 = vrcp.pop %v2147
        %v2169 = vrcp.pop %v2149
        %v2170 = vrcp.pop %v2151
        %v2171 = vrcp.pop %v2153
        %v2172 = vrcp.pop %v2155
        %v2173 = vrcp.pop %v2157
        %v2174 = vmul.f32 %v2095, %v2158
        %v2175 = vmul.f32 %v2097, %v2159
        %v2176 = vmul.f32 %v2099, %v2160
        %v2177 = vmul.f32 %v2101, %v2161
        %v2178 = vmul.f32 %v2103, %v2162
        %v2179 = vmul.f32 %v2105, %v2163
        %v2180 = vmul.f32 %v2107, %v2164
        %v2181 = vmul.f32 %v2109, %v2165
        %v2182 = vmul.f32 %v2111, %v2166
        %v2183 = vmul.f32 %v2113, %v2167
        %v2184 = vmul.f32 %v2115, %v2168
        %v2185 = vmul.f32 %v2117, %v2169
        %v2186 = vmul.f32 %v2119, %v2170
        %v2187 = vmul.f32 %v2121, %v2171
        %v2188 = vmul.f32 %v2123, %v2172
        %v2189 = vmul.f32 %v2125, %v2173
        %v2190 = vpack.c.bf16 %v2175, %v2174
        %v2191 = vpack.c.bf16 %v2177, %v2176
        %v2192 = vpack.c.bf16 %v2179, %v2178
        %v2193 = vpack.c.bf16 %v2181, %v2180
        %v2194 = vpack.c.bf16 %v2183, %v2182
        %v2195 = vpack.c.bf16 %v2185, %v2184
        %v2196 = vpack.c.bf16 %v2187, %v2186
        %v2197 = vpack.c.bf16 %v2189, %v2188
        %2198 = vmatprep.subr.bf16.mxu0 0
        %2199 = vmatpush1.bf16.msra.mxu0 %v1255
        %2200 = vmatprep.subr.bf16.mxu0 0
        %2201 = vmatpush1.bf16.msra.mxu0 %v1251
        %2202 = vmatprep.subr.bf16.mxu0 0
        %2203 = vmatpush1.bf16.msra.mxu0 %v1247
        %2204 = vmatprep.subr.bf16.mxu0 0
        %2205 = vmatpush1.bf16.msra.mxu0 %v1243
        %2206 = vmatprep.subr.bf16.mxu0 0
        %2207 = vmatpush1.bf16.msra.mxu0 %v1239
        %2208 = vmatprep.subr.bf16.mxu0 0
        %2209 = vmatpush1.bf16.msra.mxu0 %v1235
        %2210 = vmatprep.subr.bf16.mxu0 0
        %2211 = vmatpush1.bf16.msra.mxu0 %v1231
        %2212 = vmatprep.subr.bf16.mxu0 0
        %2213 = vmatpush1.bf16.msra.mxu0 %v1227
        %2214 = vmatprep.subr.bf16.mxu0 0
        %2215 = vmatpush2.bf16.msra.mxu0 0
        %2216 = vmatprep.subr.bf16.mxu0 0
        %2217 = vmatpush2.bf16.msra.mxu0 0
        %2218 = vmatprep.subr.bf16.mxu0 0
        %2219 = vmatpush2.bf16.msra.mxu0 0
        %2220 = vmatprep.subr.bf16.mxu0 0
        %2221 = vmatpush2.bf16.msra.mxu0 0
        %2222 = vmatprep.subr.bf16.mxu0 0
        %2223 = vmatpush2.bf16.msra.mxu0 0
        %2224 = vmatprep.subr.bf16.mxu0 0
        %2225 = vmatpush2.bf16.msra.mxu0 0
        %2226 = vmatprep.subr.bf16.mxu0 0
        %2227 = vmatpush2.bf16.msra.mxu0 0
        %2228 = vmatprep.subr.bf16.mxu0 0
        %2229 = vmatpush2.bf16.msra.mxu0 0
        %2230 = vmatprep.mubr.bf16.mxu0 0
        %2231 = vmatmul.mubr.bf16.gmra.mxu0 %v2190
        %v2232 = vpop.f32.mrf.mxu0
        %v2233 = vadd.f32 0.0, %v2232
        %v2234 = vpop.f32.mrf.mxu0
        %v2235 = vpop.f32.mrf.mxu0
        %v2236 = vadd.f32 0.0, %v2235
        %v2237 = vpop.f32.mrf.mxu0
        %2238 = vmatprep.mubr.bf16.mxu0 0
        %2239 = vmatmul.mubr.bf16.gmra.mxu0 %v2191
        %v2240 = vpop.f32.mrf.mxu0
        %v2241 = vadd.f32 0.0, %v2240
        %v2242 = vpop.f32.mrf.mxu0
        %v2243 = vpop.f32.mrf.mxu0
        %v2244 = vadd.f32 0.0, %v2243
        %v2245 = vpop.f32.mrf.mxu0
        %2246 = vmatprep.mubr.bf16.mxu0 0
        %2247 = vmatmul.mubr.bf16.gmra.mxu0 %v2192
        %v2248 = vpop.f32.mrf.mxu0
        %v2249 = vadd.f32 0.0, %v2248
        %v2250 = vpop.f32.mrf.mxu0
        %v2251 = vpop.f32.mrf.mxu0
        %v2252 = vadd.f32 0.0, %v2251
        %v2253 = vpop.f32.mrf.mxu0
        %2254 = vmatprep.mubr.bf16.mxu0 0
        %2255 = vmatmul.mubr.bf16.gmra.mxu0 %v2193
        %v2256 = vpop.f32.mrf.mxu0
        %v2257 = vadd.f32 0.0, %v2256
        %v2258 = vpop.f32.mrf.mxu0
        %v2259 = vpop.f32.mrf.mxu0
        %v2260 = vadd.f32 0.0, %v2259
        %v2261 = vpop.f32.mrf.mxu0
        %2262 = vmatprep.mubr.bf16.mxu0 0
        %2263 = vmatmul.mubr.bf16.gmra.mxu0 %v2194
        %v2264 = vpop.f32.mrf.mxu0
        %v2265 = vadd.f32 0.0, %v2264
        %v2266 = vpop.f32.mrf.mxu0
        %v2267 = vpop.f32.mrf.mxu0
        %v2268 = vadd.f32 0.0, %v2267
        %v2269 = vpop.f32.mrf.mxu0
        %2270 = vmatprep.mubr.bf16.mxu0 0
        %2271 = vmatmul.mubr.bf16.gmra.mxu0 %v2195
        %v2272 = vpop.f32.mrf.mxu0
        %v2273 = vadd.f32 0.0, %v2272
        %v2274 = vpop.f32.mrf.mxu0
        %v2275 = vpop.f32.mrf.mxu0
        %v2276 = vadd.f32 0.0, %v2275
        %v2277 = vpop.f32.mrf.mxu0
        %2278 = vmatprep.mubr.bf16.mxu0 0
        %2279 = vmatmul.mubr.bf16.gmra.mxu0 %v2196
        %v2280 = vpop.f32.mrf.mxu0
        %v2281 = vadd.f32 0.0, %v2280
        %v2282 = vpop.f32.mrf.mxu0
        %v2283 = vpop.f32.mrf.mxu0
        %v2284 = vadd.f32 0.0, %v2283
        %v2285 = vpop.f32.mrf.mxu0
        %2286 = vmatprep.mubr.bf16.mxu0 0
        %2287 = vmatmul.mubr.bf16.gmra.mxu0 %v2197
        %v2288 = vpop.f32.mrf.mxu0
        %v2289 = vadd.f32 0.0, %v2288
        %v2290 = vpop.f32.mrf.mxu0
        %v2291 = vpop.f32.mrf.mxu0
        %v2292 = vadd.f32 0.0, %v2291
        %v2293 = vpop.f32.mrf.mxu0
        %2294 = vdwg.mxu0
        %v2295 = vadd.f32 %v1887, %v2233
        %v2296 = vadd.f32 %v1890, %v2236
        %v2297 = vadd.f32 %v1895, %v2241
        %v2298 = vadd.f32 %v1898, %v2244
        %v2299 = vadd.f32 %v1903, %v2249
        %v2300 = vadd.f32 %v1906, %v2252
        %v2301 = vadd.f32 %v1911, %v2257
        %v2302 = vadd.f32 %v1914, %v2260
        %v2303 = vadd.f32 %v1919, %v2265
        %v2304 = vadd.f32 %v1922, %v2268
        %v2305 = vadd.f32 %v1927, %v2273
        %v2306 = vadd.f32 %v1930, %v2276
        %v2307 = vadd.f32 %v1935, %v2281
        %v2308 = vadd.f32 %v1938, %v2284
        %v2309 = vadd.f32 %v1943, %v2289
        %v2310 = vadd.f32 %v1946, %v2292
        %2311 = vmatprep.subr.bf16.mxu0 0
        %2312 = vmatpush1.bf16.xpose.msra.mxu0 %v380
        %2313 = vmatprep.subr.bf16.mxu0 0
        %2314 = vmatpush1.bf16.xpose.msra.mxu0 %v379
        %2315 = vmatprep.subr.bf16.mxu0 0
        %2316 = vmatpush1.bf16.xpose.msra.mxu0 %v378
        %2317 = vmatprep.subr.bf16.mxu0 0
        %2318 = vmatpush1.bf16.xpose.msra.mxu0 %v377
        %2319 = vmatprep.subr.bf16.mxu0 0
        %2320 = vmatpush1.bf16.xpose.msra.mxu0 %v376
        %2321 = vmatprep.subr.bf16.mxu0 0
        %2322 = vmatpush1.bf16.xpose.msra.mxu0 %v375
        %2323 = vmatprep.subr.bf16.mxu0 0
        %2324 = vmatpush1.bf16.xpose.msra.mxu0 %v374
        %2325 = vmatprep.subr.bf16.mxu0 0
        %2326 = vmatpush1.bf16.xpose.msra.mxu0 %v373
        %2327 = vmatprep.subr.bf16.mxu0 0
        %2328 = vmatpush2.bf16.xpose.msra.mxu0 0
        %2329 = vmatprep.subr.bf16.mxu0 0
        %2330 = vmatpush2.bf16.xpose.msra.mxu0 0
        %2331 = vmatprep.subr.bf16.mxu0 0
        %2332 = vmatpush2.bf16.xpose.msra.mxu0 0
        %2333 = vmatprep.subr.bf16.mxu0 0
        %2334 = vmatpush2.bf16.xpose.msra.mxu0 0
        %2335 = vmatprep.subr.bf16.mxu0 0
        %2336 = vmatpush2.bf16.xpose.msra.mxu0 0
        %2337 = vmatprep.subr.bf16.mxu0 0
        %2338 = vmatpush2.bf16.xpose.msra.mxu0 0
        %2339 = vmatprep.subr.bf16.mxu0 0
        %2340 = vmatpush2.bf16.xpose.msra.mxu0 0
        %2341 = vmatprep.subr.bf16.mxu0 0
        %2342 = vmatpush2.bf16.xpose.msra.mxu0 0
        %2343 = vmatprep.mubr.bf16.mxu0 0
        %2344 = vmatmul.mubr.bf16.gmra.mxu0 %v778
        %v2345 = vpop.f32.mrf.mxu0
        %v2346 = vadd.f32 %v292, %v2345
        %v2347 = vpop.f32.mrf.mxu0
        %v2348 = vpop.f32.mrf.mxu0
        %v2349 = vadd.f32 %v293, %v2348
        %v2350 = vpop.f32.mrf.mxu0
        %2351 = vmatprep.mubr.bf16.mxu0 0
        %2352 = vmatmul.mubr.bf16.gmra.mxu0 %v782
        %v2353 = vpop.f32.mrf.mxu0
        %v2354 = vadd.f32 %v294, %v2353
        %v2355 = vpop.f32.mrf.mxu0
        %v2356 = vpop.f32.mrf.mxu0
        %v2357 = vadd.f32 %v295, %v2356
        %v2358 = vpop.f32.mrf.mxu0
        %2359 = vmatprep.mubr.bf16.mxu0 0
        %2360 = vmatmul.mubr.bf16.gmra.mxu0 %v786
        %v2361 = vpop.f32.mrf.mxu0
        %v2362 = vadd.f32 %v296, %v2361
        %v2363 = vpop.f32.mrf.mxu0
        %v2364 = vpop.f32.mrf.mxu0
        %v2365 = vadd.f32 %v297, %v2364
        %v2366 = vpop.f32.mrf.mxu0
        %2367 = vmatprep.mubr.bf16.mxu0 0
        %2368 = vmatmul.mubr.bf16.gmra.mxu0 %v790
        %v2369 = vpop.f32.mrf.mxu0
        %v2370 = vadd.f32 %v298, %v2369
        %v2371 = vpop.f32.mrf.mxu0
        %v2372 = vpop.f32.mrf.mxu0
        %v2373 = vadd.f32 %v299, %v2372
        %v2374 = vpop.f32.mrf.mxu0
        %2375 = vmatprep.mubr.bf16.mxu0 0
        %2376 = vmatmul.mubr.bf16.gmra.mxu0 %v794
        %v2377 = vpop.f32.mrf.mxu0
        %v2378 = vadd.f32 %v300, %v2377
        %v2379 = vpop.f32.mrf.mxu0
        %v2380 = vpop.f32.mrf.mxu0
        %v2381 = vadd.f32 %v301, %v2380
        %v2382 = vpop.f32.mrf.mxu0
        %2383 = vmatprep.mubr.bf16.mxu0 0
        %2384 = vmatmul.mubr.bf16.gmra.mxu0 %v798
        %v2385 = vpop.f32.mrf.mxu0
        %v2386 = vadd.f32 %v302, %v2385
        %v2387 = vpop.f32.mrf.mxu0
        %v2388 = vpop.f32.mrf.mxu0
        %v2389 = vadd.f32 %v303, %v2388
        %v2390 = vpop.f32.mrf.mxu0
        %2391 = vmatprep.mubr.bf16.mxu0 0
        %2392 = vmatmul.mubr.bf16.gmra.mxu0 %v802
        %v2393 = vpop.f32.mrf.mxu0
        %v2394 = vadd.f32 %v304, %v2393
        %v2395 = vpop.f32.mrf.mxu0
        %v2396 = vpop.f32.mrf.mxu0
        %v2397 = vadd.f32 %v305, %v2396
        %v2398 = vpop.f32.mrf.mxu0
        %2399 = vmatprep.mubr.bf16.mxu0 0
        %2400 = vmatmul.mubr.bf16.gmra.mxu0 %v806
        %v2401 = vpop.f32.mrf.mxu0
        %v2402 = vadd.f32 %v306, %v2401
        %v2403 = vpop.f32.mrf.mxu0
        %v2404 = vpop.f32.mrf.mxu0
        %v2405 = vadd.f32 %v307, %v2404
        %v2406 = vpop.f32.mrf.mxu0
        %2407 = vdwg.mxu0
        %2408 = vmax.xlane.f32.xlu0 %v2346
        %v2409 = vpop.xlane.xlu0 %2408
        %2410 = vmax.xlane.f32.xlu0 %v2349
        %v2411 = vpop.xlane.xlu0 %2410
        %2412 = vmax.xlane.f32.xlu0 %v2354
        %v2413 = vpop.xlane.xlu0 %2412
        %2414 = vmax.xlane.f32.xlu0 %v2357
        %v2415 = vpop.xlane.xlu0 %2414
        %2416 = vmax.xlane.f32.xlu0 %v2362
        %v2417 = vpop.xlane.xlu0 %2416
        %2418 = vmax.xlane.f32.xlu0 %v2365
        %v2419 = vpop.xlane.xlu0 %2418
        %2420 = vmax.xlane.f32.xlu0 %v2370
        %v2421 = vpop.xlane.xlu0 %2420
        %2422 = vmax.xlane.f32.xlu0 %v2373
        %v2423 = vpop.xlane.xlu0 %2422
        %2424 = vmax.xlane.f32.xlu0 %v2378
        %v2425 = vpop.xlane.xlu0 %2424
        %2426 = vmax.xlane.f32.xlu0 %v2381
        %v2427 = vpop.xlane.xlu0 %2426
        %2428 = vmax.xlane.f32.xlu0 %v2386
        %v2429 = vpop.xlane.xlu0 %2428
        %2430 = vmax.xlane.f32.xlu0 %v2389
        %v2431 = vpop.xlane.xlu0 %2430
        %2432 = vmax.xlane.f32.xlu0 %v2394
        %v2433 = vpop.xlane.xlu0 %2432
        %2434 = vmax.xlane.f32.xlu0 %v2397
        %v2435 = vpop.xlane.xlu0 %2434
        %2436 = vmax.xlane.f32.xlu0 %v2402
        %v2437 = vpop.xlane.xlu0 %2436
        %2438 = vmax.xlane.f32.xlu0 %v2405
        %v2439 = vpop.xlane.xlu0 %2438
        %v2440 = vsub.f32 %v2346, %v2409
        %v2441 = vsub.f32 %v2349, %v2411
        %v2442 = vsub.f32 %v2354, %v2413
        %v2443 = vsub.f32 %v2357, %v2415
        %v2444 = vsub.f32 %v2362, %v2417
        %v2445 = vsub.f32 %v2365, %v2419
        %v2446 = vsub.f32 %v2370, %v2421
        %v2447 = vsub.f32 %v2373, %v2423
        %v2448 = vsub.f32 %v2378, %v2425
        %v2449 = vsub.f32 %v2381, %v2427
        %v2450 = vsub.f32 %v2386, %v2429
        %v2451 = vsub.f32 %v2389, %v2431
        %v2452 = vsub.f32 %v2394, %v2433
        %v2453 = vsub.f32 %v2397, %v2435
        %v2454 = vsub.f32 %v2402, %v2437
        %v2455 = vsub.f32 %v2405, %v2439
        %v2456 = vmul.f32 %v2440, 1.442695
        %v2457 = vpow.pop %v2456
        %v2458 = vmul.f32 %v2441, 1.442695
        %v2459 = vpow.pop %v2458
        %v2460 = vmul.f32 %v2442, 1.442695
        %v2461 = vpow.pop %v2460
        %v2462 = vmul.f32 %v2443, 1.442695
        %v2463 = vpow.pop %v2462
        %v2464 = vmul.f32 %v2444, 1.442695
        %v2465 = vpow.pop %v2464
        %v2466 = vmul.f32 %v2445, 1.442695
        %v2467 = vpow.pop %v2466
        %v2468 = vmul.f32 %v2446, 1.442695
        %v2469 = vpow.pop %v2468
        %v2470 = vmul.f32 %v2447, 1.442695
        %v2471 = vpow.pop %v2470
        %v2472 = vmul.f32 %v2448, 1.442695
        %v2473 = vpow.pop %v2472
        %v2474 = vmul.f32 %v2449, 1.442695
        %v2475 = vpow.pop %v2474
        %v2476 = vmul.f32 %v2450, 1.442695
        %v2477 = vpow.pop %v2476
        %v2478 = vmul.f32 %v2451, 1.442695
        %v2479 = vpow.pop %v2478
        %v2480 = vmul.f32 %v2452, 1.442695
        %v2481 = vpow.pop %v2480
        %v2482 = vmul.f32 %v2453, 1.442695
        %v2483 = vpow.pop %v2482
        %v2484 = vmul.f32 %v2454, 1.442695
        %v2485 = vpow.pop %v2484
        %v2486 = vmul.f32 %v2455, 1.442695
        %v2487 = vpow.pop %v2486
        %2488 = vadd.xlane.f32.xlu0 %v2457
        %v2489 = vpop.xlane.xlu0 %2488
        %2490 = vadd.xlane.f32.xlu0 %v2459
        %v2491 = vpop.xlane.xlu0 %2490
        %2492 = vadd.xlane.f32.xlu0 %v2461
        %v2493 = vpop.xlane.xlu0 %2492
        %2494 = vadd.xlane.f32.xlu0 %v2463
        %v2495 = vpop.xlane.xlu0 %2494
        %2496 = vadd.xlane.f32.xlu0 %v2465
        %v2497 = vpop.xlane.xlu0 %2496
        %2498 = vadd.xlane.f32.xlu0 %v2467
        %v2499 = vpop.xlane.xlu0 %2498
        %2500 = vadd.xlane.f32.xlu0 %v2469
        %v2501 = vpop.xlane.xlu0 %2500
        %2502 = vadd.xlane.f32.xlu0 %v2471
        %v2503 = vpop.xlane.xlu0 %2502
        %2504 = vadd.xlane.f32.xlu0 %v2473
        %v2505 = vpop.xlane.xlu0 %2504
        %2506 = vadd.xlane.f32.xlu0 %v2475
        %v2507 = vpop.xlane.xlu0 %2506
        %2508 = vadd.xlane.f32.xlu0 %v2477
        %v2509 = vpop.xlane.xlu0 %2508
        %2510 = vadd.xlane.f32.xlu0 %v2479
        %v2511 = vpop.xlane.xlu0 %2510
        %2512 = vadd.xlane.f32.xlu0 %v2481
        %v2513 = vpop.xlane.xlu0 %2512
        %2514 = vadd.xlane.f32.xlu0 %v2483
        %v2515 = vpop.xlane.xlu0 %2514
        %2516 = vadd.xlane.f32.xlu0 %v2485
        %v2517 = vpop.xlane.xlu0 %2516
        %2518 = vadd.xlane.f32.xlu0 %v2487
        %v2519 = vpop.xlane.xlu0 %2518
        %v2520 = vrcp.pop %v2489
        %v2521 = vrcp.pop %v2491
        %v2522 = vrcp.pop %v2493
        %v2523 = vrcp.pop %v2495
        %v2524 = vrcp.pop %v2497
        %v2525 = vrcp.pop %v2499
        %v2526 = vrcp.pop %v2501
        %v2527 = vrcp.pop %v2503
        %v2528 = vrcp.pop %v2505
        %v2529 = vrcp.pop %v2507
        %v2530 = vrcp.pop %v2509
        %v2531 = vrcp.pop %v2511
        %v2532 = vrcp.pop %v2513
        %v2533 = vrcp.pop %v2515
        %v2534 = vrcp.pop %v2517
        %v2535 = vrcp.pop %v2519
        %v2536 = vmul.f32 %v2457, %v2520
        %v2537 = vmul.f32 %v2459, %v2521
        %v2538 = vmul.f32 %v2461, %v2522
        %v2539 = vmul.f32 %v2463, %v2523
        %v2540 = vmul.f32 %v2465, %v2524
        %v2541 = vmul.f32 %v2467, %v2525
        %v2542 = vmul.f32 %v2469, %v2526
        %v2543 = vmul.f32 %v2471, %v2527
        %v2544 = vmul.f32 %v2473, %v2528
        %v2545 = vmul.f32 %v2475, %v2529
        %v2546 = vmul.f32 %v2477, %v2530
        %v2547 = vmul.f32 %v2479, %v2531
        %v2548 = vmul.f32 %v2481, %v2532
        %v2549 = vmul.f32 %v2483, %v2533
        %v2550 = vmul.f32 %v2485, %v2534
        %v2551 = vmul.f32 %v2487, %v2535
        %v2552 = vpack.c.bf16 %v2537, %v2536
        %v2553 = vpack.c.bf16 %v2539, %v2538
        %v2554 = vpack.c.bf16 %v2541, %v2540
        %v2555 = vpack.c.bf16 %v2543, %v2542
        %v2556 = vpack.c.bf16 %v2545, %v2544
        %v2557 = vpack.c.bf16 %v2547, %v2546
        %v2558 = vpack.c.bf16 %v2549, %v2548
        %v2559 = vpack.c.bf16 %v2551, %v2550
        %2560 = vmatprep.subr.bf16.mxu0 0
        %2561 = vmatpush1.bf16.msra.mxu0 %v1256
        %2562 = vmatprep.subr.bf16.mxu0 0
        %2563 = vmatpush1.bf16.msra.mxu0 %v1252
        %2564 = vmatprep.subr.bf16.mxu0 0
        %2565 = vmatpush1.bf16.msra.mxu0 %v1248
        %2566 = vmatprep.subr.bf16.mxu0 0
        %2567 = vmatpush1.bf16.msra.mxu0 %v1244
        %2568 = vmatprep.subr.bf16.mxu0 0
        %2569 = vmatpush1.bf16.msra.mxu0 %v1240
        %2570 = vmatprep.subr.bf16.mxu0 0
        %2571 = vmatpush1.bf16.msra.mxu0 %v1236
        %2572 = vmatprep.subr.bf16.mxu0 0
        %2573 = vmatpush1.bf16.msra.mxu0 %v1232
        %2574 = vmatprep.subr.bf16.mxu0 0
        %2575 = vmatpush1.bf16.msra.mxu0 %v1228
        %2576 = vmatprep.subr.bf16.mxu0 0
        %2577 = vmatpush2.bf16.msra.mxu0 0
        %2578 = vmatprep.subr.bf16.mxu0 0
        %2579 = vmatpush2.bf16.msra.mxu0 0
        %2580 = vmatprep.subr.bf16.mxu0 0
        %2581 = vmatpush2.bf16.msra.mxu0 0
        %2582 = vmatprep.subr.bf16.mxu0 0
        %2583 = vmatpush2.bf16.msra.mxu0 0
        %2584 = vmatprep.subr.bf16.mxu0 0
        %2585 = vmatpush2.bf16.msra.mxu0 0
        %2586 = vmatprep.subr.bf16.mxu0 0
        %2587 = vmatpush2.bf16.msra.mxu0 0
        %2588 = vmatprep.subr.bf16.mxu0 0
        %2589 = vmatpush2.bf16.msra.mxu0 0
        %2590 = vmatprep.subr.bf16.mxu0 0
        %2591 = vmatpush2.bf16.msra.mxu0 0
        %2592 = vmatprep.mubr.bf16.mxu0 0
        %2593 = vmatmul.mubr.bf16.gmra.mxu0 %v2552
        %v2594 = vpop.f32.mrf.mxu0
        %v2595 = vadd.f32 0.0, %v2594
        %v2596 = vpop.f32.mrf.mxu0
        %v2597 = vpop.f32.mrf.mxu0
        %v2598 = vadd.f32 0.0, %v2597
        %v2599 = vpop.f32.mrf.mxu0
        %2600 = vmatprep.mubr.bf16.mxu0 0
        %2601 = vmatmul.mubr.bf16.gmra.mxu0 %v2553
        %v2602 = vpop.f32.mrf.mxu0
        %v2603 = vadd.f32 0.0, %v2602
        %v2604 = vpop.f32.mrf.mxu0
        %v2605 = vpop.f32.mrf.mxu0
        %v2606 = vadd.f32 0.0, %v2605
        %v2607 = vpop.f32.mrf.mxu0
        %2608 = vmatprep.mubr.bf16.mxu0 0
        %2609 = vmatmul.mubr.bf16.gmra.mxu0 %v2554
        %v2610 = vpop.f32.mrf.mxu0
        %v2611 = vadd.f32 0.0, %v2610
        %v2612 = vpop.f32.mrf.mxu0
        %v2613 = vpop.f32.mrf.mxu0
        %v2614 = vadd.f32 0.0, %v2613
        %v2615 = vpop.f32.mrf.mxu0
        %2616 = vmatprep.mubr.bf16.mxu0 0
        %2617 = vmatmul.mubr.bf16.gmra.mxu0 %v2555
        %v2618 = vpop.f32.mrf.mxu0
        %v2619 = vadd.f32 0.0, %v2618
        %v2620 = vpop.f32.mrf.mxu0
        %v2621 = vpop.f32.mrf.mxu0
        %v2622 = vadd.f32 0.0, %v2621
        %v2623 = vpop.f32.mrf.mxu0
        %2624 = vmatprep.mubr.bf16.mxu0 0
        %2625 = vmatmul.mubr.bf16.gmra.mxu0 %v2556
        %v2626 = vpop.f32.mrf.mxu0
        %v2627 = vadd.f32 0.0, %v2626
        %v2628 = vpop.f32.mrf.mxu0
        %v2629 = vpop.f32.mrf.mxu0
        %v2630 = vadd.f32 0.0, %v2629
        %v2631 = vpop.f32.mrf.mxu0
        %2632 = vmatprep.mubr.bf16.mxu0 0
        %2633 = vmatmul.mubr.bf16.gmra.mxu0 %v2557
        %v2634 = vpop.f32.mrf.mxu0
        %v2635 = vadd.f32 0.0, %v2634
        %v2636 = vpop.f32.mrf.mxu0
        %v2637 = vpop.f32.mrf.mxu0
        %v2638 = vadd.f32 0.0, %v2637
        %v2639 = vpop.f32.mrf.mxu0
        %2640 = vmatprep.mubr.bf16.mxu0 0
        %2641 = vmatmul.mubr.bf16.gmra.mxu0 %v2558
        %v2642 = vpop.f32.mrf.mxu0
        %v2643 = vadd.f32 0.0, %v2642
        %v2644 = vpop.f32.mrf.mxu0
        %v2645 = vpop.f32.mrf.mxu0
        %v2646 = vadd.f32 0.0, %v2645
        %v2647 = vpop.f32.mrf.mxu0
        %2648 = vmatprep.mubr.bf16.mxu0 0
        %2649 = vmatmul.mubr.bf16.gmra.mxu0 %v2559
        %v2650 = vpop.f32.mrf.mxu0
        %v2651 = vadd.f32 0.0, %v2650
        %v2652 = vpop.f32.mrf.mxu0
        %v2653 = vpop.f32.mrf.mxu0
        %v2654 = vadd.f32 0.0, %v2653
        %v2655 = vpop.f32.mrf.mxu0
        %2656 = vdwg.mxu0
        %v2657 = vadd.f32 %v2295, %v2595
        %v2658 = vadd.f32 %v2296, %v2598
        %v2659 = vadd.f32 %v2297, %v2603
        %v2660 = vadd.f32 %v2298, %v2606
        %v2661 = vadd.f32 %v2299, %v2611
        %v2662 = vadd.f32 %v2300, %v2614
        %v2663 = vadd.f32 %v2301, %v2619
        %v2664 = vadd.f32 %v2302, %v2622
        %v2665 = vadd.f32 %v2303, %v2627
        %v2666 = vadd.f32 %v2304, %v2630
        %v2667 = vadd.f32 %v2305, %v2635
        %v2668 = vadd.f32 %v2306, %v2638
        %v2669 = vadd.f32 %v2307, %v2643
        %v2670 = vadd.f32 %v2308, %v2646
        %v2671 = vadd.f32 %v2309, %v2651
        %v2672 = vadd.f32 %v2310, %v2654
        %v2673 = vlaneseq
        %v2674 = vshrl.u32 %v2673, 7
        %v2675 = vsub.s32 0, %v2674
        %v2676 = vrot.slane %v308, %v2675
        %v2677 = vadd.f32 %v2657, %v2676
        %v2678 = vadd.f32 %v2658, %v2676
        %v2679 = vadd.f32 %v2659, %v2676
        %v2680 = vadd.f32 %v2660, %v2676
        %v2681 = vadd.f32 %v2661, %v2676
        %v2682 = vadd.f32 %v2662, %v2676
        %v2683 = vadd.f32 %v2663, %v2676
        %v2684 = vadd.f32 %v2664, %v2676
        %v2685 = vadd.f32 %v2665, %v2676
        %v2686 = vadd.f32 %v2666, %v2676
        %v2687 = vadd.f32 %v2667, %v2676
        %v2688 = vadd.f32 %v2668, %v2676
        %v2689 = vadd.f32 %v2669, %v2676
        %v2690 = vadd.f32 %v2670, %v2676
        %v2691 = vadd.f32 %v2671, %v2676
        %v2692 = vadd.f32 %v2672, %v2676
        %v2693 = vpack.c.bf16 %v2678, %v2677
        %v2694 = vpack.c.bf16 %v2680, %v2679
        %v2695 = vpack.c.bf16 %v2682, %v2681
        %v2696 = vpack.c.bf16 %v2684, %v2683
        %v2697 = vpack.c.bf16 %v2686, %v2685
        %v2698 = vpack.c.bf16 %v2688, %v2687
        %v2699 = vpack.c.bf16 %v2690, %v2689
        %v2700 = vpack.c.bf16 %v2692, %v2691
        %v2701 = vld [vmem:[%s4] sm:$0xf]
        %v2702 = vld [vmem:[%s4 + $0x4] sm:$0xf]
        %v2703 = vld [vmem:[%s4 + $0x8] sm:$0xf]
        %v2704 = vld [vmem:[%s4 + $0xc] sm:$0xf]
        %v2705 = vld [vmem:[%s4 + $0x10] sm:$0xf]
        %v2706 = vld [vmem:[%s4 + $0x14] sm:$0xf]
        %v2707 = vld [vmem:[%s4 + $0x18] sm:$0xf]
        %v2708 = vld [vmem:[%s4 + $0x1c] sm:$0xf]
        %v2709 = vld [vmem:[%s4 + $0x20] sm:$0xf]
        %v2710 = vld [vmem:[%s4 + $0x24] sm:$0xf]
        %v2711 = vld [vmem:[%s4 + $0x28] sm:$0xf]
        %v2712 = vld [vmem:[%s4 + $0x2c] sm:$0xf]
        %v2713 = vld [vmem:[%s4 + $0x30] sm:$0xf]
        %v2714 = vld [vmem:[%s4 + $0x34] sm:$0xf]
        %v2715 = vld [vmem:[%s4 + $0x38] sm:$0xf]
        %v2716 = vld [vmem:[%s4 + $0x3c] sm:$0xf]
        %v2717 = vlaneseq
        %v2718 = vshrl.u32 %v2717, 7
        %v2719 = vsub.s32 1, %v2718
        %v2720 = vrot.slane %v308, %v2719
        %v2737 = vunpack.c.l.b16 %v2701
        %v2738 = vunpack.c.l.b16 %v2702
        %v2739 = vunpack.c.l.b16 %v2703
        %v2740 = vunpack.c.l.b16 %v2704
        %v2741 = vunpack.c.l.b16 %v2705
        %v2742 = vunpack.c.l.b16 %v2706
        %v2743 = vunpack.c.l.b16 %v2707
        %v2744 = vunpack.c.l.b16 %v2708
        %v2745 = vunpack.c.l.b16 %v2709
        %v2746 = vunpack.c.l.b16 %v2710
        %v2747 = vunpack.c.l.b16 %v2711
        %v2748 = vunpack.c.l.b16 %v2712
        %v2749 = vunpack.c.l.b16 %v2713
        %v2750 = vunpack.c.l.b16 %v2714
        %v2751 = vunpack.c.l.b16 %v2715
        %v2752 = vunpack.c.l.b16 %v2716
        %v2753 = vpack.c.b16 %v2738, %v2737
        %v2754 = vpack.c.b16 %v2740, %v2739
        %v2755 = vpack.c.b16 %v2742, %v2741
        %v2756 = vpack.c.b16 %v2744, %v2743
        %v2757 = vpack.c.b16 %v2746, %v2745
        %v2758 = vpack.c.b16 %v2748, %v2747
        %v2759 = vpack.c.b16 %v2750, %v2749
        %v2760 = vpack.c.b16 %v2752, %v2751
        %2769 = vmatprep.subr.bf16.mxu0 0
        %2770 = vmatpush1.bf16.msra.mxu0 %v2760
        %2771 = vmatprep.subr.bf16.mxu0 0
        %2772 = vmatpush1.bf16.msra.mxu0 %v2759
        %2773 = vmatprep.subr.bf16.mxu0 0
        %2774 = vmatpush1.bf16.msra.mxu0 %v2758
        %2775 = vmatprep.subr.bf16.mxu0 0
        %2776 = vmatpush1.bf16.msra.mxu0 %v2757
        %2777 = vmatprep.subr.bf16.mxu0 0
        %2778 = vmatpush1.bf16.msra.mxu0 %v2756
        %2779 = vmatprep.subr.bf16.mxu0 0
        %2780 = vmatpush1.bf16.msra.mxu0 %v2755
        %2781 = vmatprep.subr.bf16.mxu0 0
        %2782 = vmatpush1.bf16.msra.mxu0 %v2754
        %2783 = vmatprep.subr.bf16.mxu0 0
        %2784 = vmatpush1.bf16.msra.mxu0 %v2753
        %2785 = vmatprep.subr.bf16.mxu0 0
        %2786 = vmatpush2.bf16.msra.mxu0 0
        %2787 = vmatprep.subr.bf16.mxu0 0
        %2788 = vmatpush2.bf16.msra.mxu0 0
        %2789 = vmatprep.subr.bf16.mxu0 0
        %2790 = vmatpush2.bf16.msra.mxu0 0
        %2791 = vmatprep.subr.bf16.mxu0 0
        %2792 = vmatpush2.bf16.msra.mxu0 0
        %2793 = vmatprep.subr.bf16.mxu0 0
        %2794 = vmatpush2.bf16.msra.mxu0 0
        %2795 = vmatprep.subr.bf16.mxu0 0
        %2796 = vmatpush2.bf16.msra.mxu0 0
        %2797 = vmatprep.subr.bf16.mxu0 0
        %2798 = vmatpush2.bf16.msra.mxu0 0
        %2799 = vmatprep.subr.bf16.mxu0 0
        %2800 = vmatpush2.bf16.msra.mxu0 0
        %2801 = vmatprep.mubr.bf16.mxu0 0
        %2802 = vmatmul.mubr.bf16.gmra.mxu0 %v2693
        %v2803 = vpop.f32.mrf.mxu0
        %v2804 = vadd.f32 %v2720, %v2803
        %v2805 = vpop.f32.mrf.mxu0
        %v2806 = vpop.f32.mrf.mxu0
        %v2807 = vadd.f32 %v2720, %v2806
        %v2808 = vpop.f32.mrf.mxu0
        %2809 = vmatprep.mubr.bf16.mxu0 0
        %2810 = vmatmul.mubr.bf16.gmra.mxu0 %v2694
        %v2811 = vpop.f32.mrf.mxu0
        %v2812 = vadd.f32 %v2720, %v2811
        %v2813 = vpop.f32.mrf.mxu0
        %v2814 = vpop.f32.mrf.mxu0
        %v2815 = vadd.f32 %v2720, %v2814
        %v2816 = vpop.f32.mrf.mxu0
        %2817 = vmatprep.mubr.bf16.mxu0 0
        %2818 = vmatmul.mubr.bf16.gmra.mxu0 %v2695
        %v2819 = vpop.f32.mrf.mxu0
        %v2820 = vadd.f32 %v2720, %v2819
        %v2821 = vpop.f32.mrf.mxu0
        %v2822 = vpop.f32.mrf.mxu0
        %v2823 = vadd.f32 %v2720, %v2822
        %v2824 = vpop.f32.mrf.mxu0
        %2825 = vmatprep.mubr.bf16.mxu0 0
        %2826 = vmatmul.mubr.bf16.gmra.mxu0 %v2696
        %v2827 = vpop.f32.mrf.mxu0
        %v2828 = vadd.f32 %v2720, %v2827
        %v2829 = vpop.f32.mrf.mxu0
        %v2830 = vpop.f32.mrf.mxu0
        %v2831 = vadd.f32 %v2720, %v2830
        %v2832 = vpop.f32.mrf.mxu0
        %2833 = vmatprep.mubr.bf16.mxu0 0
        %2834 = vmatmul.mubr.bf16.gmra.mxu0 %v2697
        %v2835 = vpop.f32.mrf.mxu0
        %v2836 = vadd.f32 %v2720, %v2835
        %v2837 = vpop.f32.mrf.mxu0
        %v2838 = vpop.f32.mrf.mxu0
        %v2839 = vadd.f32 %v2720, %v2838
        %v2840 = vpop.f32.mrf.mxu0
        %2841 = vmatprep.mubr.bf16.mxu0 0
        %2842 = vmatmul.mubr.bf16.gmra.mxu0 %v2698
        %v2843 = vpop.f32.mrf.mxu0
        %v2844 = vadd.f32 %v2720, %v2843
        %v2845 = vpop.f32.mrf.mxu0
        %v2846 = vpop.f32.mrf.mxu0
        %v2847 = vadd.f32 %v2720, %v2846
        %v2848 = vpop.f32.mrf.mxu0
        %2849 = vmatprep.mubr.bf16.mxu0 0
        %2850 = vmatmul.mubr.bf16.gmra.mxu0 %v2699
        %v2851 = vpop.f32.mrf.mxu0
        %v2852 = vadd.f32 %v2720, %v2851
        %v2853 = vpop.f32.mrf.mxu0
        %v2854 = vpop.f32.mrf.mxu0
        %v2855 = vadd.f32 %v2720, %v2854
        %v2856 = vpop.f32.mrf.mxu0
        %2857 = vmatprep.mubr.bf16.mxu0 0
        %2858 = vmatmul.mubr.bf16.gmra.mxu0 %v2700
        %v2859 = vpop.f32.mrf.mxu0
        %v2860 = vadd.f32 %v2720, %v2859
        %v2861 = vpop.f32.mrf.mxu0
        %v2862 = vpop.f32.mrf.mxu0
        %v2863 = vadd.f32 %v2720, %v2862
        %v2864 = vpop.f32.mrf.mxu0
        %2865 = vdwg.mxu0
        %v2866 = vtanh.pop %v2804
        %v2867 = vtanh.pop %v2807
        %v2868 = vtanh.pop %v2812
        %v2869 = vtanh.pop %v2815
        %v2870 = vtanh.pop %v2820
        %v2871 = vtanh.pop %v2823
        %v2872 = vtanh.pop %v2828
        %v2873 = vtanh.pop %v2831
        %v2874 = vtanh.pop %v2836
        %v2875 = vtanh.pop %v2839
        %v2876 = vtanh.pop %v2844
        %v2877 = vtanh.pop %v2847
        %v2878 = vtanh.pop %v2852
        %v2879 = vtanh.pop %v2855
        %v2880 = vtanh.pop %v2860
        %v2881 = vtanh.pop %v2863
        %v2882 = vlaneseq
        %v2883 = vshrl.u32 %v2882, 7
        %v2884 = vsub.s32 2, %v2883
        %v2885 = vrot.slane %v308, %v2884
        %v2886 = vmul.f32 %v2866, %v2885
        %v2887 = vmul.f32 %v2867, %v2885
        %v2888 = vmul.f32 %v2868, %v2885
        %v2889 = vmul.f32 %v2869, %v2885
        %v2890 = vmul.f32 %v2870, %v2885
        %v2891 = vmul.f32 %v2871, %v2885
        %v2892 = vmul.f32 %v2872, %v2885
        %v2893 = vmul.f32 %v2873, %v2885
        %v2894 = vmul.f32 %v2874, %v2885
        %v2895 = vmul.f32 %v2875, %v2885
        %v2896 = vmul.f32 %v2876, %v2885
        %v2897 = vmul.f32 %v2877, %v2885
        %v2898 = vmul.f32 %v2878, %v2885
        %v2899 = vmul.f32 %v2879, %v2885
        %v2900 = vmul.f32 %v2880, %v2885
        %v2901 = vmul.f32 %v2881, %v2885
        %2902 = vadd.xlane.f32.xlu0 %v2886
        %v2903 = vpop.xlane.xlu0 %2902
        %2904 = vadd.xlane.f32.xlu0 %v2887
        %v2905 = vpop.xlane.xlu0 %2904
        %2906 = vadd.xlane.f32.xlu0 %v2888
        %v2907 = vpop.xlane.xlu0 %2906
        %2908 = vadd.xlane.f32.xlu0 %v2889
        %v2909 = vpop.xlane.xlu0 %2908
        %2910 = vadd.xlane.f32.xlu0 %v2890
        %v2911 = vpop.xlane.xlu0 %2910
        %2912 = vadd.xlane.f32.xlu0 %v2891
        %v2913 = vpop.xlane.xlu0 %2912
        %2914 = vadd.xlane.f32.xlu0 %v2892
        %v2915 = vpop.xlane.xlu0 %2914
        %2916 = vadd.xlane.f32.xlu0 %v2893
        %v2917 = vpop.xlane.xlu0 %2916
        %2918 = vadd.xlane.f32.xlu0 %v2894
        %v2919 = vpop.xlane.xlu0 %2918
        %2920 = vadd.xlane.f32.xlu0 %v2895
        %v2921 = vpop.xlane.xlu0 %2920
        %2922 = vadd.xlane.f32.xlu0 %v2896
        %v2923 = vpop.xlane.xlu0 %2922
        %2924 = vadd.xlane.f32.xlu0 %v2897
        %v2925 = vpop.xlane.xlu0 %2924
        %2926 = vadd.xlane.f32.xlu0 %v2898
        %v2927 = vpop.xlane.xlu0 %2926
        %2928 = vadd.xlane.f32.xlu0 %v2899
        %v2929 = vpop.xlane.xlu0 %2928
        %2930 = vadd.xlane.f32.xlu0 %v2900
        %v2931 = vpop.xlane.xlu0 %2930
        %2932 = vadd.xlane.f32.xlu0 %v2901
        %v2933 = vpop.xlane.xlu0 %2932
        %v2934 = vmax.f32 %v2903, %v2905
        %v2935 = vrot.slane %v2934, 4
        %v2936 = vmax.f32 %v2934, %v2935
        %v2937 = vrot.slane %v2936, 2
        %v2938 = vmax.f32 %v2936, %v2937
        %v2939 = vrot.slane %v2938, 1
        %v2940 = vmax.f32 %v2938, %v2939
        %v2941 = vmax.f32 %v2907, %v2909
        %v2942 = vrot.slane %v2941, 4
        %v2943 = vmax.f32 %v2941, %v2942
        %v2944 = vrot.slane %v2943, 2
        %v2945 = vmax.f32 %v2943, %v2944
        %v2946 = vrot.slane %v2945, 1
        %v2947 = vmax.f32 %v2945, %v2946
        %v2948 = vmax.f32 %v2911, %v2913
        %v2949 = vrot.slane %v2948, 4
        %v2950 = vmax.f32 %v2948, %v2949
        %v2951 = vrot.slane %v2950, 2
        %v2952 = vmax.f32 %v2950, %v2951
        %v2953 = vrot.slane %v2952, 1
        %v2954 = vmax.f32 %v2952, %v2953
        %v2955 = vmax.f32 %v2915, %v2917
        %v2956 = vrot.slane %v2955, 4
        %v2957 = vmax.f32 %v2955, %v2956
        %v2958 = vrot.slane %v2957, 2
        %v2959 = vmax.f32 %v2957, %v2958
        %v2960 = vrot.slane %v2959, 1
        %v2961 = vmax.f32 %v2959, %v2960
        %v2962 = vmax.f32 %v2919, %v2921
        %v2963 = vrot.slane %v2962, 4
        %v2964 = vmax.f32 %v2962, %v2963
        %v2965 = vrot.slane %v2964, 2
        %v2966 = vmax.f32 %v2964, %v2965
        %v2967 = vrot.slane %v2966, 1
        %v2968 = vmax.f32 %v2966, %v2967
        %v2969 = vmax.f32 %v2923, %v2925
        %v2970 = vrot.slane %v2969, 4
        %v2971 = vmax.f32 %v2969, %v2970
        %v2972 = vrot.slane %v2971, 2
        %v2973 = vmax.f32 %v2971, %v2972
        %v2974 = vrot.slane %v2973, 1
        %v2975 = vmax.f32 %v2973, %v2974
        %v2976 = vmax.f32 %v2927, %v2929
        %v2977 = vrot.slane %v2976, 4
        %v2978 = vmax.f32 %v2976, %v2977
        %v2979 = vrot.slane %v2978, 2
        %v2980 = vmax.f32 %v2978, %v2979
        %v2981 = vrot.slane %v2980, 1
        %v2982 = vmax.f32 %v2980, %v2981
        %v2983 = vmax.f32 %v2931, %v2933
        %v2984 = vrot.slane %v2983, 4
        %v2985 = vmax.f32 %v2983, %v2984
        %v2986 = vrot.slane %v2985, 2
        %v2987 = vmax.f32 %v2985, %v2986
        %v2988 = vrot.slane %v2987, 1
        %v2989 = vmax.f32 %v2987, %v2988
        %v2990 = vsub.f32 %v2903, %v2940
        %v2991 = vsub.f32 %v2905, %v2940
        %v2992 = vsub.f32 %v2907, %v2947
        %v2993 = vsub.f32 %v2909, %v2947
        %v2994 = vsub.f32 %v2911, %v2954
        %v2995 = vsub.f32 %v2913, %v2954
        %v2996 = vsub.f32 %v2915, %v2961
        %v2997 = vsub.f32 %v2917, %v2961
        %v2998 = vsub.f32 %v2919, %v2968
        %v2999 = vsub.f32 %v2921, %v2968
        %v3000 = vsub.f32 %v2923, %v2975
        %v3001 = vsub.f32 %v2925, %v2975
        %v3002 = vsub.f32 %v2927, %v2982
        %v3003 = vsub.f32 %v2929, %v2982
        %v3004 = vsub.f32 %v2931, %v2989
        %v3005 = vsub.f32 %v2933, %v2989
        %v3006 = vmul.f32 %v2990, 1.442695
        %v3007 = vpow.pop %v3006
        %v3008 = vmul.f32 %v2991, 1.442695
        %v3009 = vpow.pop %v3008
        %v3010 = vmul.f32 %v2992, 1.442695
        %v3011 = vpow.pop %v3010
        %v3012 = vmul.f32 %v2993, 1.442695
        %v3013 = vpow.pop %v3012
        %v3014 = vmul.f32 %v2994, 1.442695
        %v3015 = vpow.pop %v3014
        %v3016 = vmul.f32 %v2995, 1.442695
        %v3017 = vpow.pop %v3016
        %v3018 = vmul.f32 %v2996, 1.442695
        %v3019 = vpow.pop %v3018
        %v3020 = vmul.f32 %v2997, 1.442695
        %v3021 = vpow.pop %v3020
        %v3022 = vmul.f32 %v2998, 1.442695
        %v3023 = vpow.pop %v3022
        %v3024 = vmul.f32 %v2999, 1.442695
        %v3025 = vpow.pop %v3024
        %v3026 = vmul.f32 %v3000, 1.442695
        %v3027 = vpow.pop %v3026
        %v3028 = vmul.f32 %v3001, 1.442695
        %v3029 = vpow.pop %v3028
        %v3030 = vmul.f32 %v3002, 1.442695
        %v3031 = vpow.pop %v3030
        %v3032 = vmul.f32 %v3003, 1.442695
        %v3033 = vpow.pop %v3032
        %v3034 = vmul.f32 %v3004, 1.442695
        %v3035 = vpow.pop %v3034
        %v3036 = vmul.f32 %v3005, 1.442695
        %v3037 = vpow.pop %v3036
        %v3038 = vadd.f32 %v3007, %v3009
        %v3039 = vrot.slane %v3038, 4
        %v3040 = vadd.f32 %v3038, %v3039
        %v3041 = vrot.slane %v3040, 2
        %v3042 = vadd.f32 %v3040, %v3041
        %v3043 = vrot.slane %v3042, 1
        %v3044 = vadd.f32 %v3042, %v3043
        %v3045 = vadd.f32 %v3011, %v3013
        %v3046 = vrot.slane %v3045, 4
        %v3047 = vadd.f32 %v3045, %v3046
        %v3048 = vrot.slane %v3047, 2
        %v3049 = vadd.f32 %v3047, %v3048
        %v3050 = vrot.slane %v3049, 1
        %v3051 = vadd.f32 %v3049, %v3050
        %v3052 = vadd.f32 %v3015, %v3017
        %v3053 = vrot.slane %v3052, 4
        %v3054 = vadd.f32 %v3052, %v3053
        %v3055 = vrot.slane %v3054, 2
        %v3056 = vadd.f32 %v3054, %v3055
        %v3057 = vrot.slane %v3056, 1
        %v3058 = vadd.f32 %v3056, %v3057
        %v3059 = vadd.f32 %v3019, %v3021
        %v3060 = vrot.slane %v3059, 4
        %v3061 = vadd.f32 %v3059, %v3060
        %v3062 = vrot.slane %v3061, 2
        %v3063 = vadd.f32 %v3061, %v3062
        %v3064 = vrot.slane %v3063, 1
        %v3065 = vadd.f32 %v3063, %v3064
        %v3066 = vadd.f32 %v3023, %v3025
        %v3067 = vrot.slane %v3066, 4
        %v3068 = vadd.f32 %v3066, %v3067
        %v3069 = vrot.slane %v3068, 2
        %v3070 = vadd.f32 %v3068, %v3069
        %v3071 = vrot.slane %v3070, 1
        %v3072 = vadd.f32 %v3070, %v3071
        %v3073 = vadd.f32 %v3027, %v3029
        %v3074 = vrot.slane %v3073, 4
        %v3075 = vadd.f32 %v3073, %v3074
        %v3076 = vrot.slane %v3075, 2
        %v3077 = vadd.f32 %v3075, %v3076
        %v3078 = vrot.slane %v3077, 1
        %v3079 = vadd.f32 %v3077, %v3078
        %v3080 = vadd.f32 %v3031, %v3033
        %v3081 = vrot.slane %v3080, 4
        %v3082 = vadd.f32 %v3080, %v3081
        %v3083 = vrot.slane %v3082, 2
        %v3084 = vadd.f32 %v3082, %v3083
        %v3085 = vrot.slane %v3084, 1
        %v3086 = vadd.f32 %v3084, %v3085
        %v3087 = vadd.f32 %v3035, %v3037
        %v3088 = vrot.slane %v3087, 4
        %v3089 = vadd.f32 %v3087, %v3088
        %v3090 = vrot.slane %v3089, 2
        %v3091 = vadd.f32 %v3089, %v3090
        %v3092 = vrot.slane %v3091, 1
        %v3093 = vadd.f32 %v3091, %v3092
        %v3094 = vrcp.pop %v3044
        %v3095 = vrcp.pop %v3051
        %v3096 = vrcp.pop %v3058
        %v3097 = vrcp.pop %v3065
        %v3098 = vrcp.pop %v3072
        %v3099 = vrcp.pop %v3079
        %v3100 = vrcp.pop %v3086
        %v3101 = vrcp.pop %v3093
        %v3102 = vmul.f32 %v3007, %v3094
        %v3103 = vmul.f32 %v3009, %v3094
        %v3104 = vmul.f32 %v3011, %v3095
        %v3105 = vmul.f32 %v3013, %v3095
        %v3106 = vmul.f32 %v3015, %v3096
        %v3107 = vmul.f32 %v3017, %v3096
        %v3108 = vmul.f32 %v3019, %v3097
        %v3109 = vmul.f32 %v3021, %v3097
        %v3110 = vmul.f32 %v3023, %v3098
        %v3111 = vmul.f32 %v3025, %v3098
        %v3112 = vmul.f32 %v3027, %v3099
        %v3113 = vmul.f32 %v3029, %v3099
        %v3114 = vmul.f32 %v3031, %v3100
        %v3115 = vmul.f32 %v3033, %v3100
        %v3116 = vmul.f32 %v3035, %v3101
        %v3117 = vmul.f32 %v3037, %v3101
        %v3118 = vmul.f32 %v3102, %v2677
        %v3119 = vmul.f32 %v3103, %v2678
        %v3120 = vmul.f32 %v3104, %v2679
        %v3121 = vmul.f32 %v3105, %v2680
        %v3122 = vmul.f32 %v3106, %v2681
        %v3123 = vmul.f32 %v3107, %v2682
        %v3124 = vmul.f32 %v3108, %v2683
        %v3125 = vmul.f32 %v3109, %v2684
        %v3126 = vmul.f32 %v3110, %v2685
        %v3127 = vmul.f32 %v3111, %v2686
        %v3128 = vmul.f32 %v3112, %v2687
        %v3129 = vmul.f32 %v3113, %v2688
        %v3130 = vmul.f32 %v3114, %v2689
        %v3131 = vmul.f32 %v3115, %v2690
        %v3132 = vmul.f32 %v3116, %v2691
        %v3133 = vmul.f32 %v3117, %v2692
        %v3134 = vadd.f32 %v3118, %v3119
        %v3135 = vrot.slane %v3134, 4
        %v3136 = vadd.f32 %v3134, %v3135
        %v3137 = vrot.slane %v3136, 2
        %v3138 = vadd.f32 %v3136, %v3137
        %v3139 = vrot.slane %v3138, 1
        %v3140 = vadd.f32 %v3138, %v3139
        %v3141 = vadd.f32 %v3120, %v3121
        %v3142 = vrot.slane %v3141, 4
        %v3143 = vadd.f32 %v3141, %v3142
        %v3144 = vrot.slane %v3143, 2
        %v3145 = vadd.f32 %v3143, %v3144
        %v3146 = vrot.slane %v3145, 1
        %v3147 = vadd.f32 %v3145, %v3146
        %v3148 = vadd.f32 %v3122, %v3123
        %v3149 = vrot.slane %v3148, 4
        %v3150 = vadd.f32 %v3148, %v3149
        %v3151 = vrot.slane %v3150, 2
        %v3152 = vadd.f32 %v3150, %v3151
        %v3153 = vrot.slane %v3152, 1
        %v3154 = vadd.f32 %v3152, %v3153
        %v3155 = vadd.f32 %v3124, %v3125
        %v3156 = vrot.slane %v3155, 4
        %v3157 = vadd.f32 %v3155, %v3156
        %v3158 = vrot.slane %v3157, 2
        %v3159 = vadd.f32 %v3157, %v3158
        %v3160 = vrot.slane %v3159, 1
        %v3161 = vadd.f32 %v3159, %v3160
        %v3162 = vadd.f32 %v3126, %v3127
        %v3163 = vrot.slane %v3162, 4
        %v3164 = vadd.f32 %v3162, %v3163
        %v3165 = vrot.slane %v3164, 2
        %v3166 = vadd.f32 %v3164, %v3165
        %v3167 = vrot.slane %v3166, 1
        %v3168 = vadd.f32 %v3166, %v3167
        %v3169 = vadd.f32 %v3128, %v3129
        %v3170 = vrot.slane %v3169, 4
        %v3171 = vadd.f32 %v3169, %v3170
        %v3172 = vrot.slane %v3171, 2
        %v3173 = vadd.f32 %v3171, %v3172
        %v3174 = vrot.slane %v3173, 1
        %v3175 = vadd.f32 %v3173, %v3174
        %v3176 = vadd.f32 %v3130, %v3131
        %v3177 = vrot.slane %v3176, 4
        %v3178 = vadd.f32 %v3176, %v3177
        %v3179 = vrot.slane %v3178, 2
        %v3180 = vadd.f32 %v3178, %v3179
        %v3181 = vrot.slane %v3180, 1
        %v3182 = vadd.f32 %v3180, %v3181
        %v3183 = vadd.f32 %v3132, %v3133
        %v3184 = vrot.slane %v3183, 4
        %v3185 = vadd.f32 %v3183, %v3184
        %v3186 = vrot.slane %v3185, 2
        %v3187 = vadd.f32 %v3185, %v3186
        %v3188 = vrot.slane %v3187, 1
        %v3189 = vadd.f32 %v3187, %v3188
        %vm3198 = vcmask 1041409
        %v3199 = vsel %vm3198, %v3147, %v3140
        %vm3200 = vcmask 1042434
        %v3201 = vsel %vm3200, %v3154, %v3199
        %vm3202 = vcmask 1043459
        %v3203 = vsel %vm3202, %v3161, %v3201
        %vm3204 = vcmask 1044484
        %v3205 = vsel %vm3204, %v3168, %v3203
        %vm3206 = vcmask 1045509
        %v3207 = vsel %vm3206, %v3175, %v3205
        %vm3208 = vcmask 1046534
        %v3209 = vsel %vm3208, %v3182, %v3207
        %vm3210 = vcmask 1047559
        %v3211 = vsel %vm3210, %v3189, %v3209
        %3213 = vst [vmem:[%s262] sm:$0xff] %v3211
        %s3214 = sand.u32 %s164, 1
        %s3215 = scalar_lea.sflag [#allocation3], %s3214
        %s3216 = sand.u32 %s164, 1
        %s3217 = smul.addr %s3216, 8
        %s3218 = scalar_lea.vmem [#allocation2], %s3217
        // Predicated region
        $region45: #{user_encoder.1} parent=43 // pred_check
          %p3219 = pneg %p174
        $region46: #{user_encoder.1} parent=43 // pred_check_branch
          %3221 = sbr.rel (%p3219) target = $region48
        $region47: #{user_encoder.1} parent=43 // pred_region
          %s3223 = ssub.s32 128, 128
          %3224 = vsyncadd %s3215, %s3223
          %s3225 = smul.addr %s20, 128
          %s3226 = scalar_lea.hbm %s6, %s3225
          %s3228 = sshll.u32 %s3218, 4
          %s3229 = int_to_ptr.vmem [resolvable:$true] %s3228
          %3231 = dma.vmem_to_hbm [thread:$0]  %s3229, 128, %s3226, %s3215
        $region48: #{user_encoder.1} parent=43 // pred_fallthru
          _
      $region44: #{user_encoder.1} parent=5 // pred_fallthru
        _
      %p3232 = scmp.le.s32.totalorder 2, %s15
      // Predicated region
      $region49: #{user_encoder.1} parent=5 // pred_check
        %p3233 = pneg %p3232
      $region50: #{user_encoder.1} parent=5 // pred_check_branch
        %3235 = sbr.rel (%p3233) target = $region52
      $region51: #{user_encoder.1} parent=5 // pred_region
        %s3236 = ssub.s32 %s15, 2
        // Predicated region
        $region53: #{user_encoder.1} parent=51 // pred_check
          %p3237 = pneg %p180
        $region54: #{user_encoder.1} parent=51 // pred_check_branch
          %3239 = sbr.rel (%p3237) target = $region56
        $region55: #{user_encoder.1} parent=51 // pred_region
          %s3240 = sand.u32 %s165, 1
          %s3241 = scalar_lea.sflag [#allocation3], %s3240
          %s3242 = sand.u32 %s165, 1
          %s3243 = smul.addr %s3242, 8
          %s3244 = scalar_lea.vmem [#allocation2], %s3243
          %3245 = dma.done %s3241, 128
        $region56: #{user_encoder.1} parent=51 // pred_fallthru
          _
      $region52: #{user_encoder.1} parent=5 // pred_fallthru
        _
    $region6: #{user_encoder.1} parent=1 // loop_footer
      %s19 = sadd.s32 1, %s15
    $region7: #{user_encoder.1} parent=1 // loop_footer_branch
      %14 = sbr.rel target = $region3
    $region8: #{user_encoder.1} parent=1 // loop_exit
      _
    %3246 = vsyncpa [#allocation3], 1
    %s3247 = scalar_lea.sflag [#allocation3], 1
    %3248 = vsyncpa %s3247, 1

</llo_original>
